<compile_context>
chip_gen: v6e
topology: v6e:2x2x1
jax: 0.10.0
libtpu: 0.0.40
codegen_flags: <defaults>
</compile_context>

<pallas_src>
import functools

import jax
import jax.numpy as jnp
import numpy as np
from jax.experimental import pallas as pl
from jax.experimental.pallas import tpu as pltpu


def _pick_chunk_steps(T, cap=64):
    """Largest divisor of T that is <= cap (bounds the gx scratch slab)."""
    c = min(T, cap)
    while T % c != 0:
        c -= 1
    return c


# ------------------------- fused LSTM + FC kernel factory -------------------------
def make_fused_kernel(num_layers, T, B_pad, H, chunk_steps):
    H4 = 4 * H
    n_chunks = T // chunk_steps
    chunk_rows = chunk_steps * B_pad
    unroll = min(chunk_steps, 8)

    def kernel(*refs):
        # Unpack: x, then (w_ih, w_hh, bias) per layer, then fc weights, out, scratch.
        x_ref = refs[0]
        idx = 1
        layer_refs = []
        for _ in range(num_layers):
            layer_refs.append((refs[idx], refs[idx + 1], refs[idx + 2]))
            idx += 3
        wfc_ref, bfc_ref = refs[idx], refs[idx + 1]
        out_ref = refs[idx + 2]
        hseq_scr, gx_scr = refs[idx + 3], refs[idx + 4]

        h_last = None
        for layer in range(num_layers):
            wih_ref, whh_ref, b_ref = layer_refs[layer]
            wih = wih_ref[...]            # (in, 4H)  bf16
            whh = whh_ref[...]            # (H, 4H)   bf16
            bias = b_ref[...]             # (1, 4H)   f32
            src_ref = x_ref if layer == 0 else hseq_scr

            def run_chunk(c, carry, src_ref=src_ref, wih=wih, whh=whh, bias=bias):
                base = c * chunk_rows
                if not isinstance(base, int):
                    base = pl.multiple_of(base, chunk_rows)

                # ---- Hoisted input projection for this time chunk: one MXU matmul.
                # (Reading this layer's input rows BEFORE they are overwritten below
                #  keeps the chunk-granular WAR dependence on hseq_scr safe.)
                inp = src_ref[pl.ds(base, chunk_rows), :]          # bf16
                gx_scr[...] = (
                    jnp.dot(inp, wih, preferred_element_type=jnp.float32) + bias
                ).astype(jnp.bfloat16)                             # (chunk_rows, 4H)

                # ---- Sequential recurrence: only h_prev @ W_hh per step.
                def step(t, carry2):
                    h_prev, c_prev = carry2                        # bf16, f32
                    row = t * B_pad
                    if not isinstance(row, int):
                        row = pl.multiple_of(row, B_pad)
                    g = gx_scr[pl.ds(row, B_pad), :].astype(jnp.float32) + jnp.dot(
                        h_prev, whh, preferred_element_type=jnp.float32
                    )                                              # (B_pad, 4H) f32
                    sig = jax.nn.sigmoid(g)     # one EUP pass over the whole slab
                    i_g = sig[:, 0 * H:1 * H]
                    f_g = sig[:, 1 * H:2 * H]
                    o_g = sig[:, 3 * H:4 * H]
                    g_g = jnp.tanh(g[:, 2 * H:3 * H])
                    c_new = f_g * c_prev + i_g * g_g               # f32
                    h_new = (o_g * jnp.tanh(c_new)).astype(jnp.bfloat16)
                    dst = base + row
                    if not isinstance(dst, int):
                        dst = pl.multiple_of(dst, B_pad)
                    hseq_scr[pl.ds(dst, B_pad), :] = h_new
                    return (h_new, c_new)

                return jax.lax.fori_loop(0, chunk_steps, step, carry, unroll=unroll)

            h0 = jnp.zeros((B_pad, H), jnp.bfloat16)
            c0 = jnp.zeros((B_pad, H), jnp.float32)
            if n_chunks == 1:
                h_last, _ = run_chunk(0, (h0, c0))
            else:
                h_last, _ = jax.lax.fori_loop(0, n_chunks, run_chunk, (h0, c0))

        # ---- FC head on the final hidden state (still resident in VMEM/registers).
        out_ref[...] = (
            jnp.dot(h_last, wfc_ref[...], preferred_element_type=jnp.float32)
            + bfc_ref[...]
        ).astype(out_ref.dtype)

    return kernel


# ------------------------------ forward wrapper -----------------------------------
@functools.partial(jax.jit, static_argnames=("num_layers",))
def lstm_model_forward(x, kparams, *, num_layers):
    """Equivalent of the PyTorch module forward. x: (B, T, I) -> (B, O)."""
    B, T, I = x.shape
    H = kparams["lstm"][0][1].shape[0]        # whh_t is (H, 4H)
    H4 = 4 * H
    O = kparams["fc_w"].shape[1]
    B_pad = ((B + 15) // 16) * 16             # bf16 sublane tile = 16 rows
    chunk_steps = _pick_chunk_steps(T)
    chunk_rows = chunk_steps * B_pad

    # (B, T, I) -> (T, B_pad, I) -> (T*B_pad, I) bf16: one row group per step.
    x_tbi = jnp.transpose(x, (1, 0, 2))
    if B_pad != B:
        x_tbi = jnp.pad(x_tbi, ((0, 0), (0, B_pad - B), (0, 0)))
    x2d = x_tbi.reshape(T * B_pad, I).astype(jnp.bfloat16)

    inputs = [x2d]
    in_specs = [pl.BlockSpec((T * B_pad, I), lambda i: (0, 0))]
    for (wih_t, whh_t, bias) in kparams["lstm"]:
        in_dim = wih_t.shape[0]
        inputs += [wih_t, whh_t, bias]
        in_specs += [
            pl.BlockSpec((in_dim, H4), lambda i: (0, 0)),
            pl.BlockSpec((H, H4), lambda i: (0, 0)),
            pl.BlockSpec((1, H4), lambda i: (0, 0)),
        ]
    inputs += [kparams["fc_w"], kparams["fc_b"]]
    in_specs += [
        pl.BlockSpec((H, O), lambda i: (0, 0)),
        pl.BlockSpec((1, O), lambda i: (0, 0)),
    ]

    # ---- VMEM budget: inputs (double-buffered) + output + resident scratch + slack.
    def _nbytes(a):
        return int(np.prod(a.shape)) * jnp.dtype(a.dtype).itemsize

    out_bytes = B_pad * O * jnp.dtype(x.dtype).itemsize
    scratch_bytes = (T * B_pad * H + chunk_rows * H4) * 2        # bf16 scratch slabs
    vmem_need = 2 * (sum(_nbytes(a) for a in inputs) + out_bytes) + scratch_bytes
    vmem_limit = int(min(max(vmem_need + (2 << 20), 32 << 20), 64 << 20))

    # ---- Advisory cost estimate for XLA scheduling around the custom call.
    flops = 2 * B_pad * H * O
    in_dim = I
    for _ in range(num_layers):
        flops += 2 * T * B_pad * in_dim * H4 + 2 * T * B_pad * H * H4
        in_dim = H
    bytes_accessed = sum(_nbytes(a) for a in inputs) + out_bytes

    out_pad = pl.pallas_call(
        make_fused_kernel(num_layers, T, B_pad, H, chunk_steps),
        out_shape=jax.ShapeDtypeStruct((B_pad, O), x.dtype),
        grid_spec=pltpu.PrefetchScalarGridSpec(
            num_scalar_prefetch=0,
            grid=(1,),                        # time/layer loops live in-kernel
            in_specs=in_specs,
            out_specs=pl.BlockSpec((B_pad, O), lambda i: (0, 0)),
            scratch_shapes=[
                pltpu.VMEM((T * B_pad, H), jnp.bfloat16),     # layer's h sequence
                pltpu.VMEM((chunk_rows, H4), jnp.bfloat16),   # chunk gate projections
            ],
        ),
        compiler_params=pltpu.CompilerParams(
            dimension_semantics=("arbitrary",),
            vmem_limit_bytes=vmem_limit,
        ),
        cost_estimate=pl.CostEstimate(
            flops=int(flops),
            transcendentals=int(num_layers * T * 6 * B_pad * H),
            bytes_accessed=int(bytes_accessed),
        ),
    )(*inputs)
    return out_pad[:B]


# ------------------------------ parameter handling ---------------------------------
def init_params(key, input_size, hidden_size, num_layers, output_size):
    """PyTorch-style uniform(-1/sqrt(H), 1/sqrt(H)) init, PyTorch weight layout."""
    bound = 1.0 / np.sqrt(hidden_size)
    lstm_params = []
    for layer in range(num_layers):
        in_sz = input_size if layer == 0 else hidden_size
        key, k1, k2, k3, k4 = jax.random.split(key, 5)
        w_ih = jax.random.uniform(k1, (4 * hidden_size, in_sz), jnp.float32, -bound, bound)
        w_hh = jax.random.uniform(k2, (4 * hidden_size, hidden_size), jnp.float32, -bound, bound)
        b_ih = jax.random.uniform(k3, (4 * hidden_size,), jnp.float32, -bound, bound)
        b_hh = jax.random.uniform(k4, (4 * hidden_size,), jnp.float32, -bound, bound)
        lstm_params.append((w_ih, w_hh, b_ih, b_hh))
    key, k5, k6 = jax.random.split(key, 3)
    fc_w = jax.random.uniform(k5, (output_size, hidden_size), jnp.float32, -bound, bound)
    fc_b = jax.random.uniform(k6, (output_size,), jnp.float32, -bound, bound)
    return {"lstm": tuple(lstm_params), "fc_w": fc_w, "fc_b": fc_b}


def prepare_params(params):
    """One-time conversion of PyTorch-layout params to kernel layout:
    transposed bf16 weights, summed f32 biases (off the per-forward path)."""
    layers = []
    for (w_ih, w_hh, b_ih, b_hh) in params["lstm"]:
        H4 = w_ih.shape[0]
        layers.append((
            jnp.transpose(w_ih).astype(jnp.bfloat16),        # (in, 4H)
            jnp.transpose(w_hh).astype(jnp.bfloat16),        # (H, 4H)
            (b_ih + b_hh).reshape(1, H4).astype(jnp.float32),
        ))
    O = params["fc_w"].shape[0]
    return {
        "lstm": tuple(layers),
        "fc_w": jnp.transpose(params["fc_w"]).astype(jnp.bfloat16),  # (H, O)
        "fc_b": params["fc_b"].reshape(1, O).astype(jnp.float32),
    }


# ------------------------------ pure-JAX f32 reference ------------------------------
def reference_forward(x, params, num_layers):
    h_seq = jnp.transpose(x, (1, 0, 2))  # (T, B, I)
    B = x.shape[0]
    for layer in range(num_layers):
        w_ih, w_hh, b_ih, b_hh = params["lstm"][layer]
        H = w_hh.shape[1]
        h0 = jnp.zeros((B, H), jnp.float32)
        c0 = jnp.zeros((B, H), jnp.float32)

        def step(carry, x_t):
            h, c = carry
            g = x_t @ w_ih.T + h @ w_hh.T + b_ih + b_hh
            i = jax.nn.sigmoid(g[:, 0 * H:1 * H])
            f = jax.nn.sigmoid(g[:, 1 * H:2 * H])
            gg = jnp.tanh(g[:, 2 * H:3 * H])
            o = jax.nn.sigmoid(g[:, 3 * H:4 * H])
            c_new = f * c + i * gg
            h_new = o * jnp.tanh(c_new)
            return (h_new, c_new), h_new

        (_, _), h_seq = jax.lax.scan(step, (h0, c0), h_seq)
    return h_seq[-1] @ params["fc_w"].T + params["fc_b"]


# ------------------------------ main -------------------------------------------------
if __name__ == "__main__":
    batch, seq_len = 2, 8
    input_size, hidden_size, num_layers, output_size = 16, 32, 2, 1

    key = jax.random.PRNGKey(0)
    key, kx, kp = jax.random.split(key, 3)
    x = jax.random.normal(kx, (batch, seq_len, input_size), jnp.float32)
    params = init_params(kp, input_size, hidden_size, num_layers, output_size)
    kparams = prepare_params(params)   # one-time weight transpose / bf16 cast / bias sum

    out = lstm_model_forward(x, kparams, num_layers=num_layers)
    out = jax.block_until_ready(out)

    # f32 reference (PyTorch semantics); tolerance widened for bf16 weights/activations.
    ref = reference_forward(x, params, num_layers)
    np.testing.assert_allclose(np.asarray(out), np.asarray(ref), rtol=3e-2, atol=3e-2)

    assert out.shape == (batch, output_size)
    print("KERNEL_OK")
</pallas_src>

<mosaic_0001>
module attributes {stable_mosaic.version = 11 : i64} {
  func.func @kernel(%arg0: i32, %arg1: memref<128x16xbf16, #tpu.memory_space<vmem>>, %arg2: memref<16x128xbf16, #tpu.memory_space<vmem>>, %arg3: memref<32x128xbf16, #tpu.memory_space<vmem>>, %arg4: memref<1x128xf32, #tpu.memory_space<vmem>>, %arg5: memref<32x128xbf16, #tpu.memory_space<vmem>>, %arg6: memref<32x128xbf16, #tpu.memory_space<vmem>>, %arg7: memref<1x128xf32, #tpu.memory_space<vmem>>, %arg8: memref<32x1xbf16, #tpu.memory_space<vmem>>, %arg9: memref<1x1xf32, #tpu.memory_space<vmem>>, %arg10: memref<16x1xf32, #tpu.memory_space<vmem>>, %arg11: memref<128x32xbf16, #tpu.memory_space<vmem>>, %arg12: memref<128x128xbf16, #tpu.memory_space<vmem>>) attributes {dimension_semantics = [#tpu.dimension_semantics<arbitrary>], iteration_bounds = array<i64: 1>, scalar_prefetch = 0 : i64, scratch_operands = 2 : i64, tpu.core_type = #tpu.core_type<tc>, window_params = [{pipeline_mode = #tpu.pipeline_mode<synchronous>, transform_indices = @transform_0, window_bounds = array<i64: 128, 16>}, {pipeline_mode = #tpu.pipeline_mode<synchronous>, transform_indices = @transform_1, window_bounds = array<i64: 16, 128>}, {pipeline_mode = #tpu.pipeline_mode<synchronous>, transform_indices = @transform_2, window_bounds = array<i64: 32, 128>}, {pipeline_mode = #tpu.pipeline_mode<synchronous>, transform_indices = @transform_3, window_bounds = array<i64: 1, 128>}, {pipeline_mode = #tpu.pipeline_mode<synchronous>, transform_indices = @transform_4, window_bounds = array<i64: 32, 128>}, {pipeline_mode = #tpu.pipeline_mode<synchronous>, transform_indices = @transform_5, window_bounds = array<i64: 32, 128>}, {pipeline_mode = #tpu.pipeline_mode<synchronous>, transform_indices = @transform_6, window_bounds = array<i64: 1, 128>}, {pipeline_mode = #tpu.pipeline_mode<synchronous>, transform_indices = @transform_7, window_bounds = array<i64: 32, 1>}, {pipeline_mode = #tpu.pipeline_mode<synchronous>, transform_indices = @transform_8, window_bounds = array<i64: 1, 1>}, {pipeline_mode = #tpu.pipeline_mode<synchronous>, transform_indices = @transform_9, window_bounds = array<i64: 16, 1>}]} {
    %c0 = arith.constant 0 : index
    %c0_0 = arith.constant 0 : index
    %0 = vector.load %arg2[%c0, %c0_0] : memref<16x128xbf16, #tpu.memory_space<vmem>>, vector<16x128xbf16>
    %c0_1 = arith.constant 0 : index
    %c0_2 = arith.constant 0 : index
    %1 = vector.load %arg3[%c0_1, %c0_2] : memref<32x128xbf16, #tpu.memory_space<vmem>>, vector<32x128xbf16>
    %c0_3 = arith.constant 0 : index
    %c0_4 = arith.constant 0 : index
    %2 = vector.load %arg4[%c0_3, %c0_4] : memref<1x128xf32, #tpu.memory_space<vmem>>, vector<1x128xf32>
    %cst = arith.constant 0.000000e+00 : bf16
    %3 = vector.broadcast %cst : bf16 to vector<16x32xbf16>
    %cst_5 = arith.constant 0.000000e+00 : f32
    %4 = vector.broadcast %cst_5 : f32 to vector<16x32xf32>
    %c0_6 = arith.constant 0 : index
    %c0_7 = arith.constant 0 : index
    %5 = vector.load %arg1[%c0_6, %c0_7] : memref<128x16xbf16, #tpu.memory_space<vmem>>, vector<128x16xbf16>
    %cst_8 = arith.constant dense<0.000000e+00> : vector<128x128xf32>
    %6 = tpu.matmul %5, %0, %cst_8 {dimension_numbers = #tpu.dot_dimension_numbers<[1], [0], [0], [1], [0, 0, 1, 1], [], []>} : vector<128x16xbf16>, vector<16x128xbf16>, vector<128x128xf32> -> vector<128x128xf32>
    %7 = vector.broadcast %2 : vector<1x128xf32> to vector<128x128xf32>
    %8 = arith.addf %6, %7 : vector<128x128xf32>
    %9 = arith.truncf %8 : vector<128x128xf32> to vector<128x128xbf16>
    %c0_9 = arith.constant 0 : index
    %c0_10 = arith.constant 0 : index
    %10 = vector.load %arg12[%c0_9, %c0_10] : memref<128x128xbf16, #tpu.memory_space<vmem>>, vector<128x128xbf16>
    tpu.vector_store %arg12[%c0_9, %c0_10], %9 {strides = array<i32>} : memref<128x128xbf16, #tpu.memory_space<vmem>>, vector<128x128xbf16>,
    %c0_i32 = arith.constant 0 : i32
    %c16_i32 = arith.constant 16 : i32
    %11 = arith.muli %c0_i32, %c16_i32 : i32
    %12 = tpu.assume_multiple %11, 16 : i32
    %13 = arith.index_cast %12 : i32 to index
    %c0_11 = arith.constant 0 : index
    %14 = vector.load %arg12[%13, %c0_11] : memref<128x128xbf16, #tpu.memory_space<vmem>>, vector<16x128xbf16>
    %15 = arith.extf %14 : vector<16x128xbf16> to vector<16x128xf32>
    %cst_12 = arith.constant dense<0.000000e+00> : vector<16x128xf32>
    %16 = tpu.matmul %3, %1, %cst_12 {dimension_numbers = #tpu.dot_dimension_numbers<[1], [0], [0], [1], [0, 0, 1, 1], [], []>} : vector<16x32xbf16>, vector<32x128xbf16>, vector<16x128xf32> -> vector<16x128xf32>
    %17 = arith.addf %15, %16 : vector<16x128xf32>
    %18 = arith.negf %17 : vector<16x128xf32>
    %19 = math.exp %18 : vector<16x128xf32>
    %cst_13 = arith.constant 1.000000e+00 : f32
    %20 = vector.broadcast %cst_13 : f32 to vector<16x128xf32>
    %21 = arith.addf %20, %19 : vector<16x128xf32>
    %22 = arith.divf %20, %21 : vector<16x128xf32>
    %23 = vector.extract_strided_slice %22 {offsets = [0, 0], sizes = [16, 32], strides = [1, 1]} : vector<16x128xf32> to vector<16x32xf32>
    %24 = vector.extract_strided_slice %22 {offsets = [0, 32], sizes = [16, 32], strides = [1, 1]} : vector<16x128xf32> to vector<16x32xf32>
    %25 = vector.extract_strided_slice %22 {offsets = [0, 96], sizes = [16, 32], strides = [1, 1]} : vector<16x128xf32> to vector<16x32xf32>
    %26 = vector.extract_strided_slice %17 {offsets = [0, 64], sizes = [16, 32], strides = [1, 1]} : vector<16x128xf32> to vector<16x32xf32>
    %27 = math.tanh %26 : vector<16x32xf32>
    %28 = arith.mulf %24, %4 : vector<16x32xf32>
    %29 = arith.mulf %23, %27 : vector<16x32xf32>
    %30 = arith.addf %28, %29 : vector<16x32xf32>
    %31 = math.tanh %30 : vector<16x32xf32>
    %32 = arith.mulf %25, %31 : vector<16x32xf32>
    %33 = arith.truncf %32 : vector<16x32xf32> to vector<16x32xbf16>
    %c0_i32_14 = arith.constant 0 : i32
    %34 = arith.addi %c0_i32_14, %12 : i32
    %35 = tpu.assume_multiple %34, 16 : i32
    %36 = arith.index_cast %35 : i32 to index
    %c0_15 = arith.constant 0 : index
    %37 = vector.load %arg11[%36, %c0_15] : memref<128x32xbf16, #tpu.memory_space<vmem>>, vector<16x32xbf16>
    tpu.vector_store %arg11[%36, %c0_15], %33 {strides = array<i32>} : memref<128x32xbf16, #tpu.memory_space<vmem>>, vector<16x32xbf16>,
    %c1_i32 = arith.constant 1 : i32
    %c16_i32_16 = arith.constant 16 : i32
    %38 = arith.muli %c1_i32, %c16_i32_16 : i32
    %39 = tpu.assume_multiple %38, 16 : i32
    %40 = arith.index_cast %39 : i32 to index
    %c0_17 = arith.constant 0 : index
    %41 = vector.load %arg12[%40, %c0_17] : memref<128x128xbf16, #tpu.memory_space<vmem>>, vector<16x128xbf16>
    %42 = arith.extf %41 : vector<16x128xbf16> to vector<16x128xf32>
    %cst_18 = arith.constant dense<0.000000e+00> : vector<16x128xf32>
    %43 = tpu.matmul %33, %1, %cst_18 {dimension_numbers = #tpu.dot_dimension_numbers<[1], [0], [0], [1], [0, 0, 1, 1], [], []>} : vector<16x32xbf16>, vector<32x128xbf16>, vector<16x128xf32> -> vector<16x128xf32>
    %44 = arith.addf %42, %43 : vector<16x128xf32>
    %45 = arith.negf %44 : vector<16x128xf32>
    %46 = math.exp %45 : vector<16x128xf32>
    %cst_19 = arith.constant 1.000000e+00 : f32
    %47 = vector.broadcast %cst_19 : f32 to vector<16x128xf32>
    %48 = arith.addf %47, %46 : vector<16x128xf32>
    %49 = arith.divf %47, %48 : vector<16x128xf32>
    %50 = vector.extract_strided_slice %49 {offsets = [0, 0], sizes = [16, 32], strides = [1, 1]} : vector<16x128xf32> to vector<16x32xf32>
    %51 = vector.extract_strided_slice %49 {offsets = [0, 32], sizes = [16, 32], strides = [1, 1]} : vector<16x128xf32> to vector<16x32xf32>
    %52 = vector.extract_strided_slice %49 {offsets = [0, 96], sizes = [16, 32], strides = [1, 1]} : vector<16x128xf32> to vector<16x32xf32>
    %53 = vector.extract_strided_slice %44 {offsets = [0, 64], sizes = [16, 32], strides = [1, 1]} : vector<16x128xf32> to vector<16x32xf32>
    %54 = math.tanh %53 : vector<16x32xf32>
    %55 = arith.mulf %51, %30 : vector<16x32xf32>
    %56 = arith.mulf %50, %54 : vector<16x32xf32>
    %57 = arith.addf %55, %56 : vector<16x32xf32>
    %58 = math.tanh %57 : vector<16x32xf32>
    %59 = arith.mulf %52, %58 : vector<16x32xf32>
    %60 = arith.truncf %59 : vector<16x32xf32> to vector<16x32xbf16>
    %c0_i32_20 = arith.constant 0 : i32
    %61 = arith.addi %c0_i32_20, %39 : i32
    %62 = tpu.assume_multiple %61, 16 : i32
    %63 = arith.index_cast %62 : i32 to index
    %c0_21 = arith.constant 0 : index
    %64 = vector.load %arg11[%63, %c0_21] : memref<128x32xbf16, #tpu.memory_space<vmem>>, vector<16x32xbf16>
    tpu.vector_store %arg11[%63, %c0_21], %60 {strides = array<i32>} : memref<128x32xbf16, #tpu.memory_space<vmem>>, vector<16x32xbf16>,
    %c2_i32 = arith.constant 2 : i32
    %c16_i32_22 = arith.constant 16 : i32
    %65 = arith.muli %c2_i32, %c16_i32_22 : i32
    %66 = tpu.assume_multiple %65, 16 : i32
    %67 = arith.index_cast %66 : i32 to index
    %c0_23 = arith.constant 0 : index
    %68 = vector.load %arg12[%67, %c0_23] : memref<128x128xbf16, #tpu.memory_space<vmem>>, vector<16x128xbf16>
    %69 = arith.extf %68 : vector<16x128xbf16> to vector<16x128xf32>
    %cst_24 = arith.constant dense<0.000000e+00> : vector<16x128xf32>
    %70 = tpu.matmul %60, %1, %cst_24 {dimension_numbers = #tpu.dot_dimension_numbers<[1], [0], [0], [1], [0, 0, 1, 1], [], []>} : vector<16x32xbf16>, vector<32x128xbf16>, vector<16x128xf32> -> vector<16x128xf32>
    %71 = arith.addf %69, %70 : vector<16x128xf32>
    %72 = arith.negf %71 : vector<16x128xf32>
    %73 = math.exp %72 : vector<16x128xf32>
    %cst_25 = arith.constant 1.000000e+00 : f32
    %74 = vector.broadcast %cst_25 : f32 to vector<16x128xf32>
    %75 = arith.addf %74, %73 : vector<16x128xf32>
    %76 = arith.divf %74, %75 : vector<16x128xf32>
    %77 = vector.extract_strided_slice %76 {offsets = [0, 0], sizes = [16, 32], strides = [1, 1]} : vector<16x128xf32> to vector<16x32xf32>
    %78 = vector.extract_strided_slice %76 {offsets = [0, 32], sizes = [16, 32], strides = [1, 1]} : vector<16x128xf32> to vector<16x32xf32>
    %79 = vector.extract_strided_slice %76 {offsets = [0, 96], sizes = [16, 32], strides = [1, 1]} : vector<16x128xf32> to vector<16x32xf32>
    %80 = vector.extract_strided_slice %71 {offsets = [0, 64], sizes = [16, 32], strides = [1, 1]} : vector<16x128xf32> to vector<16x32xf32>
    %81 = math.tanh %80 : vector<16x32xf32>
    %82 = arith.mulf %78, %57 : vector<16x32xf32>
    %83 = arith.mulf %77, %81 : vector<16x32xf32>
    %84 = arith.addf %82, %83 : vector<16x32xf32>
    %85 = math.tanh %84 : vector<16x32xf32>
    %86 = arith.mulf %79, %85 : vector<16x32xf32>
    %87 = arith.truncf %86 : vector<16x32xf32> to vector<16x32xbf16>
    %c0_i32_26 = arith.constant 0 : i32
    %88 = arith.addi %c0_i32_26, %66 : i32
    %89 = tpu.assume_multiple %88, 16 : i32
    %90 = arith.index_cast %89 : i32 to index
    %c0_27 = arith.constant 0 : index
    %91 = vector.load %arg11[%90, %c0_27] : memref<128x32xbf16, #tpu.memory_space<vmem>>, vector<16x32xbf16>
    tpu.vector_store %arg11[%90, %c0_27], %87 {strides = array<i32>} : memref<128x32xbf16, #tpu.memory_space<vmem>>, vector<16x32xbf16>,
    %c3_i32 = arith.constant 3 : i32
    %c16_i32_28 = arith.constant 16 : i32
    %92 = arith.muli %c3_i32, %c16_i32_28 : i32
    %93 = tpu.assume_multiple %92, 16 : i32
    %94 = arith.index_cast %93 : i32 to index
    %c0_29 = arith.constant 0 : index
    %95 = vector.load %arg12[%94, %c0_29] : memref<128x128xbf16, #tpu.memory_space<vmem>>, vector<16x128xbf16>
    %96 = arith.extf %95 : vector<16x128xbf16> to vector<16x128xf32>
    %cst_30 = arith.constant dense<0.000000e+00> : vector<16x128xf32>
    %97 = tpu.matmul %87, %1, %cst_30 {dimension_numbers = #tpu.dot_dimension_numbers<[1], [0], [0], [1], [0, 0, 1, 1], [], []>} : vector<16x32xbf16>, vector<32x128xbf16>, vector<16x128xf32> -> vector<16x128xf32>
    %98 = arith.addf %96, %97 : vector<16x128xf32>
    %99 = arith.negf %98 : vector<16x128xf32>
    %100 = math.exp %99 : vector<16x128xf32>
    %cst_31 = arith.constant 1.000000e+00 : f32
    %101 = vector.broadcast %cst_31 : f32 to vector<16x128xf32>
    %102 = arith.addf %101, %100 : vector<16x128xf32>
    %103 = arith.divf %101, %102 : vector<16x128xf32>
    %104 = vector.extract_strided_slice %103 {offsets = [0, 0], sizes = [16, 32], strides = [1, 1]} : vector<16x128xf32> to vector<16x32xf32>
    %105 = vector.extract_strided_slice %103 {offsets = [0, 32], sizes = [16, 32], strides = [1, 1]} : vector<16x128xf32> to vector<16x32xf32>
    %106 = vector.extract_strided_slice %103 {offsets = [0, 96], sizes = [16, 32], strides = [1, 1]} : vector<16x128xf32> to vector<16x32xf32>
    %107 = vector.extract_strided_slice %98 {offsets = [0, 64], sizes = [16, 32], strides = [1, 1]} : vector<16x128xf32> to vector<16x32xf32>
    %108 = math.tanh %107 : vector<16x32xf32>
    %109 = arith.mulf %105, %84 : vector<16x32xf32>
    %110 = arith.mulf %104, %108 : vector<16x32xf32>
    %111 = arith.addf %109, %110 : vector<16x32xf32>
    %112 = math.tanh %111 : vector<16x32xf32>
    %113 = arith.mulf %106, %112 : vector<16x32xf32>
    %114 = arith.truncf %113 : vector<16x32xf32> to vector<16x32xbf16>
    %c0_i32_32 = arith.constant 0 : i32
    %115 = arith.addi %c0_i32_32, %93 : i32
    %116 = tpu.assume_multiple %115, 16 : i32
    %117 = arith.index_cast %116 : i32 to index
    %c0_33 = arith.constant 0 : index
    %118 = vector.load %arg11[%117, %c0_33] : memref<128x32xbf16, #tpu.memory_space<vmem>>, vector<16x32xbf16>
    tpu.vector_store %arg11[%117, %c0_33], %114 {strides = array<i32>} : memref<128x32xbf16, #tpu.memory_space<vmem>>, vector<16x32xbf16>,
    %c4_i32 = arith.constant 4 : i32
    %c16_i32_34 = arith.constant 16 : i32
    %119 = arith.muli %c4_i32, %c16_i32_34 : i32
    %120 = tpu.assume_multiple %119, 16 : i32
    %121 = arith.index_cast %120 : i32 to index
    %c0_35 = arith.constant 0 : index
    %122 = vector.load %arg12[%121, %c0_35] : memref<128x128xbf16, #tpu.memory_space<vmem>>, vector<16x128xbf16>
    %123 = arith.extf %122 : vector<16x128xbf16> to vector<16x128xf32>
    %cst_36 = arith.constant dense<0.000000e+00> : vector<16x128xf32>
    %124 = tpu.matmul %114, %1, %cst_36 {dimension_numbers = #tpu.dot_dimension_numbers<[1], [0], [0], [1], [0, 0, 1, 1], [], []>} : vector<16x32xbf16>, vector<32x128xbf16>, vector<16x128xf32> -> vector<16x128xf32>
    %125 = arith.addf %123, %124 : vector<16x128xf32>
    %126 = arith.negf %125 : vector<16x128xf32>
    %127 = math.exp %126 : vector<16x128xf32>
    %cst_37 = arith.constant 1.000000e+00 : f32
    %128 = vector.broadcast %cst_37 : f32 to vector<16x128xf32>
    %129 = arith.addf %128, %127 : vector<16x128xf32>
    %130 = arith.divf %128, %129 : vector<16x128xf32>
    %131 = vector.extract_strided_slice %130 {offsets = [0, 0], sizes = [16, 32], strides = [1, 1]} : vector<16x128xf32> to vector<16x32xf32>
    %132 = vector.extract_strided_slice %130 {offsets = [0, 32], sizes = [16, 32], strides = [1, 1]} : vector<16x128xf32> to vector<16x32xf32>
    %133 = vector.extract_strided_slice %130 {offsets = [0, 96], sizes = [16, 32], strides = [1, 1]} : vector<16x128xf32> to vector<16x32xf32>
    %134 = vector.extract_strided_slice %125 {offsets = [0, 64], sizes = [16, 32], strides = [1, 1]} : vector<16x128xf32> to vector<16x32xf32>
    %135 = math.tanh %134 : vector<16x32xf32>
    %136 = arith.mulf %132, %111 : vector<16x32xf32>
    %137 = arith.mulf %131, %135 : vector<16x32xf32>
    %138 = arith.addf %136, %137 : vector<16x32xf32>
    %139 = math.tanh %138 : vector<16x32xf32>
    %140 = arith.mulf %133, %139 : vector<16x32xf32>
    %141 = arith.truncf %140 : vector<16x32xf32> to vector<16x32xbf16>
    %c0_i32_38 = arith.constant 0 : i32
    %142 = arith.addi %c0_i32_38, %120 : i32
    %143 = tpu.assume_multiple %142, 16 : i32
    %144 = arith.index_cast %143 : i32 to index
    %c0_39 = arith.constant 0 : index
    %145 = vector.load %arg11[%144, %c0_39] : memref<128x32xbf16, #tpu.memory_space<vmem>>, vector<16x32xbf16>
    tpu.vector_store %arg11[%144, %c0_39], %141 {strides = array<i32>} : memref<128x32xbf16, #tpu.memory_space<vmem>>, vector<16x32xbf16>,
    %c5_i32 = arith.constant 5 : i32
    %c16_i32_40 = arith.constant 16 : i32
    %146 = arith.muli %c5_i32, %c16_i32_40 : i32
    %147 = tpu.assume_multiple %146, 16 : i32
    %148 = arith.index_cast %147 : i32 to index
    %c0_41 = arith.constant 0 : index
    %149 = vector.load %arg12[%148, %c0_41] : memref<128x128xbf16, #tpu.memory_space<vmem>>, vector<16x128xbf16>
    %150 = arith.extf %149 : vector<16x128xbf16> to vector<16x128xf32>
    %cst_42 = arith.constant dense<0.000000e+00> : vector<16x128xf32>
    %151 = tpu.matmul %141, %1, %cst_42 {dimension_numbers = #tpu.dot_dimension_numbers<[1], [0], [0], [1], [0, 0, 1, 1], [], []>} : vector<16x32xbf16>, vector<32x128xbf16>, vector<16x128xf32> -> vector<16x128xf32>
    %152 = arith.addf %150, %151 : vector<16x128xf32>
    %153 = arith.negf %152 : vector<16x128xf32>
    %154 = math.exp %153 : vector<16x128xf32>
    %cst_43 = arith.constant 1.000000e+00 : f32
    %155 = vector.broadcast %cst_43 : f32 to vector<16x128xf32>
    %156 = arith.addf %155, %154 : vector<16x128xf32>
    %157 = arith.divf %155, %156 : vector<16x128xf32>
    %158 = vector.extract_strided_slice %157 {offsets = [0, 0], sizes = [16, 32], strides = [1, 1]} : vector<16x128xf32> to vector<16x32xf32>
    %159 = vector.extract_strided_slice %157 {offsets = [0, 32], sizes = [16, 32], strides = [1, 1]} : vector<16x128xf32> to vector<16x32xf32>
    %160 = vector.extract_strided_slice %157 {offsets = [0, 96], sizes = [16, 32], strides = [1, 1]} : vector<16x128xf32> to vector<16x32xf32>
    %161 = vector.extract_strided_slice %152 {offsets = [0, 64], sizes = [16, 32], strides = [1, 1]} : vector<16x128xf32> to vector<16x32xf32>
    %162 = math.tanh %161 : vector<16x32xf32>
    %163 = arith.mulf %159, %138 : vector<16x32xf32>
    %164 = arith.mulf %158, %162 : vector<16x32xf32>
    %165 = arith.addf %163, %164 : vector<16x32xf32>
    %166 = math.tanh %165 : vector<16x32xf32>
    %167 = arith.mulf %160, %166 : vector<16x32xf32>
    %168 = arith.truncf %167 : vector<16x32xf32> to vector<16x32xbf16>
    %c0_i32_44 = arith.constant 0 : i32
    %169 = arith.addi %c0_i32_44, %147 : i32
    %170 = tpu.assume_multiple %169, 16 : i32
    %171 = arith.index_cast %170 : i32 to index
    %c0_45 = arith.constant 0 : index
    %172 = vector.load %arg11[%171, %c0_45] : memref<128x32xbf16, #tpu.memory_space<vmem>>, vector<16x32xbf16>
    tpu.vector_store %arg11[%171, %c0_45], %168 {strides = array<i32>} : memref<128x32xbf16, #tpu.memory_space<vmem>>, vector<16x32xbf16>,
    %c6_i32 = arith.constant 6 : i32
    %c16_i32_46 = arith.constant 16 : i32
    %173 = arith.muli %c6_i32, %c16_i32_46 : i32
    %174 = tpu.assume_multiple %173, 16 : i32
    %175 = arith.index_cast %174 : i32 to index
    %c0_47 = arith.constant 0 : index
    %176 = vector.load %arg12[%175, %c0_47] : memref<128x128xbf16, #tpu.memory_space<vmem>>, vector<16x128xbf16>
    %177 = arith.extf %176 : vector<16x128xbf16> to vector<16x128xf32>
    %cst_48 = arith.constant dense<0.000000e+00> : vector<16x128xf32>
    %178 = tpu.matmul %168, %1, %cst_48 {dimension_numbers = #tpu.dot_dimension_numbers<[1], [0], [0], [1], [0, 0, 1, 1], [], []>} : vector<16x32xbf16>, vector<32x128xbf16>, vector<16x128xf32> -> vector<16x128xf32>
    %179 = arith.addf %177, %178 : vector<16x128xf32>
    %180 = arith.negf %179 : vector<16x128xf32>
    %181 = math.exp %180 : vector<16x128xf32>
    %cst_49 = arith.constant 1.000000e+00 : f32
    %182 = vector.broadcast %cst_49 : f32 to vector<16x128xf32>
    %183 = arith.addf %182, %181 : vector<16x128xf32>
    %184 = arith.divf %182, %183 : vector<16x128xf32>
    %185 = vector.extract_strided_slice %184 {offsets = [0, 0], sizes = [16, 32], strides = [1, 1]} : vector<16x128xf32> to vector<16x32xf32>
    %186 = vector.extract_strided_slice %184 {offsets = [0, 32], sizes = [16, 32], strides = [1, 1]} : vector<16x128xf32> to vector<16x32xf32>
    %187 = vector.extract_strided_slice %184 {offsets = [0, 96], sizes = [16, 32], strides = [1, 1]} : vector<16x128xf32> to vector<16x32xf32>
    %188 = vector.extract_strided_slice %179 {offsets = [0, 64], sizes = [16, 32], strides = [1, 1]} : vector<16x128xf32> to vector<16x32xf32>
    %189 = math.tanh %188 : vector<16x32xf32>
    %190 = arith.mulf %186, %165 : vector<16x32xf32>
    %191 = arith.mulf %185, %189 : vector<16x32xf32>
    %192 = arith.addf %190, %191 : vector<16x32xf32>
    %193 = math.tanh %192 : vector<16x32xf32>
    %194 = arith.mulf %187, %193 : vector<16x32xf32>
    %195 = arith.truncf %194 : vector<16x32xf32> to vector<16x32xbf16>
    %c0_i32_50 = arith.constant 0 : i32
    %196 = arith.addi %c0_i32_50, %174 : i32
    %197 = tpu.assume_multiple %196, 16 : i32
    %198 = arith.index_cast %197 : i32 to index
    %c0_51 = arith.constant 0 : index
    %199 = vector.load %arg11[%198, %c0_51] : memref<128x32xbf16, #tpu.memory_space<vmem>>, vector<16x32xbf16>
    tpu.vector_store %arg11[%198, %c0_51], %195 {strides = array<i32>} : memref<128x32xbf16, #tpu.memory_space<vmem>>, vector<16x32xbf16>,
    %c7_i32 = arith.constant 7 : i32
    %c16_i32_52 = arith.constant 16 : i32
    %200 = arith.muli %c7_i32, %c16_i32_52 : i32
    %201 = tpu.assume_multiple %200, 16 : i32
    %202 = arith.index_cast %201 : i32 to index
    %c0_53 = arith.constant 0 : index
    %203 = vector.load %arg12[%202, %c0_53] : memref<128x128xbf16, #tpu.memory_space<vmem>>, vector<16x128xbf16>
    %204 = arith.extf %203 : vector<16x128xbf16> to vector<16x128xf32>
    %cst_54 = arith.constant dense<0.000000e+00> : vector<16x128xf32>
    %205 = tpu.matmul %195, %1, %cst_54 {dimension_numbers = #tpu.dot_dimension_numbers<[1], [0], [0], [1], [0, 0, 1, 1], [], []>} : vector<16x32xbf16>, vector<32x128xbf16>, vector<16x128xf32> -> vector<16x128xf32>
    %206 = arith.addf %204, %205 : vector<16x128xf32>
    %207 = arith.negf %206 : vector<16x128xf32>
    %208 = math.exp %207 : vector<16x128xf32>
    %cst_55 = arith.constant 1.000000e+00 : f32
    %209 = vector.broadcast %cst_55 : f32 to vector<16x128xf32>
    %210 = arith.addf %209, %208 : vector<16x128xf32>
    %211 = arith.divf %209, %210 : vector<16x128xf32>
    %212 = vector.extract_strided_slice %211 {offsets = [0, 0], sizes = [16, 32], strides = [1, 1]} : vector<16x128xf32> to vector<16x32xf32>
    %213 = vector.extract_strided_slice %211 {offsets = [0, 32], sizes = [16, 32], strides = [1, 1]} : vector<16x128xf32> to vector<16x32xf32>
    %214 = vector.extract_strided_slice %211 {offsets = [0, 96], sizes = [16, 32], strides = [1, 1]} : vector<16x128xf32> to vector<16x32xf32>
    %215 = vector.extract_strided_slice %206 {offsets = [0, 64], sizes = [16, 32], strides = [1, 1]} : vector<16x128xf32> to vector<16x32xf32>
    %216 = math.tanh %215 : vector<16x32xf32>
    %217 = arith.mulf %213, %192 : vector<16x32xf32>
    %218 = arith.mulf %212, %216 : vector<16x32xf32>
    %219 = arith.addf %217, %218 : vector<16x32xf32>
    %220 = math.tanh %219 : vector<16x32xf32>
    %221 = arith.mulf %214, %220 : vector<16x32xf32>
    %222 = arith.truncf %221 : vector<16x32xf32> to vector<16x32xbf16>
    %c0_i32_56 = arith.constant 0 : i32
    %223 = arith.addi %c0_i32_56, %201 : i32
    %224 = tpu.assume_multiple %223, 16 : i32
    %225 = arith.index_cast %224 : i32 to index
    %c0_57 = arith.constant 0 : index
    %226 = vector.load %arg11[%225, %c0_57] : memref<128x32xbf16, #tpu.memory_space<vmem>>, vector<16x32xbf16>
    tpu.vector_store %arg11[%225, %c0_57], %222 {strides = array<i32>} : memref<128x32xbf16, #tpu.memory_space<vmem>>, vector<16x32xbf16>,
    %c8_i32 = arith.constant 8 : i32
    %c0_58 = arith.constant 0 : index
    %c0_59 = arith.constant 0 : index
    %227 = vector.load %arg5[%c0_58, %c0_59] : memref<32x128xbf16, #tpu.memory_space<vmem>>, vector<32x128xbf16>
    %c0_60 = arith.constant 0 : index
    %c0_61 = arith.constant 0 : index
    %228 = vector.load %arg6[%c0_60, %c0_61] : memref<32x128xbf16, #tpu.memory_space<vmem>>, vector<32x128xbf16>
    %c0_62 = arith.constant 0 : index
    %c0_63 = arith.constant 0 : index
    %229 = vector.load %arg7[%c0_62, %c0_63] : memref<1x128xf32, #tpu.memory_space<vmem>>, vector<1x128xf32>
    %cst_64 = arith.constant 0.000000e+00 : bf16
    %230 = vector.broadcast %cst_64 : bf16 to vector<16x32xbf16>
    %cst_65 = arith.constant 0.000000e+00 : f32
    %231 = vector.broadcast %cst_65 : f32 to vector<16x32xf32>
    %c0_66 = arith.constant 0 : index
    %c0_67 = arith.constant 0 : index
    %232 = vector.load %arg11[%c0_66, %c0_67] : memref<128x32xbf16, #tpu.memory_space<vmem>>, vector<128x32xbf16>
    %cst_68 = arith.constant dense<0.000000e+00> : vector<128x128xf32>
    %233 = tpu.matmul %232, %227, %cst_68 {dimension_numbers = #tpu.dot_dimension_numbers<[1], [0], [0], [1], [0, 0, 1, 1], [], []>} : vector<128x32xbf16>, vector<32x128xbf16>, vector<128x128xf32> -> vector<128x128xf32>
    %234 = vector.broadcast %229 : vector<1x128xf32> to vector<128x128xf32>
    %235 = arith.addf %233, %234 : vector<128x128xf32>
    %236 = arith.truncf %235 : vector<128x128xf32> to vector<128x128xbf16>
    %c0_69 = arith.constant 0 : index
    %c0_70 = arith.constant 0 : index
    %237 = vector.load %arg12[%c0_69, %c0_70] : memref<128x128xbf16, #tpu.memory_space<vmem>>, vector<128x128xbf16>
    tpu.vector_store %arg12[%c0_69, %c0_70], %236 {strides = array<i32>} : memref<128x128xbf16, #tpu.memory_space<vmem>>, vector<128x128xbf16>,
    %c0_i32_71 = arith.constant 0 : i32
    %c16_i32_72 = arith.constant 16 : i32
    %238 = arith.muli %c0_i32_71, %c16_i32_72 : i32
    %239 = tpu.assume_multiple %238, 16 : i32
    %240 = arith.index_cast %239 : i32 to index
    %c0_73 = arith.constant 0 : index
    %241 = vector.load %arg12[%240, %c0_73] : memref<128x128xbf16, #tpu.memory_space<vmem>>, vector<16x128xbf16>
    %242 = arith.extf %241 : vector<16x128xbf16> to vector<16x128xf32>
    %cst_74 = arith.constant dense<0.000000e+00> : vector<16x128xf32>
    %243 = tpu.matmul %230, %228, %cst_74 {dimension_numbers = #tpu.dot_dimension_numbers<[1], [0], [0], [1], [0, 0, 1, 1], [], []>} : vector<16x32xbf16>, vector<32x128xbf16>, vector<16x128xf32> -> vector<16x128xf32>
    %244 = arith.addf %242, %243 : vector<16x128xf32>
    %245 = arith.negf %244 : vector<16x128xf32>
    %246 = math.exp %245 : vector<16x128xf32>
    %cst_75 = arith.constant 1.000000e+00 : f32
    %247 = vector.broadcast %cst_75 : f32 to vector<16x128xf32>
    %248 = arith.addf %247, %246 : vector<16x128xf32>
    %249 = arith.divf %247, %248 : vector<16x128xf32>
    %250 = vector.extract_strided_slice %249 {offsets = [0, 0], sizes = [16, 32], strides = [1, 1]} : vector<16x128xf32> to vector<16x32xf32>
    %251 = vector.extract_strided_slice %249 {offsets = [0, 32], sizes = [16, 32], strides = [1, 1]} : vector<16x128xf32> to vector<16x32xf32>
    %252 = vector.extract_strided_slice %249 {offsets = [0, 96], sizes = [16, 32], strides = [1, 1]} : vector<16x128xf32> to vector<16x32xf32>
    %253 = vector.extract_strided_slice %244 {offsets = [0, 64], sizes = [16, 32], strides = [1, 1]} : vector<16x128xf32> to vector<16x32xf32>
    %254 = math.tanh %253 : vector<16x32xf32>
    %255 = arith.mulf %251, %231 : vector<16x32xf32>
    %256 = arith.mulf %250, %254 : vector<16x32xf32>
    %257 = arith.addf %255, %256 : vector<16x32xf32>
    %258 = math.tanh %257 : vector<16x32xf32>
    %259 = arith.mulf %252, %258 : vector<16x32xf32>
    %260 = arith.truncf %259 : vector<16x32xf32> to vector<16x32xbf16>
    %c0_i32_76 = arith.constant 0 : i32
    %261 = arith.addi %c0_i32_76, %239 : i32
    %262 = tpu.assume_multiple %261, 16 : i32
    %263 = arith.index_cast %262 : i32 to index
    %c0_77 = arith.constant 0 : index
    %264 = vector.load %arg11[%263, %c0_77] : memref<128x32xbf16, #tpu.memory_space<vmem>>, vector<16x32xbf16>
    tpu.vector_store %arg11[%263, %c0_77], %260 {strides = array<i32>} : memref<128x32xbf16, #tpu.memory_space<vmem>>, vector<16x32xbf16>,
    %c1_i32_78 = arith.constant 1 : i32
    %c16_i32_79 = arith.constant 16 : i32
    %265 = arith.muli %c1_i32_78, %c16_i32_79 : i32
    %266 = tpu.assume_multiple %265, 16 : i32
    %267 = arith.index_cast %266 : i32 to index
    %c0_80 = arith.constant 0 : index
    %268 = vector.load %arg12[%267, %c0_80] : memref<128x128xbf16, #tpu.memory_space<vmem>>, vector<16x128xbf16>
    %269 = arith.extf %268 : vector<16x128xbf16> to vector<16x128xf32>
    %cst_81 = arith.constant dense<0.000000e+00> : vector<16x128xf32>
    %270 = tpu.matmul %260, %228, %cst_81 {dimension_numbers = #tpu.dot_dimension_numbers<[1], [0], [0], [1], [0, 0, 1, 1], [], []>} : vector<16x32xbf16>, vector<32x128xbf16>, vector<16x128xf32> -> vector<16x128xf32>
    %271 = arith.addf %269, %270 : vector<16x128xf32>
    %272 = arith.negf %271 : vector<16x128xf32>
    %273 = math.exp %272 : vector<16x128xf32>
    %cst_82 = arith.constant 1.000000e+00 : f32
    %274 = vector.broadcast %cst_82 : f32 to vector<16x128xf32>
    %275 = arith.addf %274, %273 : vector<16x128xf32>
    %276 = arith.divf %274, %275 : vector<16x128xf32>
    %277 = vector.extract_strided_slice %276 {offsets = [0, 0], sizes = [16, 32], strides = [1, 1]} : vector<16x128xf32> to vector<16x32xf32>
    %278 = vector.extract_strided_slice %276 {offsets = [0, 32], sizes = [16, 32], strides = [1, 1]} : vector<16x128xf32> to vector<16x32xf32>
    %279 = vector.extract_strided_slice %276 {offsets = [0, 96], sizes = [16, 32], strides = [1, 1]} : vector<16x128xf32> to vector<16x32xf32>
    %280 = vector.extract_strided_slice %271 {offsets = [0, 64], sizes = [16, 32], strides = [1, 1]} : vector<16x128xf32> to vector<16x32xf32>
    %281 = math.tanh %280 : vector<16x32xf32>
    %282 = arith.mulf %278, %257 : vector<16x32xf32>
    %283 = arith.mulf %277, %281 : vector<16x32xf32>
    %284 = arith.addf %282, %283 : vector<16x32xf32>
    %285 = math.tanh %284 : vector<16x32xf32>
    %286 = arith.mulf %279, %285 : vector<16x32xf32>
    %287 = arith.truncf %286 : vector<16x32xf32> to vector<16x32xbf16>
    %c0_i32_83 = arith.constant 0 : i32
    %288 = arith.addi %c0_i32_83, %266 : i32
    %289 = tpu.assume_multiple %288, 16 : i32
    %290 = arith.index_cast %289 : i32 to index
    %c0_84 = arith.constant 0 : index
    %291 = vector.load %arg11[%290, %c0_84] : memref<128x32xbf16, #tpu.memory_space<vmem>>, vector<16x32xbf16>
    tpu.vector_store %arg11[%290, %c0_84], %287 {strides = array<i32>} : memref<128x32xbf16, #tpu.memory_space<vmem>>, vector<16x32xbf16>,
    %c2_i32_85 = arith.constant 2 : i32
    %c16_i32_86 = arith.constant 16 : i32
    %292 = arith.muli %c2_i32_85, %c16_i32_86 : i32
    %293 = tpu.assume_multiple %292, 16 : i32
    %294 = arith.index_cast %293 : i32 to index
    %c0_87 = arith.constant 0 : index
    %295 = vector.load %arg12[%294, %c0_87] : memref<128x128xbf16, #tpu.memory_space<vmem>>, vector<16x128xbf16>
    %296 = arith.extf %295 : vector<16x128xbf16> to vector<16x128xf32>
    %cst_88 = arith.constant dense<0.000000e+00> : vector<16x128xf32>
    %297 = tpu.matmul %287, %228, %cst_88 {dimension_numbers = #tpu.dot_dimension_numbers<[1], [0], [0], [1], [0, 0, 1, 1], [], []>} : vector<16x32xbf16>, vector<32x128xbf16>, vector<16x128xf32> -> vector<16x128xf32>
    %298 = arith.addf %296, %297 : vector<16x128xf32>
    %299 = arith.negf %298 : vector<16x128xf32>
    %300 = math.exp %299 : vector<16x128xf32>
    %cst_89 = arith.constant 1.000000e+00 : f32
    %301 = vector.broadcast %cst_89 : f32 to vector<16x128xf32>
    %302 = arith.addf %301, %300 : vector<16x128xf32>
    %303 = arith.divf %301, %302 : vector<16x128xf32>
    %304 = vector.extract_strided_slice %303 {offsets = [0, 0], sizes = [16, 32], strides = [1, 1]} : vector<16x128xf32> to vector<16x32xf32>
    %305 = vector.extract_strided_slice %303 {offsets = [0, 32], sizes = [16, 32], strides = [1, 1]} : vector<16x128xf32> to vector<16x32xf32>
    %306 = vector.extract_strided_slice %303 {offsets = [0, 96], sizes = [16, 32], strides = [1, 1]} : vector<16x128xf32> to vector<16x32xf32>
    %307 = vector.extract_strided_slice %298 {offsets = [0, 64], sizes = [16, 32], strides = [1, 1]} : vector<16x128xf32> to vector<16x32xf32>
    %308 = math.tanh %307 : vector<16x32xf32>
    %309 = arith.mulf %305, %284 : vector<16x32xf32>
    %310 = arith.mulf %304, %308 : vector<16x32xf32>
    %311 = arith.addf %309, %310 : vector<16x32xf32>
    %312 = math.tanh %311 : vector<16x32xf32>
    %313 = arith.mulf %306, %312 : vector<16x32xf32>
    %314 = arith.truncf %313 : vector<16x32xf32> to vector<16x32xbf16>
    %c0_i32_90 = arith.constant 0 : i32
    %315 = arith.addi %c0_i32_90, %293 : i32
    %316 = tpu.assume_multiple %315, 16 : i32
    %317 = arith.index_cast %316 : i32 to index
    %c0_91 = arith.constant 0 : index
    %318 = vector.load %arg11[%317, %c0_91] : memref<128x32xbf16, #tpu.memory_space<vmem>>, vector<16x32xbf16>
    tpu.vector_store %arg11[%317, %c0_91], %314 {strides = array<i32>} : memref<128x32xbf16, #tpu.memory_space<vmem>>, vector<16x32xbf16>,
    %c3_i32_92 = arith.constant 3 : i32
    %c16_i32_93 = arith.constant 16 : i32
    %319 = arith.muli %c3_i32_92, %c16_i32_93 : i32
    %320 = tpu.assume_multiple %319, 16 : i32
    %321 = arith.index_cast %320 : i32 to index
    %c0_94 = arith.constant 0 : index
    %322 = vector.load %arg12[%321, %c0_94] : memref<128x128xbf16, #tpu.memory_space<vmem>>, vector<16x128xbf16>
    %323 = arith.extf %322 : vector<16x128xbf16> to vector<16x128xf32>
    %cst_95 = arith.constant dense<0.000000e+00> : vector<16x128xf32>
    %324 = tpu.matmul %314, %228, %cst_95 {dimension_numbers = #tpu.dot_dimension_numbers<[1], [0], [0], [1], [0, 0, 1, 1], [], []>} : vector<16x32xbf16>, vector<32x128xbf16>, vector<16x128xf32> -> vector<16x128xf32>
    %325 = arith.addf %323, %324 : vector<16x128xf32>
    %326 = arith.negf %325 : vector<16x128xf32>
    %327 = math.exp %326 : vector<16x128xf32>
    %cst_96 = arith.constant 1.000000e+00 : f32
    %328 = vector.broadcast %cst_96 : f32 to vector<16x128xf32>
    %329 = arith.addf %328, %327 : vector<16x128xf32>
    %330 = arith.divf %328, %329 : vector<16x128xf32>
    %331 = vector.extract_strided_slice %330 {offsets = [0, 0], sizes = [16, 32], strides = [1, 1]} : vector<16x128xf32> to vector<16x32xf32>
    %332 = vector.extract_strided_slice %330 {offsets = [0, 32], sizes = [16, 32], strides = [1, 1]} : vector<16x128xf32> to vector<16x32xf32>
    %333 = vector.extract_strided_slice %330 {offsets = [0, 96], sizes = [16, 32], strides = [1, 1]} : vector<16x128xf32> to vector<16x32xf32>
    %334 = vector.extract_strided_slice %325 {offsets = [0, 64], sizes = [16, 32], strides = [1, 1]} : vector<16x128xf32> to vector<16x32xf32>
    %335 = math.tanh %334 : vector<16x32xf32>
    %336 = arith.mulf %332, %311 : vector<16x32xf32>
    %337 = arith.mulf %331, %335 : vector<16x32xf32>
    %338 = arith.addf %336, %337 : vector<16x32xf32>
    %339 = math.tanh %338 : vector<16x32xf32>
    %340 = arith.mulf %333, %339 : vector<16x32xf32>
    %341 = arith.truncf %340 : vector<16x32xf32> to vector<16x32xbf16>
    %c0_i32_97 = arith.constant 0 : i32
    %342 = arith.addi %c0_i32_97, %320 : i32
    %343 = tpu.assume_multiple %342, 16 : i32
    %344 = arith.index_cast %343 : i32 to index
    %c0_98 = arith.constant 0 : index
    %345 = vector.load %arg11[%344, %c0_98] : memref<128x32xbf16, #tpu.memory_space<vmem>>, vector<16x32xbf16>
    tpu.vector_store %arg11[%344, %c0_98], %341 {strides = array<i32>} : memref<128x32xbf16, #tpu.memory_space<vmem>>, vector<16x32xbf16>,
    %c4_i32_99 = arith.constant 4 : i32
    %c16_i32_100 = arith.constant 16 : i32
    %346 = arith.muli %c4_i32_99, %c16_i32_100 : i32
    %347 = tpu.assume_multiple %346, 16 : i32
    %348 = arith.index_cast %347 : i32 to index
    %c0_101 = arith.constant 0 : index
    %349 = vector.load %arg12[%348, %c0_101] : memref<128x128xbf16, #tpu.memory_space<vmem>>, vector<16x128xbf16>
    %350 = arith.extf %349 : vector<16x128xbf16> to vector<16x128xf32>
    %cst_102 = arith.constant dense<0.000000e+00> : vector<16x128xf32>
    %351 = tpu.matmul %341, %228, %cst_102 {dimension_numbers = #tpu.dot_dimension_numbers<[1], [0], [0], [1], [0, 0, 1, 1], [], []>} : vector<16x32xbf16>, vector<32x128xbf16>, vector<16x128xf32> -> vector<16x128xf32>
    %352 = arith.addf %350, %351 : vector<16x128xf32>
    %353 = arith.negf %352 : vector<16x128xf32>
    %354 = math.exp %353 : vector<16x128xf32>
    %cst_103 = arith.constant 1.000000e+00 : f32
    %355 = vector.broadcast %cst_103 : f32 to vector<16x128xf32>
    %356 = arith.addf %355, %354 : vector<16x128xf32>
    %357 = arith.divf %355, %356 : vector<16x128xf32>
    %358 = vector.extract_strided_slice %357 {offsets = [0, 0], sizes = [16, 32], strides = [1, 1]} : vector<16x128xf32> to vector<16x32xf32>
    %359 = vector.extract_strided_slice %357 {offsets = [0, 32], sizes = [16, 32], strides = [1, 1]} : vector<16x128xf32> to vector<16x32xf32>
    %360 = vector.extract_strided_slice %357 {offsets = [0, 96], sizes = [16, 32], strides = [1, 1]} : vector<16x128xf32> to vector<16x32xf32>
    %361 = vector.extract_strided_slice %352 {offsets = [0, 64], sizes = [16, 32], strides = [1, 1]} : vector<16x128xf32> to vector<16x32xf32>
    %362 = math.tanh %361 : vector<16x32xf32>
    %363 = arith.mulf %359, %338 : vector<16x32xf32>
    %364 = arith.mulf %358, %362 : vector<16x32xf32>
    %365 = arith.addf %363, %364 : vector<16x32xf32>
    %366 = math.tanh %365 : vector<16x32xf32>
    %367 = arith.mulf %360, %366 : vector<16x32xf32>
    %368 = arith.truncf %367 : vector<16x32xf32> to vector<16x32xbf16>
    %c0_i32_104 = arith.constant 0 : i32
    %369 = arith.addi %c0_i32_104, %347 : i32
    %370 = tpu.assume_multiple %369, 16 : i32
    %371 = arith.index_cast %370 : i32 to index
    %c0_105 = arith.constant 0 : index
    %372 = vector.load %arg11[%371, %c0_105] : memref<128x32xbf16, #tpu.memory_space<vmem>>, vector<16x32xbf16>
    tpu.vector_store %arg11[%371, %c0_105], %368 {strides = array<i32>} : memref<128x32xbf16, #tpu.memory_space<vmem>>, vector<16x32xbf16>,
    %c5_i32_106 = arith.constant 5 : i32
    %c16_i32_107 = arith.constant 16 : i32
    %373 = arith.muli %c5_i32_106, %c16_i32_107 : i32
    %374 = tpu.assume_multiple %373, 16 : i32
    %375 = arith.index_cast %374 : i32 to index
    %c0_108 = arith.constant 0 : index
    %376 = vector.load %arg12[%375, %c0_108] : memref<128x128xbf16, #tpu.memory_space<vmem>>, vector<16x128xbf16>
    %377 = arith.extf %376 : vector<16x128xbf16> to vector<16x128xf32>
    %cst_109 = arith.constant dense<0.000000e+00> : vector<16x128xf32>
    %378 = tpu.matmul %368, %228, %cst_109 {dimension_numbers = #tpu.dot_dimension_numbers<[1], [0], [0], [1], [0, 0, 1, 1], [], []>} : vector<16x32xbf16>, vector<32x128xbf16>, vector<16x128xf32> -> vector<16x128xf32>
    %379 = arith.addf %377, %378 : vector<16x128xf32>
    %380 = arith.negf %379 : vector<16x128xf32>
    %381 = math.exp %380 : vector<16x128xf32>
    %cst_110 = arith.constant 1.000000e+00 : f32
    %382 = vector.broadcast %cst_110 : f32 to vector<16x128xf32>
    %383 = arith.addf %382, %381 : vector<16x128xf32>
    %384 = arith.divf %382, %383 : vector<16x128xf32>
    %385 = vector.extract_strided_slice %384 {offsets = [0, 0], sizes = [16, 32], strides = [1, 1]} : vector<16x128xf32> to vector<16x32xf32>
    %386 = vector.extract_strided_slice %384 {offsets = [0, 32], sizes = [16, 32], strides = [1, 1]} : vector<16x128xf32> to vector<16x32xf32>
    %387 = vector.extract_strided_slice %384 {offsets = [0, 96], sizes = [16, 32], strides = [1, 1]} : vector<16x128xf32> to vector<16x32xf32>
    %388 = vector.extract_strided_slice %379 {offsets = [0, 64], sizes = [16, 32], strides = [1, 1]} : vector<16x128xf32> to vector<16x32xf32>
    %389 = math.tanh %388 : vector<16x32xf32>
    %390 = arith.mulf %386, %365 : vector<16x32xf32>
    %391 = arith.mulf %385, %389 : vector<16x32xf32>
    %392 = arith.addf %390, %391 : vector<16x32xf32>
    %393 = math.tanh %392 : vector<16x32xf32>
    %394 = arith.mulf %387, %393 : vector<16x32xf32>
    %395 = arith.truncf %394 : vector<16x32xf32> to vector<16x32xbf16>
    %c0_i32_111 = arith.constant 0 : i32
    %396 = arith.addi %c0_i32_111, %374 : i32
    %397 = tpu.assume_multiple %396, 16 : i32
    %398 = arith.index_cast %397 : i32 to index
    %c0_112 = arith.constant 0 : index
    %399 = vector.load %arg11[%398, %c0_112] : memref<128x32xbf16, #tpu.memory_space<vmem>>, vector<16x32xbf16>
    tpu.vector_store %arg11[%398, %c0_112], %395 {strides = array<i32>} : memref<128x32xbf16, #tpu.memory_space<vmem>>, vector<16x32xbf16>,
    %c6_i32_113 = arith.constant 6 : i32
    %c16_i32_114 = arith.constant 16 : i32
    %400 = arith.muli %c6_i32_113, %c16_i32_114 : i32
    %401 = tpu.assume_multiple %400, 16 : i32
    %402 = arith.index_cast %401 : i32 to index
    %c0_115 = arith.constant 0 : index
    %403 = vector.load %arg12[%402, %c0_115] : memref<128x128xbf16, #tpu.memory_space<vmem>>, vector<16x128xbf16>
    %404 = arith.extf %403 : vector<16x128xbf16> to vector<16x128xf32>
    %cst_116 = arith.constant dense<0.000000e+00> : vector<16x128xf32>
    %405 = tpu.matmul %395, %228, %cst_116 {dimension_numbers = #tpu.dot_dimension_numbers<[1], [0], [0], [1], [0, 0, 1, 1], [], []>} : vector<16x32xbf16>, vector<32x128xbf16>, vector<16x128xf32> -> vector<16x128xf32>
    %406 = arith.addf %404, %405 : vector<16x128xf32>
    %407 = arith.negf %406 : vector<16x128xf32>
    %408 = math.exp %407 : vector<16x128xf32>
    %cst_117 = arith.constant 1.000000e+00 : f32
    %409 = vector.broadcast %cst_117 : f32 to vector<16x128xf32>
    %410 = arith.addf %409, %408 : vector<16x128xf32>
    %411 = arith.divf %409, %410 : vector<16x128xf32>
    %412 = vector.extract_strided_slice %411 {offsets = [0, 0], sizes = [16, 32], strides = [1, 1]} : vector<16x128xf32> to vector<16x32xf32>
    %413 = vector.extract_strided_slice %411 {offsets = [0, 32], sizes = [16, 32], strides = [1, 1]} : vector<16x128xf32> to vector<16x32xf32>
    %414 = vector.extract_strided_slice %411 {offsets = [0, 96], sizes = [16, 32], strides = [1, 1]} : vector<16x128xf32> to vector<16x32xf32>
    %415 = vector.extract_strided_slice %406 {offsets = [0, 64], sizes = [16, 32], strides = [1, 1]} : vector<16x128xf32> to vector<16x32xf32>
    %416 = math.tanh %415 : vector<16x32xf32>
    %417 = arith.mulf %413, %392 : vector<16x32xf32>
    %418 = arith.mulf %412, %416 : vector<16x32xf32>
    %419 = arith.addf %417, %418 : vector<16x32xf32>
    %420 = math.tanh %419 : vector<16x32xf32>
    %421 = arith.mulf %414, %420 : vector<16x32xf32>
    %422 = arith.truncf %421 : vector<16x32xf32> to vector<16x32xbf16>
    %c0_i32_118 = arith.constant 0 : i32
    %423 = arith.addi %c0_i32_118, %401 : i32
    %424 = tpu.assume_multiple %423, 16 : i32
    %425 = arith.index_cast %424 : i32 to index
    %c0_119 = arith.constant 0 : index
    %426 = vector.load %arg11[%425, %c0_119] : memref<128x32xbf16, #tpu.memory_space<vmem>>, vector<16x32xbf16>
    tpu.vector_store %arg11[%425, %c0_119], %422 {strides = array<i32>} : memref<128x32xbf16, #tpu.memory_space<vmem>>, vector<16x32xbf16>,
    %c7_i32_120 = arith.constant 7 : i32
    %c16_i32_121 = arith.constant 16 : i32
    %427 = arith.muli %c7_i32_120, %c16_i32_121 : i32
    %428 = tpu.assume_multiple %427, 16 : i32
    %429 = arith.index_cast %428 : i32 to index
    %c0_122 = arith.constant 0 : index
    %430 = vector.load %arg12[%429, %c0_122] : memref<128x128xbf16, #tpu.memory_space<vmem>>, vector<16x128xbf16>
    %431 = arith.extf %430 : vector<16x128xbf16> to vector<16x128xf32>
    %cst_123 = arith.constant dense<0.000000e+00> : vector<16x128xf32>
    %432 = tpu.matmul %422, %228, %cst_123 {dimension_numbers = #tpu.dot_dimension_numbers<[1], [0], [0], [1], [0, 0, 1, 1], [], []>} : vector<16x32xbf16>, vector<32x128xbf16>, vector<16x128xf32> -> vector<16x128xf32>
    %433 = arith.addf %431, %432 : vector<16x128xf32>
    %434 = arith.negf %433 : vector<16x128xf32>
    %435 = math.exp %434 : vector<16x128xf32>
    %cst_124 = arith.constant 1.000000e+00 : f32
    %436 = vector.broadcast %cst_124 : f32 to vector<16x128xf32>
    %437 = arith.addf %436, %435 : vector<16x128xf32>
    %438 = arith.divf %436, %437 : vector<16x128xf32>
    %439 = vector.extract_strided_slice %438 {offsets = [0, 0], sizes = [16, 32], strides = [1, 1]} : vector<16x128xf32> to vector<16x32xf32>
    %440 = vector.extract_strided_slice %438 {offsets = [0, 32], sizes = [16, 32], strides = [1, 1]} : vector<16x128xf32> to vector<16x32xf32>
    %441 = vector.extract_strided_slice %438 {offsets = [0, 96], sizes = [16, 32], strides = [1, 1]} : vector<16x128xf32> to vector<16x32xf32>
    %442 = vector.extract_strided_slice %433 {offsets = [0, 64], sizes = [16, 32], strides = [1, 1]} : vector<16x128xf32> to vector<16x32xf32>
    %443 = math.tanh %442 : vector<16x32xf32>
    %444 = arith.mulf %440, %419 : vector<16x32xf32>
    %445 = arith.mulf %439, %443 : vector<16x32xf32>
    %446 = arith.addf %444, %445 : vector<16x32xf32>
    %447 = math.tanh %446 : vector<16x32xf32>
    %448 = arith.mulf %441, %447 : vector<16x32xf32>
    %449 = arith.truncf %448 : vector<16x32xf32> to vector<16x32xbf16>
    %c0_i32_125 = arith.constant 0 : i32
    %450 = arith.addi %c0_i32_125, %428 : i32
    %451 = tpu.assume_multiple %450, 16 : i32
    %452 = arith.index_cast %451 : i32 to index
    %c0_126 = arith.constant 0 : index
    %453 = vector.load %arg11[%452, %c0_126] : memref<128x32xbf16, #tpu.memory_space<vmem>>, vector<16x32xbf16>
    tpu.vector_store %arg11[%452, %c0_126], %449 {strides = array<i32>} : memref<128x32xbf16, #tpu.memory_space<vmem>>, vector<16x32xbf16>,
    %c8_i32_127 = arith.constant 8 : i32
    %c0_128 = arith.constant 0 : index
    %c0_129 = arith.constant 0 : index
    %454 = vector.load %arg8[%c0_128, %c0_129] : memref<32x1xbf16, #tpu.memory_space<vmem>>, vector<32x1xbf16>
    %cst_130 = arith.constant dense<0.000000e+00> : vector<16x1xf32>
    %455 = tpu.matmul %449, %454, %cst_130 {dimension_numbers = #tpu.dot_dimension_numbers<[1], [0], [0], [1], [0, 0, 1, 1], [], []>} : vector<16x32xbf16>, vector<32x1xbf16>, vector<16x1xf32> -> vector<16x1xf32>
    %c0_131 = arith.constant 0 : index
    %c0_132 = arith.constant 0 : index
    %456 = vector.load %arg9[%c0_131, %c0_132] : memref<1x1xf32, #tpu.memory_space<vmem>>, vector<1x1xf32>
    %457 = vector.broadcast %456 : vector<1x1xf32> to vector<16x1xf32>
    %458 = arith.addf %455, %457 : vector<16x1xf32>
    %c0_133 = arith.constant 0 : index
    %c0_134 = arith.constant 0 : index
    %459 = vector.load %arg10[%c0_133, %c0_134] : memref<16x1xf32, #tpu.memory_space<vmem>>, vector<16x1xf32>
    tpu.vector_store %arg10[%c0_133, %c0_134], %458 {strides = array<i32>} : memref<16x1xf32, #tpu.memory_space<vmem>>, vector<16x1xf32>,
    return
  }
  func.func @transform_0(%arg0: i32) -> (i32, i32) {
    %c0_i32 = arith.constant 0 : i32
    %c0_i32_0 = arith.constant 0 : i32
    %c0_i32_1 = arith.constant 0 : i32
    return %c0_i32, %c0_i32_0 : i32, i32
  }
  func.func @transform_1(%arg0: i32) -> (i32, i32) {
    %c0_i32 = arith.constant 0 : i32
    %c0_i32_0 = arith.constant 0 : i32
    %c0_i32_1 = arith.constant 0 : i32
    return %c0_i32, %c0_i32_0 : i32, i32
  }
  func.func @transform_2(%arg0: i32) -> (i32, i32) {
    %c0_i32 = arith.constant 0 : i32
    %c0_i32_0 = arith.constant 0 : i32
    %c0_i32_1 = arith.constant 0 : i32
    return %c0_i32, %c0_i32_0 : i32, i32
  }
  func.func @transform_3(%arg0: i32) -> (i32, i32) {
    %c0_i32 = arith.constant 0 : i32
    %c0_i32_0 = arith.constant 0 : i32
    %c0_i32_1 = arith.constant 0 : i32
    return %c0_i32, %c0_i32_0 : i32, i32
  }
  func.func @transform_4(%arg0: i32) -> (i32, i32) {
    %c0_i32 = arith.constant 0 : i32
    %c0_i32_0 = arith.constant 0 : i32
    %c0_i32_1 = arith.constant 0 : i32
    return %c0_i32, %c0_i32_0 : i32, i32
  }
  func.func @transform_5(%arg0: i32) -> (i32, i32) {
    %c0_i32 = arith.constant 0 : i32
    %c0_i32_0 = arith.constant 0 : i32
    %c0_i32_1 = arith.constant 0 : i32
    return %c0_i32, %c0_i32_0 : i32, i32
  }
  func.func @transform_6(%arg0: i32) -> (i32, i32) {
    %c0_i32 = arith.constant 0 : i32
    %c0_i32_0 = arith.constant 0 : i32
    %c0_i32_1 = arith.constant 0 : i32
    return %c0_i32, %c0_i32_0 : i32, i32
  }
  func.func @transform_7(%arg0: i32) -> (i32, i32) {
    %c0_i32 = arith.constant 0 : i32
    %c0_i32_0 = arith.constant 0 : i32
    %c0_i32_1 = arith.constant 0 : i32
    return %c0_i32, %c0_i32_0 : i32, i32
  }
  func.func @transform_8(%arg0: i32) -> (i32, i32) {
    %c0_i32 = arith.constant 0 : i32
    %c0_i32_0 = arith.constant 0 : i32
    %c0_i32_1 = arith.constant 0 : i32
    return %c0_i32, %c0_i32_0 : i32, i32
  }
  func.func @transform_9(%arg0: i32) -> (i32, i32) {
    %c0_i32 = arith.constant 0 : i32
    %c0_i32_0 = arith.constant 0 : i32
    %c0_i32_1 = arith.constant 0 : i32
    return %c0_i32, %c0_i32_0 : i32, i32
  }
}

</mosaic_0001>

<llo_original>
// kernel: lstm_model_forward.1
$region0: #{lstm_model_forward.1}
  #allocation0 [shape = 'u32[]', space=smem, size = 0x4, offset = 0x4, fixed_abs, tag = 'smem constant byte address 0x4 - core index']
  #allocation1 [shape = 'u32[144,128]{1,0:T(1,128)}', space=vmem, size = 0x12000, scoped, tag = 'internal scratch']
  #allocation2 [shape = 'bf16[128,32]{1,0:T(8,128)(2,1)}', space=vmem, size = 0x8000, scoped, tag = 'scratch operand']
  #allocation3 [shape = 'bf16[128,128]{1,0:T(8,128)(2,1)}', space=vmem, size = 0x8000, scoped, tag = 'scratch operand']
  #allocation4 [shape = 'f32[1,1]{1,0:T(1,128)S(1)}', space=vmem, size = 0x200, scoped, tag = 'scoped memory for lstm_model_forward.1']
  %s0 = inlined_call_operand.vmem [shape: bf16[128,16], index: 0, kind: input, shape index: {}]
  %s1 = inlined_call_operand.vmem [shape: bf16[16,128], index: 1, kind: input, shape index: {}]
  %s2 = inlined_call_operand.vmem [shape: bf16[32,128], index: 2, kind: input, shape index: {}]
  %s3 = inlined_call_operand.vmem [shape: f32[1,128], index: 3, kind: input, shape index: {}]
  %s4 = inlined_call_operand.vmem [shape: bf16[32,128], index: 4, kind: input, shape index: {}]
  %s5 = inlined_call_operand.vmem [shape: bf16[32,128], index: 5, kind: input, shape index: {}]
  %s6 = inlined_call_operand.vmem [shape: f32[1,128], index: 6, kind: input, shape index: {}]
  %s7 = inlined_call_operand.vmem [shape: bf16[32,1], index: 7, kind: input, shape index: {}]
  %s8 = inlined_call_operand.<no memory space> [shape: f32[1,1], index: 8, kind: input, shape index: {}]
  %s9 = inlined_call_operand.vmem [shape: f32[16,1], index: 9, kind: output, shape index: {}]
  %s10 = sld [smem:[#allocation0]]
  $region46: #{lstm_model_forward.1} parent=0
    _
  %s12 = ssub.s32 1, %s10
  %s13 = scalar_select 0, %s12, %s10
  %v14 = vstv %s8
  %15 = vst [vmem:[#allocation4] sm:$0x1] %v14
  // Predicated region
  $region2: #{lstm_model_forward.1} parent=0 // pred_check
    _
  $region3: #{lstm_model_forward.1} parent=0 // pred_check_branch
    %17 = sbr.rel (0) target = $region5
  $region4: #{lstm_model_forward.1} parent=0 // pred_region
    _
  $region5: #{lstm_model_forward.1} parent=0 // pred_fallthru
    _
  // Predicated region
  $region6: #{lstm_model_forward.1} parent=0 // pred_check
    _
  $region7: #{lstm_model_forward.1} parent=0 // pred_check_branch
    %19 = sbr.rel (0) target = $region9
  $region8: #{lstm_model_forward.1} parent=0 // pred_region
    _
  $region9: #{lstm_model_forward.1} parent=0 // pred_fallthru
    _
  // Predicated region
  $region10: #{lstm_model_forward.1} parent=0 // pred_check
    _
  $region11: #{lstm_model_forward.1} parent=0 // pred_check_branch
    %21 = sbr.rel (0) target = $region13
  $region12: #{lstm_model_forward.1} parent=0 // pred_region
    _
  $region13: #{lstm_model_forward.1} parent=0 // pred_fallthru
    _
  // Predicated region
  $region14: #{lstm_model_forward.1} parent=0 // pred_check
    _
  $region15: #{lstm_model_forward.1} parent=0 // pred_check_branch
    %23 = sbr.rel (0) target = $region17
  $region16: #{lstm_model_forward.1} parent=0 // pred_region
    _
  $region17: #{lstm_model_forward.1} parent=0 // pred_fallthru
    _
  // Predicated region
  $region18: #{lstm_model_forward.1} parent=0 // pred_check
    _
  $region19: #{lstm_model_forward.1} parent=0 // pred_check_branch
    %25 = sbr.rel (0) target = $region21
  $region20: #{lstm_model_forward.1} parent=0 // pred_region
    _
  $region21: #{lstm_model_forward.1} parent=0 // pred_fallthru
    _
  // Predicated region
  $region22: #{lstm_model_forward.1} parent=0 // pred_check
    _
  $region23: #{lstm_model_forward.1} parent=0 // pred_check_branch
    %27 = sbr.rel (0) target = $region25
  $region24: #{lstm_model_forward.1} parent=0 // pred_region
    _
  $region25: #{lstm_model_forward.1} parent=0 // pred_fallthru
    _
  // Predicated region
  $region26: #{lstm_model_forward.1} parent=0 // pred_check
    _
  $region27: #{lstm_model_forward.1} parent=0 // pred_check_branch
    %29 = sbr.rel (0) target = $region29
  $region28: #{lstm_model_forward.1} parent=0 // pred_region
    _
  $region29: #{lstm_model_forward.1} parent=0 // pred_fallthru
    _
  // Predicated region
  $region30: #{lstm_model_forward.1} parent=0 // pred_check
    _
  $region31: #{lstm_model_forward.1} parent=0 // pred_check_branch
    %31 = sbr.rel (0) target = $region33
  $region32: #{lstm_model_forward.1} parent=0 // pred_region
    _
  $region33: #{lstm_model_forward.1} parent=0 // pred_fallthru
    _
  // Predicated region
  $region34: #{lstm_model_forward.1} parent=0 // pred_check
    _
  $region35: #{lstm_model_forward.1} parent=0 // pred_check_branch
    %33 = sbr.rel (0) target = $region37
  $region36: #{lstm_model_forward.1} parent=0 // pred_region
    _
  $region37: #{lstm_model_forward.1} parent=0 // pred_fallthru
    _
  %v35 = vld [vmem:[%s1] sm:$0xf]
  %v36 = vld [vmem:[%s1 + $0x4] sm:$0xf]
  %v37 = vld [vmem:[%s2] sm:$0xf]
  %v38 = vld [vmem:[%s2 + $0x4] sm:$0xf]
  %v39 = vld [vmem:[%s2 + $0x8] sm:$0xf]
  %v40 = vld [vmem:[%s2 + $0xc] sm:$0xf]
  %v41 = vld [vmem:[%s3] sm:$0x1]
  %v42 = vld [vmem:[%s0] sm:$0xf]
  %v43 = vld [vmem:[%s0 + $0x4] sm:$0xf]
  %v44 = vld [vmem:[%s0 + $0x8] sm:$0xf]
  %v45 = vld [vmem:[%s0 + $0xc] sm:$0xf]
  %v46 = vld [vmem:[%s0 + $0x10] sm:$0xf]
  %v47 = vld [vmem:[%s0 + $0x14] sm:$0xf]
  %v48 = vld [vmem:[%s0 + $0x18] sm:$0xf]
  %v49 = vld [vmem:[%s0 + $0x1c] sm:$0xf]
  %v50 = vld [vmem:[%s0 + $0x20] sm:$0xf]
  %v51 = vld [vmem:[%s0 + $0x24] sm:$0xf]
  %v52 = vld [vmem:[%s0 + $0x28] sm:$0xf]
  %v53 = vld [vmem:[%s0 + $0x2c] sm:$0xf]
  %v54 = vld [vmem:[%s0 + $0x30] sm:$0xf]
  %v55 = vld [vmem:[%s0 + $0x34] sm:$0xf]
  %v56 = vld [vmem:[%s0 + $0x38] sm:$0xf]
  %v57 = vld [vmem:[%s0 + $0x3c] sm:$0xf]
  %v59 = vlaneseq
  %v60 = vshrl.u32 %v59, 7
  %v61 = vsub.s32 0, %v60
  %v62 = vrot.slane %v41, %v61
  %v80 = vunpack.c.l.b16 %v42
  %v81 = vunpack.c.l.b16 %v43
  %v82 = vunpack.c.l.b16 %v44
  %v83 = vunpack.c.l.b16 %v45
  %v84 = vunpack.c.l.b16 %v46
  %v85 = vunpack.c.l.b16 %v47
  %v86 = vunpack.c.l.b16 %v48
  %v87 = vunpack.c.l.b16 %v49
  %v88 = vunpack.c.l.b16 %v50
  %v89 = vunpack.c.l.b16 %v51
  %v90 = vunpack.c.l.b16 %v52
  %v91 = vunpack.c.l.b16 %v53
  %v92 = vunpack.c.l.b16 %v54
  %v93 = vunpack.c.l.b16 %v55
  %v94 = vunpack.c.l.b16 %v56
  %v95 = vunpack.c.l.b16 %v57
  %v96 = vpack.c.b16 %v81, %v80
  %v97 = vpack.c.b16 %v83, %v82
  %v98 = vpack.c.b16 %v85, %v84
  %v99 = vpack.c.b16 %v87, %v86
  %v100 = vpack.c.b16 %v89, %v88
  %v101 = vpack.c.b16 %v91, %v90
  %v102 = vpack.c.b16 %v93, %v92
  %v103 = vpack.c.b16 %v95, %v94
  %v106 = vunpack.c.l.b16 %v35
  %v107 = vunpack.c.l.b16 %v36
  %v108 = vpack.c.b16 %v107, %v106
  %vm110 = vcmask 130048
  %v112 = vsel %vm110, %v96, 0
  %v115 = vsel %vm110, %v97, 0
  %v118 = vsel %vm110, %v98, 0
  %v121 = vsel %vm110, %v99, 0
  %v124 = vsel %vm110, %v100, 0
  %v127 = vsel %vm110, %v101, 0
  %v130 = vsel %vm110, %v102, 0
  %v133 = vsel %vm110, %v103, 0
  %135 = vmatprep.subr.bf16.mxu0 0
  %136 = vmatpush1.bf16.msra.mxu0 0
  %137 = vmatprep.subr.bf16.mxu0 0
  %138 = vmatpush1.bf16.msra.mxu0 0
  %139 = vmatprep.subr.bf16.mxu0 0
  %140 = vmatpush1.bf16.msra.mxu0 0
  %141 = vmatprep.subr.bf16.mxu0 0
  %142 = vmatpush1.bf16.msra.mxu0 0
  %143 = vmatprep.subr.bf16.mxu0 0
  %144 = vmatpush1.bf16.msra.mxu0 0
  %145 = vmatprep.subr.bf16.mxu0 0
  %146 = vmatpush1.bf16.msra.mxu0 0
  %147 = vmatprep.subr.bf16.mxu0 0
  %148 = vmatpush1.bf16.msra.mxu0 0
  %149 = vmatprep.subr.bf16.mxu0 0
  %150 = vmatpush1.bf16.msra.mxu0 %v108
  %151 = vmatprep.subr.bf16.mxu0 0
  %152 = vmatpush2.bf16.msra.mxu0 0
  %153 = vmatprep.subr.bf16.mxu0 0
  %154 = vmatpush2.bf16.msra.mxu0 0
  %155 = vmatprep.subr.bf16.mxu0 0
  %156 = vmatpush2.bf16.msra.mxu0 0
  %157 = vmatprep.subr.bf16.mxu0 0
  %158 = vmatpush2.bf16.msra.mxu0 0
  %159 = vmatprep.subr.bf16.mxu0 0
  %160 = vmatpush2.bf16.msra.mxu0 0
  %161 = vmatprep.subr.bf16.mxu0 0
  %162 = vmatpush2.bf16.msra.mxu0 0
  %163 = vmatprep.subr.bf16.mxu0 0
  %164 = vmatpush2.bf16.msra.mxu0 0
  %165 = vmatprep.subr.bf16.mxu0 0
  %166 = vmatpush2.bf16.msra.mxu0 0
  %167 = vmatprep.mubr.bf16.mxu0 0
  %168 = vmatmul.mubr.bf16.gmra.mxu0 %v112
  %v169 = vpop.f32.mrf.mxu0
  %v170 = vadd.f32 %v62, %v169
  %v171 = vpop.f32.mrf.mxu0
  %v172 = vpop.f32.mrf.mxu0
  %v173 = vadd.f32 %v62, %v172
  %v174 = vpop.f32.mrf.mxu0
  %175 = vmatprep.mubr.bf16.mxu0 0
  %176 = vmatmul.mubr.bf16.gmra.mxu0 %v115
  %v177 = vpop.f32.mrf.mxu0
  %v178 = vadd.f32 %v62, %v177
  %v179 = vpop.f32.mrf.mxu0
  %v180 = vpop.f32.mrf.mxu0
  %v181 = vadd.f32 %v62, %v180
  %v182 = vpop.f32.mrf.mxu0
  %183 = vmatprep.mubr.bf16.mxu0 0
  %184 = vmatmul.mubr.bf16.gmra.mxu0 %v118
  %v185 = vpop.f32.mrf.mxu0
  %v186 = vadd.f32 %v62, %v185
  %v187 = vpop.f32.mrf.mxu0
  %v188 = vpop.f32.mrf.mxu0
  %v189 = vadd.f32 %v62, %v188
  %v190 = vpop.f32.mrf.mxu0
  %191 = vmatprep.mubr.bf16.mxu0 0
  %192 = vmatmul.mubr.bf16.gmra.mxu0 %v121
  %v193 = vpop.f32.mrf.mxu0
  %v194 = vadd.f32 %v62, %v193
  %v195 = vpop.f32.mrf.mxu0
  %v196 = vpop.f32.mrf.mxu0
  %v197 = vadd.f32 %v62, %v196
  %v198 = vpop.f32.mrf.mxu0
  %199 = vmatprep.mubr.bf16.mxu0 0
  %200 = vmatmul.mubr.bf16.gmra.mxu0 %v124
  %v201 = vpop.f32.mrf.mxu0
  %v202 = vadd.f32 %v62, %v201
  %v203 = vpop.f32.mrf.mxu0
  %v204 = vpop.f32.mrf.mxu0
  %v205 = vadd.f32 %v62, %v204
  %v206 = vpop.f32.mrf.mxu0
  %207 = vmatprep.mubr.bf16.mxu0 0
  %208 = vmatmul.mubr.bf16.gmra.mxu0 %v127
  %v209 = vpop.f32.mrf.mxu0
  %v210 = vadd.f32 %v62, %v209
  %v211 = vpop.f32.mrf.mxu0
  %v212 = vpop.f32.mrf.mxu0
  %v213 = vadd.f32 %v62, %v212
  %v214 = vpop.f32.mrf.mxu0
  %215 = vmatprep.mubr.bf16.mxu0 0
  %216 = vmatmul.mubr.bf16.gmra.mxu0 %v130
  %v217 = vpop.f32.mrf.mxu0
  %v218 = vadd.f32 %v62, %v217
  %v219 = vpop.f32.mrf.mxu0
  %v220 = vpop.f32.mrf.mxu0
  %v221 = vadd.f32 %v62, %v220
  %v222 = vpop.f32.mrf.mxu0
  %223 = vmatprep.mubr.bf16.mxu0 0
  %224 = vmatmul.mubr.bf16.gmra.mxu0 %v133
  %v225 = vpop.f32.mrf.mxu0
  %v226 = vadd.f32 %v62, %v225
  %v227 = vpop.f32.mrf.mxu0
  %v228 = vpop.f32.mrf.mxu0
  %v229 = vadd.f32 %v62, %v228
  %v230 = vpop.f32.mrf.mxu0
  %231 = vdwg.mxu0
  %v232 = vpack.c.bf16 %v173, %v170
  %v233 = vpack.c.bf16 %v181, %v178
  %v234 = vpack.c.bf16 %v189, %v186
  %v235 = vpack.c.bf16 %v197, %v194
  %v236 = vpack.c.bf16 %v205, %v202
  %v237 = vpack.c.bf16 %v213, %v210
  %v238 = vpack.c.bf16 %v221, %v218
  %v239 = vpack.c.bf16 %v229, %v226
  %v248 = vunpack.c.l.b16 %v232
  %v249 = vunpack.c.h.b16 %v232
  %v250 = vunpack.c.l.b16 %v233
  %v251 = vunpack.c.h.b16 %v233
  %v252 = vunpack.c.l.b16 %v234
  %v253 = vunpack.c.h.b16 %v234
  %v254 = vunpack.c.l.b16 %v235
  %v255 = vunpack.c.h.b16 %v235
  %v256 = vunpack.c.l.b16 %v236
  %v257 = vunpack.c.h.b16 %v236
  %v258 = vunpack.c.l.b16 %v237
  %v259 = vunpack.c.h.b16 %v237
  %v260 = vunpack.c.l.b16 %v238
  %v261 = vunpack.c.h.b16 %v238
  %v262 = vunpack.c.l.b16 %v239
  %v263 = vunpack.c.h.b16 %v239
  %v264 = vpack.c.b16 %v248, %v248
  %v265 = vpack.c.b16 %v249, %v249
  %v266 = vpack.c.b16 %v250, %v250
  %v267 = vpack.c.b16 %v251, %v251
  %v268 = vpack.c.b16 %v252, %v252
  %v269 = vpack.c.b16 %v253, %v253
  %v270 = vpack.c.b16 %v254, %v254
  %v271 = vpack.c.b16 %v255, %v255
  %v272 = vpack.c.b16 %v256, %v256
  %v273 = vpack.c.b16 %v257, %v257
  %v274 = vpack.c.b16 %v258, %v258
  %v275 = vpack.c.b16 %v259, %v259
  %v276 = vpack.c.b16 %v260, %v260
  %v277 = vpack.c.b16 %v261, %v261
  %v278 = vpack.c.b16 %v262, %v262
  %v279 = vpack.c.b16 %v263, %v263
  %296 = vst [vmem:[#allocation3] sm:$0xf] %v264
  %297 = vst [vmem:[#allocation3 + $0x4] sm:$0xf] %v265
  %298 = vst [vmem:[#allocation3 + $0x8] sm:$0xf] %v266
  %299 = vst [vmem:[#allocation3 + $0xc] sm:$0xf] %v267
  %300 = vst [vmem:[#allocation3 + $0x10] sm:$0xf] %v268
  %301 = vst [vmem:[#allocation3 + $0x14] sm:$0xf] %v269
  %302 = vst [vmem:[#allocation3 + $0x18] sm:$0xf] %v270
  %303 = vst [vmem:[#allocation3 + $0x1c] sm:$0xf] %v271
  %304 = vst [vmem:[#allocation3 + $0x20] sm:$0xf] %v272
  %305 = vst [vmem:[#allocation3 + $0x24] sm:$0xf] %v273
  %306 = vst [vmem:[#allocation3 + $0x28] sm:$0xf] %v274
  %307 = vst [vmem:[#allocation3 + $0x2c] sm:$0xf] %v275
  %308 = vst [vmem:[#allocation3 + $0x30] sm:$0xf] %v276
  %309 = vst [vmem:[#allocation3 + $0x34] sm:$0xf] %v277
  %310 = vst [vmem:[#allocation3 + $0x38] sm:$0xf] %v278
  %311 = vst [vmem:[#allocation3 + $0x3c] sm:$0xf] %v279
  %v312 = vld [vmem:[#allocation3] sm:$0xf]
  %v313 = vld [vmem:[#allocation3 + $0x4] sm:$0xf]
  %v314 = vunpack.c.l.bf16 %v312
  %v315 = vunpack.c.l.bf16 %v313
  %v320 = vunpack.c.l.b16 %v37
  %v321 = vunpack.c.l.b16 %v38
  %v322 = vunpack.c.l.b16 %v39
  %v323 = vunpack.c.l.b16 %v40
  %v324 = vpack.c.b16 %v321, %v320
  %v325 = vpack.c.b16 %v323, %v322
  %vm328 = vcmask 261120
  %v330 = vsel %vm328, 0, 0
  %332 = vmatprep.subr.bf16.mxu0 0
  %333 = vmatpush1.bf16.msra.mxu0 0
  %334 = vmatprep.subr.bf16.mxu0 0
  %335 = vmatpush1.bf16.msra.mxu0 0
  %336 = vmatprep.subr.bf16.mxu0 0
  %337 = vmatpush1.bf16.msra.mxu0 0
  %338 = vmatprep.subr.bf16.mxu0 0
  %339 = vmatpush1.bf16.msra.mxu0 0
  %340 = vmatprep.subr.bf16.mxu0 0
  %341 = vmatpush1.bf16.msra.mxu0 0
  %342 = vmatprep.subr.bf16.mxu0 0
  %343 = vmatpush1.bf16.msra.mxu0 0
  %344 = vmatprep.subr.bf16.mxu0 0
  %345 = vmatpush1.bf16.msra.mxu0 %v325
  %346 = vmatprep.subr.bf16.mxu0 0
  %347 = vmatpush1.bf16.msra.mxu0 %v324
  %348 = vmatprep.subr.bf16.mxu0 0
  %349 = vmatpush2.bf16.msra.mxu0 0
  %350 = vmatprep.subr.bf16.mxu0 0
  %351 = vmatpush2.bf16.msra.mxu0 0
  %352 = vmatprep.subr.bf16.mxu0 0
  %353 = vmatpush2.bf16.msra.mxu0 0
  %354 = vmatprep.subr.bf16.mxu0 0
  %355 = vmatpush2.bf16.msra.mxu0 0
  %356 = vmatprep.subr.bf16.mxu0 0
  %357 = vmatpush2.bf16.msra.mxu0 0
  %358 = vmatprep.subr.bf16.mxu0 0
  %359 = vmatpush2.bf16.msra.mxu0 0
  %360 = vmatprep.subr.bf16.mxu0 0
  %361 = vmatpush2.bf16.msra.mxu0 0
  %362 = vmatprep.subr.bf16.mxu0 0
  %363 = vmatpush2.bf16.msra.mxu0 0
  %364 = vmatprep.mubr.bf16.mxu0 0
  %365 = vmatmul.mubr.bf16.gmra.mxu0 %v330
  %v366 = vpop.f32.mrf.mxu0
  %v367 = vadd.f32 0.0, %v366
  %v368 = vpop.f32.mrf.mxu0
  %v369 = vpop.f32.mrf.mxu0
  %v370 = vadd.f32 0.0, %v369
  %v371 = vpop.f32.mrf.mxu0
  %372 = vdwg.mxu0
  %v373 = vadd.f32 %v314, %v367
  %v374 = vadd.f32 %v315, %v370
  %v375 = vxor.u32 %v373, 2147483648
  %v376 = vxor.u32 %v374, 2147483648
  %v377 = vmul.f32 %v375, 1.442695
  %v378 = vpow.pop %v377
  %v379 = vmul.f32 %v376, 1.442695
  %v380 = vpow.pop %v379
  %v381 = vadd.f32 %v378, 1.0
  %v382 = vadd.f32 %v380, 1.0
  %v383 = vrcp.pop %v381
  %v384 = vmul.f32 1.0, %v383
  %v385 = vrcp.pop %v382
  %v386 = vmul.f32 1.0, %v385
  %v387 = vtanh.pop %v373
  %v388 = vtanh.pop %v374
  %v389 = vmul.f32 %v384, 0.0
  %v390 = vmul.f32 %v386, 0.0
  %393 = vrot.lane.b32.xlu0 %v387, 64
  %v394 = vpop.permute.xlu0 %393
  %395 = vrot.lane.b32.xlu0 %v388, 64
  %v396 = vpop.permute.xlu0 %395
  %v399 = vmul.f32 %v384, %v394
  %v400 = vmul.f32 %v386, %v396
  %403 = vrot.lane.b32.xlu0 %v399, 32
  %v404 = vpop.permute.xlu0 %403
  %405 = vrot.lane.b32.xlu0 %v400, 32
  %v406 = vpop.permute.xlu0 %405
  %v409 = vadd.f32 %v389, %v404
  %v410 = vadd.f32 %v390, %v406
  %v411 = vtanh.pop %v409
  %v412 = vtanh.pop %v410
  %415 = vrot.lane.b32.xlu0 %v411, 64
  %v416 = vpop.permute.xlu0 %415
  %417 = vrot.lane.b32.xlu0 %v412, 64
  %v418 = vpop.permute.xlu0 %417
  %v421 = vmul.f32 %v384, %v416
  %v422 = vmul.f32 %v386, %v418
  %v423 = vpack.c.bf16 %v422, %v421
  %v425 = vunpack.c.l.b16 %v423
  %v426 = vunpack.c.h.b16 %v423
  %v427 = vpack.c.b16 %v425, %v425
  %v428 = vpack.c.b16 %v426, %v426
  %429 = vrot.lane.b32.xlu0 %v427, 32
  %v430 = vpop.permute.xlu0 %429
  %431 = vrot.lane.b32.xlu0 %v428, 32
  %v432 = vpop.permute.xlu0 %431
  %vm435 = vcmask 257024
  %436 = vst.msk [vmem:[#allocation2] sm:$0xf] %vm435, %v430
  %437 = vst.msk [vmem:[#allocation2 + $0x4] sm:$0xf] %vm435, %v432
  %s438 = scalar_lea.vmem [#allocation3], 8
  %v439 = vld [vmem:[%s438] sm:$0xf]
  %v440 = vld [vmem:[%s438 + $0x4] sm:$0xf]
  %v441 = vunpack.c.l.bf16 %v439
  %v442 = vunpack.c.l.bf16 %v440
  %443 = vrot.lane.b32.xlu0 %v423, 32
  %v444 = vpop.permute.xlu0 %443
  %v446 = vsel %vm328, %v444, 0
  %448 = vmatprep.subr.bf16.mxu0 0
  %449 = vmatpush1.bf16.msra.mxu0 0
  %450 = vmatprep.subr.bf16.mxu0 0
  %451 = vmatpush1.bf16.msra.mxu0 0
  %452 = vmatprep.subr.bf16.mxu0 0
  %453 = vmatpush1.bf16.msra.mxu0 0
  %454 = vmatprep.subr.bf16.mxu0 0
  %455 = vmatpush1.bf16.msra.mxu0 0
  %456 = vmatprep.subr.bf16.mxu0 0
  %457 = vmatpush1.bf16.msra.mxu0 0
  %458 = vmatprep.subr.bf16.mxu0 0
  %459 = vmatpush1.bf16.msra.mxu0 0
  %460 = vmatprep.subr.bf16.mxu0 0
  %461 = vmatpush1.bf16.msra.mxu0 %v325
  %462 = vmatprep.subr.bf16.mxu0 0
  %463 = vmatpush1.bf16.msra.mxu0 %v324
  %464 = vmatprep.subr.bf16.mxu0 0
  %465 = vmatpush2.bf16.msra.mxu0 0
  %466 = vmatprep.subr.bf16.mxu0 0
  %467 = vmatpush2.bf16.msra.mxu0 0
  %468 = vmatprep.subr.bf16.mxu0 0
  %469 = vmatpush2.bf16.msra.mxu0 0
  %470 = vmatprep.subr.bf16.mxu0 0
  %471 = vmatpush2.bf16.msra.mxu0 0
  %472 = vmatprep.subr.bf16.mxu0 0
  %473 = vmatpush2.bf16.msra.mxu0 0
  %474 = vmatprep.subr.bf16.mxu0 0
  %475 = vmatpush2.bf16.msra.mxu0 0
  %476 = vmatprep.subr.bf16.mxu0 0
  %477 = vmatpush2.bf16.msra.mxu0 0
  %478 = vmatprep.subr.bf16.mxu0 0
  %479 = vmatpush2.bf16.msra.mxu0 0
  %480 = vmatprep.mubr.bf16.mxu0 0
  %481 = vmatmul.mubr.bf16.gmra.mxu0 %v446
  %v482 = vpop.f32.mrf.mxu0
  %v483 = vadd.f32 0.0, %v482
  %v484 = vpop.f32.mrf.mxu0
  %v485 = vpop.f32.mrf.mxu0
  %v486 = vadd.f32 0.0, %v485
  %v487 = vpop.f32.mrf.mxu0
  %488 = vdwg.mxu0
  %v489 = vadd.f32 %v441, %v483
  %v490 = vadd.f32 %v442, %v486
  %v491 = vxor.u32 %v489, 2147483648
  %v492 = vxor.u32 %v490, 2147483648
  %v493 = vmul.f32 %v491, 1.442695
  %v494 = vpow.pop %v493
  %v495 = vmul.f32 %v492, 1.442695
  %v496 = vpow.pop %v495
  %v497 = vadd.f32 %v494, 1.0
  %v498 = vadd.f32 %v496, 1.0
  %v499 = vrcp.pop %v497
  %v500 = vmul.f32 1.0, %v499
  %v501 = vrcp.pop %v498
  %v502 = vmul.f32 1.0, %v501
  %v503 = vtanh.pop %v489
  %v504 = vtanh.pop %v490
  %v505 = vmul.f32 %v500, %v409
  %v506 = vmul.f32 %v502, %v410
  %509 = vrot.lane.b32.xlu0 %v503, 64
  %v510 = vpop.permute.xlu0 %509
  %511 = vrot.lane.b32.xlu0 %v504, 64
  %v512 = vpop.permute.xlu0 %511
  %v515 = vmul.f32 %v500, %v510
  %v516 = vmul.f32 %v502, %v512
  %519 = vrot.lane.b32.xlu0 %v515, 32
  %v520 = vpop.permute.xlu0 %519
  %521 = vrot.lane.b32.xlu0 %v516, 32
  %v522 = vpop.permute.xlu0 %521
  %v525 = vadd.f32 %v505, %v520
  %v526 = vadd.f32 %v506, %v522
  %v527 = vtanh.pop %v525
  %v528 = vtanh.pop %v526
  %531 = vrot.lane.b32.xlu0 %v527, 64
  %v532 = vpop.permute.xlu0 %531
  %533 = vrot.lane.b32.xlu0 %v528, 64
  %v534 = vpop.permute.xlu0 %533
  %v537 = vmul.f32 %v500, %v532
  %v538 = vmul.f32 %v502, %v534
  %v539 = vpack.c.bf16 %v538, %v537
  %v541 = vunpack.c.l.b16 %v539
  %v542 = vunpack.c.h.b16 %v539
  %v543 = vpack.c.b16 %v541, %v541
  %v544 = vpack.c.b16 %v542, %v542
  %545 = vrot.lane.b32.xlu0 %v543, 32
  %v546 = vpop.permute.xlu0 %545
  %547 = vrot.lane.b32.xlu0 %v544, 32
  %v548 = vpop.permute.xlu0 %547
  %s551 = scalar_lea.vmem [#allocation2], 8
  %552 = vst.msk [vmem:[%s551] sm:$0xf] %vm435, %v546
  %553 = vst.msk [vmem:[%s551 + $0x4] sm:$0xf] %vm435, %v548
  %s554 = scalar_lea.vmem [#allocation3], 16
  %v555 = vld [vmem:[%s554] sm:$0xf]
  %v556 = vld [vmem:[%s554 + $0x4] sm:$0xf]
  %v557 = vunpack.c.l.bf16 %v555
  %v558 = vunpack.c.l.bf16 %v556
  %559 = vrot.lane.b32.xlu0 %v539, 32
  %v560 = vpop.permute.xlu0 %559
  %v562 = vsel %vm328, %v560, 0
  %564 = vmatprep.subr.bf16.mxu0 0
  %565 = vmatpush1.bf16.msra.mxu0 0
  %566 = vmatprep.subr.bf16.mxu0 0
  %567 = vmatpush1.bf16.msra.mxu0 0
  %568 = vmatprep.subr.bf16.mxu0 0
  %569 = vmatpush1.bf16.msra.mxu0 0
  %570 = vmatprep.subr.bf16.mxu0 0
  %571 = vmatpush1.bf16.msra.mxu0 0
  %572 = vmatprep.subr.bf16.mxu0 0
  %573 = vmatpush1.bf16.msra.mxu0 0
  %574 = vmatprep.subr.bf16.mxu0 0
  %575 = vmatpush1.bf16.msra.mxu0 0
  %576 = vmatprep.subr.bf16.mxu0 0
  %577 = vmatpush1.bf16.msra.mxu0 %v325
  %578 = vmatprep.subr.bf16.mxu0 0
  %579 = vmatpush1.bf16.msra.mxu0 %v324
  %580 = vmatprep.subr.bf16.mxu0 0
  %581 = vmatpush2.bf16.msra.mxu0 0
  %582 = vmatprep.subr.bf16.mxu0 0
  %583 = vmatpush2.bf16.msra.mxu0 0
  %584 = vmatprep.subr.bf16.mxu0 0
  %585 = vmatpush2.bf16.msra.mxu0 0
  %586 = vmatprep.subr.bf16.mxu0 0
  %587 = vmatpush2.bf16.msra.mxu0 0
  %588 = vmatprep.subr.bf16.mxu0 0
  %589 = vmatpush2.bf16.msra.mxu0 0
  %590 = vmatprep.subr.bf16.mxu0 0
  %591 = vmatpush2.bf16.msra.mxu0 0
  %592 = vmatprep.subr.bf16.mxu0 0
  %593 = vmatpush2.bf16.msra.mxu0 0
  %594 = vmatprep.subr.bf16.mxu0 0
  %595 = vmatpush2.bf16.msra.mxu0 0
  %596 = vmatprep.mubr.bf16.mxu0 0
  %597 = vmatmul.mubr.bf16.gmra.mxu0 %v562
  %v598 = vpop.f32.mrf.mxu0
  %v599 = vadd.f32 0.0, %v598
  %v600 = vpop.f32.mrf.mxu0
  %v601 = vpop.f32.mrf.mxu0
  %v602 = vadd.f32 0.0, %v601
  %v603 = vpop.f32.mrf.mxu0
  %604 = vdwg.mxu0
  %v605 = vadd.f32 %v557, %v599
  %v606 = vadd.f32 %v558, %v602
  %v607 = vxor.u32 %v605, 2147483648
  %v608 = vxor.u32 %v606, 2147483648
  %v609 = vmul.f32 %v607, 1.442695
  %v610 = vpow.pop %v609
  %v611 = vmul.f32 %v608, 1.442695
  %v612 = vpow.pop %v611
  %v613 = vadd.f32 %v610, 1.0
  %v614 = vadd.f32 %v612, 1.0
  %v615 = vrcp.pop %v613
  %v616 = vmul.f32 1.0, %v615
  %v617 = vrcp.pop %v614
  %v618 = vmul.f32 1.0, %v617
  %v619 = vtanh.pop %v605
  %v620 = vtanh.pop %v606
  %v621 = vmul.f32 %v616, %v525
  %v622 = vmul.f32 %v618, %v526
  %625 = vrot.lane.b32.xlu0 %v619, 64
  %v626 = vpop.permute.xlu0 %625
  %627 = vrot.lane.b32.xlu0 %v620, 64
  %v628 = vpop.permute.xlu0 %627
  %v631 = vmul.f32 %v616, %v626
  %v632 = vmul.f32 %v618, %v628
  %635 = vrot.lane.b32.xlu0 %v631, 32
  %v636 = vpop.permute.xlu0 %635
  %637 = vrot.lane.b32.xlu0 %v632, 32
  %v638 = vpop.permute.xlu0 %637
  %v641 = vadd.f32 %v621, %v636
  %v642 = vadd.f32 %v622, %v638
  %v643 = vtanh.pop %v641
  %v644 = vtanh.pop %v642
  %647 = vrot.lane.b32.xlu0 %v643, 64
  %v648 = vpop.permute.xlu0 %647
  %649 = vrot.lane.b32.xlu0 %v644, 64
  %v650 = vpop.permute.xlu0 %649
  %v653 = vmul.f32 %v616, %v648
  %v654 = vmul.f32 %v618, %v650
  %v655 = vpack.c.bf16 %v654, %v653
  %v657 = vunpack.c.l.b16 %v655
  %v658 = vunpack.c.h.b16 %v655
  %v659 = vpack.c.b16 %v657, %v657
  %v660 = vpack.c.b16 %v658, %v658
  %661 = vrot.lane.b32.xlu0 %v659, 32
  %v662 = vpop.permute.xlu0 %661
  %663 = vrot.lane.b32.xlu0 %v660, 32
  %v664 = vpop.permute.xlu0 %663
  %s667 = scalar_lea.vmem [#allocation2], 16
  %668 = vst.msk [vmem:[%s667] sm:$0xf] %vm435, %v662
  %669 = vst.msk [vmem:[%s667 + $0x4] sm:$0xf] %vm435, %v664
  %s670 = scalar_lea.vmem [#allocation3], 24
  %v671 = vld [vmem:[%s670] sm:$0xf]
  %v672 = vld [vmem:[%s670 + $0x4] sm:$0xf]
  %v673 = vunpack.c.l.bf16 %v671
  %v674 = vunpack.c.l.bf16 %v672
  %675 = vrot.lane.b32.xlu0 %v655, 32
  %v676 = vpop.permute.xlu0 %675
  %v678 = vsel %vm328, %v676, 0
  %680 = vmatprep.subr.bf16.mxu0 0
  %681 = vmatpush1.bf16.msra.mxu0 0
  %682 = vmatprep.subr.bf16.mxu0 0
  %683 = vmatpush1.bf16.msra.mxu0 0
  %684 = vmatprep.subr.bf16.mxu0 0
  %685 = vmatpush1.bf16.msra.mxu0 0
  %686 = vmatprep.subr.bf16.mxu0 0
  %687 = vmatpush1.bf16.msra.mxu0 0
  %688 = vmatprep.subr.bf16.mxu0 0
  %689 = vmatpush1.bf16.msra.mxu0 0
  %690 = vmatprep.subr.bf16.mxu0 0
  %691 = vmatpush1.bf16.msra.mxu0 0
  %692 = vmatprep.subr.bf16.mxu0 0
  %693 = vmatpush1.bf16.msra.mxu0 %v325
  %694 = vmatprep.subr.bf16.mxu0 0
  %695 = vmatpush1.bf16.msra.mxu0 %v324
  %696 = vmatprep.subr.bf16.mxu0 0
  %697 = vmatpush2.bf16.msra.mxu0 0
  %698 = vmatprep.subr.bf16.mxu0 0
  %699 = vmatpush2.bf16.msra.mxu0 0
  %700 = vmatprep.subr.bf16.mxu0 0
  %701 = vmatpush2.bf16.msra.mxu0 0
  %702 = vmatprep.subr.bf16.mxu0 0
  %703 = vmatpush2.bf16.msra.mxu0 0
  %704 = vmatprep.subr.bf16.mxu0 0
  %705 = vmatpush2.bf16.msra.mxu0 0
  %706 = vmatprep.subr.bf16.mxu0 0
  %707 = vmatpush2.bf16.msra.mxu0 0
  %708 = vmatprep.subr.bf16.mxu0 0
  %709 = vmatpush2.bf16.msra.mxu0 0
  %710 = vmatprep.subr.bf16.mxu0 0
  %711 = vmatpush2.bf16.msra.mxu0 0
  %712 = vmatprep.mubr.bf16.mxu0 0
  %713 = vmatmul.mubr.bf16.gmra.mxu0 %v678
  %v714 = vpop.f32.mrf.mxu0
  %v715 = vadd.f32 0.0, %v714
  %v716 = vpop.f32.mrf.mxu0
  %v717 = vpop.f32.mrf.mxu0
  %v718 = vadd.f32 0.0, %v717
  %v719 = vpop.f32.mrf.mxu0
  %720 = vdwg.mxu0
  %v721 = vadd.f32 %v673, %v715
  %v722 = vadd.f32 %v674, %v718
  %v723 = vxor.u32 %v721, 2147483648
  %v724 = vxor.u32 %v722, 2147483648
  %v725 = vmul.f32 %v723, 1.442695
  %v726 = vpow.pop %v725
  %v727 = vmul.f32 %v724, 1.442695
  %v728 = vpow.pop %v727
  %v729 = vadd.f32 %v726, 1.0
  %v730 = vadd.f32 %v728, 1.0
  %v731 = vrcp.pop %v729
  %v732 = vmul.f32 1.0, %v731
  %v733 = vrcp.pop %v730
  %v734 = vmul.f32 1.0, %v733
  %v735 = vtanh.pop %v721
  %v736 = vtanh.pop %v722
  %v737 = vmul.f32 %v732, %v641
  %v738 = vmul.f32 %v734, %v642
  %741 = vrot.lane.b32.xlu0 %v735, 64
  %v742 = vpop.permute.xlu0 %741
  %743 = vrot.lane.b32.xlu0 %v736, 64
  %v744 = vpop.permute.xlu0 %743
  %v747 = vmul.f32 %v732, %v742
  %v748 = vmul.f32 %v734, %v744
  %751 = vrot.lane.b32.xlu0 %v747, 32
  %v752 = vpop.permute.xlu0 %751
  %753 = vrot.lane.b32.xlu0 %v748, 32
  %v754 = vpop.permute.xlu0 %753
  %v757 = vadd.f32 %v737, %v752
  %v758 = vadd.f32 %v738, %v754
  %v759 = vtanh.pop %v757
  %v760 = vtanh.pop %v758
  %763 = vrot.lane.b32.xlu0 %v759, 64
  %v764 = vpop.permute.xlu0 %763
  %765 = vrot.lane.b32.xlu0 %v760, 64
  %v766 = vpop.permute.xlu0 %765
  %v769 = vmul.f32 %v732, %v764
  %v770 = vmul.f32 %v734, %v766
  %v771 = vpack.c.bf16 %v770, %v769
  %v773 = vunpack.c.l.b16 %v771
  %v774 = vunpack.c.h.b16 %v771
  %v775 = vpack.c.b16 %v773, %v773
  %v776 = vpack.c.b16 %v774, %v774
  %777 = vrot.lane.b32.xlu0 %v775, 32
  %v778 = vpop.permute.xlu0 %777
  %779 = vrot.lane.b32.xlu0 %v776, 32
  %v780 = vpop.permute.xlu0 %779
  %s783 = scalar_lea.vmem [#allocation2], 24
  %784 = vst.msk [vmem:[%s783] sm:$0xf] %vm435, %v778
  %785 = vst.msk [vmem:[%s783 + $0x4] sm:$0xf] %vm435, %v780
  %s786 = scalar_lea.vmem [#allocation3], 32
  %v787 = vld [vmem:[%s786] sm:$0xf]
  %v788 = vld [vmem:[%s786 + $0x4] sm:$0xf]
  %v789 = vunpack.c.l.bf16 %v787
  %v790 = vunpack.c.l.bf16 %v788
  %791 = vrot.lane.b32.xlu0 %v771, 32
  %v792 = vpop.permute.xlu0 %791
  %v794 = vsel %vm328, %v792, 0
  %796 = vmatprep.subr.bf16.mxu0 0
  %797 = vmatpush1.bf16.msra.mxu0 0
  %798 = vmatprep.subr.bf16.mxu0 0
  %799 = vmatpush1.bf16.msra.mxu0 0
  %800 = vmatprep.subr.bf16.mxu0 0
  %801 = vmatpush1.bf16.msra.mxu0 0
  %802 = vmatprep.subr.bf16.mxu0 0
  %803 = vmatpush1.bf16.msra.mxu0 0
  %804 = vmatprep.subr.bf16.mxu0 0
  %805 = vmatpush1.bf16.msra.mxu0 0
  %806 = vmatprep.subr.bf16.mxu0 0
  %807 = vmatpush1.bf16.msra.mxu0 0
  %808 = vmatprep.subr.bf16.mxu0 0
  %809 = vmatpush1.bf16.msra.mxu0 %v325
  %810 = vmatprep.subr.bf16.mxu0 0
  %811 = vmatpush1.bf16.msra.mxu0 %v324
  %812 = vmatprep.subr.bf16.mxu0 0
  %813 = vmatpush2.bf16.msra.mxu0 0
  %814 = vmatprep.subr.bf16.mxu0 0
  %815 = vmatpush2.bf16.msra.mxu0 0
  %816 = vmatprep.subr.bf16.mxu0 0
  %817 = vmatpush2.bf16.msra.mxu0 0
  %818 = vmatprep.subr.bf16.mxu0 0
  %819 = vmatpush2.bf16.msra.mxu0 0
  %820 = vmatprep.subr.bf16.mxu0 0
  %821 = vmatpush2.bf16.msra.mxu0 0
  %822 = vmatprep.subr.bf16.mxu0 0
  %823 = vmatpush2.bf16.msra.mxu0 0
  %824 = vmatprep.subr.bf16.mxu0 0
  %825 = vmatpush2.bf16.msra.mxu0 0
  %826 = vmatprep.subr.bf16.mxu0 0
  %827 = vmatpush2.bf16.msra.mxu0 0
  %828 = vmatprep.mubr.bf16.mxu0 0
  %829 = vmatmul.mubr.bf16.gmra.mxu0 %v794
  %v830 = vpop.f32.mrf.mxu0
  %v831 = vadd.f32 0.0, %v830
  %v832 = vpop.f32.mrf.mxu0
  %v833 = vpop.f32.mrf.mxu0
  %v834 = vadd.f32 0.0, %v833
  %v835 = vpop.f32.mrf.mxu0
  %836 = vdwg.mxu0
  %v837 = vadd.f32 %v789, %v831
  %v838 = vadd.f32 %v790, %v834
  %v839 = vxor.u32 %v837, 2147483648
  %v840 = vxor.u32 %v838, 2147483648
  %v841 = vmul.f32 %v839, 1.442695
  %v842 = vpow.pop %v841
  %v843 = vmul.f32 %v840, 1.442695
  %v844 = vpow.pop %v843
  %v845 = vadd.f32 %v842, 1.0
  %v846 = vadd.f32 %v844, 1.0
  %v847 = vrcp.pop %v845
  %v848 = vmul.f32 1.0, %v847
  %v849 = vrcp.pop %v846
  %v850 = vmul.f32 1.0, %v849
  %v851 = vtanh.pop %v837
  %v852 = vtanh.pop %v838
  %v853 = vmul.f32 %v848, %v757
  %v854 = vmul.f32 %v850, %v758
  %857 = vrot.lane.b32.xlu0 %v851, 64
  %v858 = vpop.permute.xlu0 %857
  %859 = vrot.lane.b32.xlu0 %v852, 64
  %v860 = vpop.permute.xlu0 %859
  %v863 = vmul.f32 %v848, %v858
  %v864 = vmul.f32 %v850, %v860
  %867 = vrot.lane.b32.xlu0 %v863, 32
  %v868 = vpop.permute.xlu0 %867
  %869 = vrot.lane.b32.xlu0 %v864, 32
  %v870 = vpop.permute.xlu0 %869
  %v873 = vadd.f32 %v853, %v868
  %v874 = vadd.f32 %v854, %v870
  %v875 = vtanh.pop %v873
  %v876 = vtanh.pop %v874
  %879 = vrot.lane.b32.xlu0 %v875, 64
  %v880 = vpop.permute.xlu0 %879
  %881 = vrot.lane.b32.xlu0 %v876, 64
  %v882 = vpop.permute.xlu0 %881
  %v885 = vmul.f32 %v848, %v880
  %v886 = vmul.f32 %v850, %v882
  %v887 = vpack.c.bf16 %v886, %v885
  %v889 = vunpack.c.l.b16 %v887
  %v890 = vunpack.c.h.b16 %v887
  %v891 = vpack.c.b16 %v889, %v889
  %v892 = vpack.c.b16 %v890, %v890
  %893 = vrot.lane.b32.xlu0 %v891, 32
  %v894 = vpop.permute.xlu0 %893
  %895 = vrot.lane.b32.xlu0 %v892, 32
  %v896 = vpop.permute.xlu0 %895
  %s899 = scalar_lea.vmem [#allocation2], 32
  %900 = vst.msk [vmem:[%s899] sm:$0xf] %vm435, %v894
  %901 = vst.msk [vmem:[%s899 + $0x4] sm:$0xf] %vm435, %v896
  %s902 = scalar_lea.vmem [#allocation3], 40
  %v903 = vld [vmem:[%s902] sm:$0xf]
  %v904 = vld [vmem:[%s902 + $0x4] sm:$0xf]
  %v905 = vunpack.c.l.bf16 %v903
  %v906 = vunpack.c.l.bf16 %v904
  %907 = vrot.lane.b32.xlu0 %v887, 32
  %v908 = vpop.permute.xlu0 %907
  %v910 = vsel %vm328, %v908, 0
  %912 = vmatprep.subr.bf16.mxu0 0
  %913 = vmatpush1.bf16.msra.mxu0 0
  %914 = vmatprep.subr.bf16.mxu0 0
  %915 = vmatpush1.bf16.msra.mxu0 0
  %916 = vmatprep.subr.bf16.mxu0 0
  %917 = vmatpush1.bf16.msra.mxu0 0
  %918 = vmatprep.subr.bf16.mxu0 0
  %919 = vmatpush1.bf16.msra.mxu0 0
  %920 = vmatprep.subr.bf16.mxu0 0
  %921 = vmatpush1.bf16.msra.mxu0 0
  %922 = vmatprep.subr.bf16.mxu0 0
  %923 = vmatpush1.bf16.msra.mxu0 0
  %924 = vmatprep.subr.bf16.mxu0 0
  %925 = vmatpush1.bf16.msra.mxu0 %v325
  %926 = vmatprep.subr.bf16.mxu0 0
  %927 = vmatpush1.bf16.msra.mxu0 %v324
  %928 = vmatprep.subr.bf16.mxu0 0
  %929 = vmatpush2.bf16.msra.mxu0 0
  %930 = vmatprep.subr.bf16.mxu0 0
  %931 = vmatpush2.bf16.msra.mxu0 0
  %932 = vmatprep.subr.bf16.mxu0 0
  %933 = vmatpush2.bf16.msra.mxu0 0
  %934 = vmatprep.subr.bf16.mxu0 0
  %935 = vmatpush2.bf16.msra.mxu0 0
  %936 = vmatprep.subr.bf16.mxu0 0
  %937 = vmatpush2.bf16.msra.mxu0 0
  %938 = vmatprep.subr.bf16.mxu0 0
  %939 = vmatpush2.bf16.msra.mxu0 0
  %940 = vmatprep.subr.bf16.mxu0 0
  %941 = vmatpush2.bf16.msra.mxu0 0
  %942 = vmatprep.subr.bf16.mxu0 0
  %943 = vmatpush2.bf16.msra.mxu0 0
  %944 = vmatprep.mubr.bf16.mxu0 0
  %945 = vmatmul.mubr.bf16.gmra.mxu0 %v910
  %v946 = vpop.f32.mrf.mxu0
  %v947 = vadd.f32 0.0, %v946
  %v948 = vpop.f32.mrf.mxu0
  %v949 = vpop.f32.mrf.mxu0
  %v950 = vadd.f32 0.0, %v949
  %v951 = vpop.f32.mrf.mxu0
  %952 = vdwg.mxu0
  %v953 = vadd.f32 %v905, %v947
  %v954 = vadd.f32 %v906, %v950
  %v955 = vxor.u32 %v953, 2147483648
  %v956 = vxor.u32 %v954, 2147483648
  %v957 = vmul.f32 %v955, 1.442695
  %v958 = vpow.pop %v957
  %v959 = vmul.f32 %v956, 1.442695
  %v960 = vpow.pop %v959
  %v961 = vadd.f32 %v958, 1.0
  %v962 = vadd.f32 %v960, 1.0
  %v963 = vrcp.pop %v961
  %v964 = vmul.f32 1.0, %v963
  %v965 = vrcp.pop %v962
  %v966 = vmul.f32 1.0, %v965
  %v967 = vtanh.pop %v953
  %v968 = vtanh.pop %v954
  %v969 = vmul.f32 %v964, %v873
  %v970 = vmul.f32 %v966, %v874
  %973 = vrot.lane.b32.xlu0 %v967, 64
  %v974 = vpop.permute.xlu0 %973
  %975 = vrot.lane.b32.xlu0 %v968, 64
  %v976 = vpop.permute.xlu0 %975
  %v979 = vmul.f32 %v964, %v974
  %v980 = vmul.f32 %v966, %v976
  %983 = vrot.lane.b32.xlu0 %v979, 32
  %v984 = vpop.permute.xlu0 %983
  %985 = vrot.lane.b32.xlu0 %v980, 32
  %v986 = vpop.permute.xlu0 %985
  %v989 = vadd.f32 %v969, %v984
  %v990 = vadd.f32 %v970, %v986
  %v991 = vtanh.pop %v989
  %v992 = vtanh.pop %v990
  %995 = vrot.lane.b32.xlu0 %v991, 64
  %v996 = vpop.permute.xlu0 %995
  %997 = vrot.lane.b32.xlu0 %v992, 64
  %v998 = vpop.permute.xlu0 %997
  %v1001 = vmul.f32 %v964, %v996
  %v1002 = vmul.f32 %v966, %v998
  %v1003 = vpack.c.bf16 %v1002, %v1001
  %v1005 = vunpack.c.l.b16 %v1003
  %v1006 = vunpack.c.h.b16 %v1003
  %v1007 = vpack.c.b16 %v1005, %v1005
  %v1008 = vpack.c.b16 %v1006, %v1006
  %1009 = vrot.lane.b32.xlu0 %v1007, 32
  %v1010 = vpop.permute.xlu0 %1009
  %1011 = vrot.lane.b32.xlu0 %v1008, 32
  %v1012 = vpop.permute.xlu0 %1011
  %s1015 = scalar_lea.vmem [#allocation2], 40
  %1016 = vst.msk [vmem:[%s1015] sm:$0xf] %vm435, %v1010
  %1017 = vst.msk [vmem:[%s1015 + $0x4] sm:$0xf] %vm435, %v1012
  %s1018 = scalar_lea.vmem [#allocation3], 48
  %v1019 = vld [vmem:[%s1018] sm:$0xf]
  %v1020 = vld [vmem:[%s1018 + $0x4] sm:$0xf]
  %v1021 = vunpack.c.l.bf16 %v1019
  %v1022 = vunpack.c.l.bf16 %v1020
  %1023 = vrot.lane.b32.xlu0 %v1003, 32
  %v1024 = vpop.permute.xlu0 %1023
  %v1026 = vsel %vm328, %v1024, 0
  %1028 = vmatprep.subr.bf16.mxu0 0
  %1029 = vmatpush1.bf16.msra.mxu0 0
  %1030 = vmatprep.subr.bf16.mxu0 0
  %1031 = vmatpush1.bf16.msra.mxu0 0
  %1032 = vmatprep.subr.bf16.mxu0 0
  %1033 = vmatpush1.bf16.msra.mxu0 0
  %1034 = vmatprep.subr.bf16.mxu0 0
  %1035 = vmatpush1.bf16.msra.mxu0 0
  %1036 = vmatprep.subr.bf16.mxu0 0
  %1037 = vmatpush1.bf16.msra.mxu0 0
  %1038 = vmatprep.subr.bf16.mxu0 0
  %1039 = vmatpush1.bf16.msra.mxu0 0
  %1040 = vmatprep.subr.bf16.mxu0 0
  %1041 = vmatpush1.bf16.msra.mxu0 %v325
  %1042 = vmatprep.subr.bf16.mxu0 0
  %1043 = vmatpush1.bf16.msra.mxu0 %v324
  %1044 = vmatprep.subr.bf16.mxu0 0
  %1045 = vmatpush2.bf16.msra.mxu0 0
  %1046 = vmatprep.subr.bf16.mxu0 0
  %1047 = vmatpush2.bf16.msra.mxu0 0
  %1048 = vmatprep.subr.bf16.mxu0 0
  %1049 = vmatpush2.bf16.msra.mxu0 0
  %1050 = vmatprep.subr.bf16.mxu0 0
  %1051 = vmatpush2.bf16.msra.mxu0 0
  %1052 = vmatprep.subr.bf16.mxu0 0
  %1053 = vmatpush2.bf16.msra.mxu0 0
  %1054 = vmatprep.subr.bf16.mxu0 0
  %1055 = vmatpush2.bf16.msra.mxu0 0
  %1056 = vmatprep.subr.bf16.mxu0 0
  %1057 = vmatpush2.bf16.msra.mxu0 0
  %1058 = vmatprep.subr.bf16.mxu0 0
  %1059 = vmatpush2.bf16.msra.mxu0 0
  %1060 = vmatprep.mubr.bf16.mxu0 0
  %1061 = vmatmul.mubr.bf16.gmra.mxu0 %v1026
  %v1062 = vpop.f32.mrf.mxu0
  %v1063 = vadd.f32 0.0, %v1062
  %v1064 = vpop.f32.mrf.mxu0
  %v1065 = vpop.f32.mrf.mxu0
  %v1066 = vadd.f32 0.0, %v1065
  %v1067 = vpop.f32.mrf.mxu0
  %1068 = vdwg.mxu0
  %v1069 = vadd.f32 %v1021, %v1063
  %v1070 = vadd.f32 %v1022, %v1066
  %v1071 = vxor.u32 %v1069, 2147483648
  %v1072 = vxor.u32 %v1070, 2147483648
  %v1073 = vmul.f32 %v1071, 1.442695
  %v1074 = vpow.pop %v1073
  %v1075 = vmul.f32 %v1072, 1.442695
  %v1076 = vpow.pop %v1075
  %v1077 = vadd.f32 %v1074, 1.0
  %v1078 = vadd.f32 %v1076, 1.0
  %v1079 = vrcp.pop %v1077
  %v1080 = vmul.f32 1.0, %v1079
  %v1081 = vrcp.pop %v1078
  %v1082 = vmul.f32 1.0, %v1081
  %v1083 = vtanh.pop %v1069
  %v1084 = vtanh.pop %v1070
  %v1085 = vmul.f32 %v1080, %v989
  %v1086 = vmul.f32 %v1082, %v990
  %1089 = vrot.lane.b32.xlu0 %v1083, 64
  %v1090 = vpop.permute.xlu0 %1089
  %1091 = vrot.lane.b32.xlu0 %v1084, 64
  %v1092 = vpop.permute.xlu0 %1091
  %v1095 = vmul.f32 %v1080, %v1090
  %v1096 = vmul.f32 %v1082, %v1092
  %1099 = vrot.lane.b32.xlu0 %v1095, 32
  %v1100 = vpop.permute.xlu0 %1099
  %1101 = vrot.lane.b32.xlu0 %v1096, 32
  %v1102 = vpop.permute.xlu0 %1101
  %v1105 = vadd.f32 %v1085, %v1100
  %v1106 = vadd.f32 %v1086, %v1102
  %v1107 = vtanh.pop %v1105
  %v1108 = vtanh.pop %v1106
  %1111 = vrot.lane.b32.xlu0 %v1107, 64
  %v1112 = vpop.permute.xlu0 %1111
  %1113 = vrot.lane.b32.xlu0 %v1108, 64
  %v1114 = vpop.permute.xlu0 %1113
  %v1117 = vmul.f32 %v1080, %v1112
  %v1118 = vmul.f32 %v1082, %v1114
  %v1119 = vpack.c.bf16 %v1118, %v1117
  %v1121 = vunpack.c.l.b16 %v1119
  %v1122 = vunpack.c.h.b16 %v1119
  %v1123 = vpack.c.b16 %v1121, %v1121
  %v1124 = vpack.c.b16 %v1122, %v1122
  %1125 = vrot.lane.b32.xlu0 %v1123, 32
  %v1126 = vpop.permute.xlu0 %1125
  %1127 = vrot.lane.b32.xlu0 %v1124, 32
  %v1128 = vpop.permute.xlu0 %1127
  %s1131 = scalar_lea.vmem [#allocation2], 48
  %1132 = vst.msk [vmem:[%s1131] sm:$0xf] %vm435, %v1126
  %1133 = vst.msk [vmem:[%s1131 + $0x4] sm:$0xf] %vm435, %v1128
  %s1134 = scalar_lea.vmem [#allocation3], 56
  %v1135 = vld [vmem:[%s1134] sm:$0xf]
  %v1136 = vld [vmem:[%s1134 + $0x4] sm:$0xf]
  %v1137 = vunpack.c.l.bf16 %v1135
  %v1138 = vunpack.c.l.bf16 %v1136
  %1139 = vrot.lane.b32.xlu0 %v1119, 32
  %v1140 = vpop.permute.xlu0 %1139
  %v1142 = vsel %vm328, %v1140, 0
  %1144 = vmatprep.subr.bf16.mxu0 0
  %1145 = vmatpush1.bf16.msra.mxu0 0
  %1146 = vmatprep.subr.bf16.mxu0 0
  %1147 = vmatpush1.bf16.msra.mxu0 0
  %1148 = vmatprep.subr.bf16.mxu0 0
  %1149 = vmatpush1.bf16.msra.mxu0 0
  %1150 = vmatprep.subr.bf16.mxu0 0
  %1151 = vmatpush1.bf16.msra.mxu0 0
  %1152 = vmatprep.subr.bf16.mxu0 0
  %1153 = vmatpush1.bf16.msra.mxu0 0
  %1154 = vmatprep.subr.bf16.mxu0 0
  %1155 = vmatpush1.bf16.msra.mxu0 0
  %1156 = vmatprep.subr.bf16.mxu0 0
  %1157 = vmatpush1.bf16.msra.mxu0 %v325
  %1158 = vmatprep.subr.bf16.mxu0 0
  %1159 = vmatpush1.bf16.msra.mxu0 %v324
  %1160 = vmatprep.subr.bf16.mxu0 0
  %1161 = vmatpush2.bf16.msra.mxu0 0
  %1162 = vmatprep.subr.bf16.mxu0 0
  %1163 = vmatpush2.bf16.msra.mxu0 0
  %1164 = vmatprep.subr.bf16.mxu0 0
  %1165 = vmatpush2.bf16.msra.mxu0 0
  %1166 = vmatprep.subr.bf16.mxu0 0
  %1167 = vmatpush2.bf16.msra.mxu0 0
  %1168 = vmatprep.subr.bf16.mxu0 0
  %1169 = vmatpush2.bf16.msra.mxu0 0
  %1170 = vmatprep.subr.bf16.mxu0 0
  %1171 = vmatpush2.bf16.msra.mxu0 0
  %1172 = vmatprep.subr.bf16.mxu0 0
  %1173 = vmatpush2.bf16.msra.mxu0 0
  %1174 = vmatprep.subr.bf16.mxu0 0
  %1175 = vmatpush2.bf16.msra.mxu0 0
  %1176 = vmatprep.mubr.bf16.mxu0 0
  %1177 = vmatmul.mubr.bf16.gmra.mxu0 %v1142
  %v1178 = vpop.f32.mrf.mxu0
  %v1179 = vadd.f32 0.0, %v1178
  %v1180 = vpop.f32.mrf.mxu0
  %v1181 = vpop.f32.mrf.mxu0
  %v1182 = vadd.f32 0.0, %v1181
  %v1183 = vpop.f32.mrf.mxu0
  %1184 = vdwg.mxu0
  %v1185 = vadd.f32 %v1137, %v1179
  %v1186 = vadd.f32 %v1138, %v1182
  %v1187 = vxor.u32 %v1185, 2147483648
  %v1188 = vxor.u32 %v1186, 2147483648
  %v1189 = vmul.f32 %v1187, 1.442695
  %v1190 = vpow.pop %v1189
  %v1191 = vmul.f32 %v1188, 1.442695
  %v1192 = vpow.pop %v1191
  %v1193 = vadd.f32 %v1190, 1.0
  %v1194 = vadd.f32 %v1192, 1.0
  %v1195 = vrcp.pop %v1193
  %v1196 = vmul.f32 1.0, %v1195
  %v1197 = vrcp.pop %v1194
  %v1198 = vmul.f32 1.0, %v1197
  %v1199 = vtanh.pop %v1185
  %v1200 = vtanh.pop %v1186
  %v1201 = vmul.f32 %v1196, %v1105
  %v1202 = vmul.f32 %v1198, %v1106
  %1205 = vrot.lane.b32.xlu0 %v1199, 64
  %v1206 = vpop.permute.xlu0 %1205
  %1207 = vrot.lane.b32.xlu0 %v1200, 64
  %v1208 = vpop.permute.xlu0 %1207
  %v1211 = vmul.f32 %v1196, %v1206
  %v1212 = vmul.f32 %v1198, %v1208
  %1215 = vrot.lane.b32.xlu0 %v1211, 32
  %v1216 = vpop.permute.xlu0 %1215
  %1217 = vrot.lane.b32.xlu0 %v1212, 32
  %v1218 = vpop.permute.xlu0 %1217
  %v1221 = vadd.f32 %v1201, %v1216
  %v1222 = vadd.f32 %v1202, %v1218
  %v1223 = vtanh.pop %v1221
  %v1224 = vtanh.pop %v1222
  %1227 = vrot.lane.b32.xlu0 %v1223, 64
  %v1228 = vpop.permute.xlu0 %1227
  %1229 = vrot.lane.b32.xlu0 %v1224, 64
  %v1230 = vpop.permute.xlu0 %1229
  %v1233 = vmul.f32 %v1196, %v1228
  %v1234 = vmul.f32 %v1198, %v1230
  %v1235 = vpack.c.bf16 %v1234, %v1233
  %v1237 = vunpack.c.l.b16 %v1235
  %v1238 = vunpack.c.h.b16 %v1235
  %v1239 = vpack.c.b16 %v1237, %v1237
  %v1240 = vpack.c.b16 %v1238, %v1238
  %1241 = vrot.lane.b32.xlu0 %v1239, 32
  %v1242 = vpop.permute.xlu0 %1241
  %1243 = vrot.lane.b32.xlu0 %v1240, 32
  %v1244 = vpop.permute.xlu0 %1243
  %s1247 = scalar_lea.vmem [#allocation2], 56
  %1248 = vst.msk [vmem:[%s1247] sm:$0xf] %vm435, %v1242
  %1249 = vst.msk [vmem:[%s1247 + $0x4] sm:$0xf] %vm435, %v1244
  %v1250 = vld [vmem:[%s4] sm:$0xf]
  %v1251 = vld [vmem:[%s4 + $0x4] sm:$0xf]
  %v1252 = vld [vmem:[%s4 + $0x8] sm:$0xf]
  %v1253 = vld [vmem:[%s4 + $0xc] sm:$0xf]
  %v1254 = vld [vmem:[%s5] sm:$0xf]
  %v1255 = vld [vmem:[%s5 + $0x4] sm:$0xf]
  %v1256 = vld [vmem:[%s5 + $0x8] sm:$0xf]
  %v1257 = vld [vmem:[%s5 + $0xc] sm:$0xf]
  %v1258 = vld [vmem:[%s6] sm:$0x1]
  %v1259 = vld [vmem:[#allocation2] sm:$0xf]
  %v1260 = vld [vmem:[#allocation2 + $0x4] sm:$0xf]
  %v1261 = vld [vmem:[#allocation2 + $0x8] sm:$0xf]
  %v1262 = vld [vmem:[#allocation2 + $0xc] sm:$0xf]
  %v1263 = vld [vmem:[#allocation2 + $0x10] sm:$0xf]
  %v1264 = vld [vmem:[#allocation2 + $0x14] sm:$0xf]
  %v1265 = vld [vmem:[#allocation2 + $0x18] sm:$0xf]
  %v1266 = vld [vmem:[#allocation2 + $0x1c] sm:$0xf]
  %v1267 = vld [vmem:[#allocation2 + $0x20] sm:$0xf]
  %v1268 = vld [vmem:[#allocation2 + $0x24] sm:$0xf]
  %v1269 = vld [vmem:[#allocation2 + $0x28] sm:$0xf]
  %v1270 = vld [vmem:[#allocation2 + $0x2c] sm:$0xf]
  %v1271 = vld [vmem:[#allocation2 + $0x30] sm:$0xf]
  %v1272 = vld [vmem:[#allocation2 + $0x34] sm:$0xf]
  %v1273 = vld [vmem:[#allocation2 + $0x38] sm:$0xf]
  %v1274 = vld [vmem:[#allocation2 + $0x3c] sm:$0xf]
  %v1276 = vlaneseq
  %v1277 = vshrl.u32 %v1276, 7
  %v1278 = vsub.s32 0, %v1277
  %v1279 = vrot.slane %v1258, %v1278
  %v1297 = vunpack.c.l.b16 %v1259
  %v1298 = vunpack.c.l.b16 %v1260
  %v1299 = vunpack.c.l.b16 %v1261
  %v1300 = vunpack.c.l.b16 %v1262
  %v1301 = vunpack.c.l.b16 %v1263
  %v1302 = vunpack.c.l.b16 %v1264
  %v1303 = vunpack.c.l.b16 %v1265
  %v1304 = vunpack.c.l.b16 %v1266
  %v1305 = vunpack.c.l.b16 %v1267
  %v1306 = vunpack.c.l.b16 %v1268
  %v1307 = vunpack.c.l.b16 %v1269
  %v1308 = vunpack.c.l.b16 %v1270
  %v1309 = vunpack.c.l.b16 %v1271
  %v1310 = vunpack.c.l.b16 %v1272
  %v1311 = vunpack.c.l.b16 %v1273
  %v1312 = vunpack.c.l.b16 %v1274
  %v1313 = vpack.c.b16 %v1298, %v1297
  %v1314 = vpack.c.b16 %v1300, %v1299
  %v1315 = vpack.c.b16 %v1302, %v1301
  %v1316 = vpack.c.b16 %v1304, %v1303
  %v1317 = vpack.c.b16 %v1306, %v1305
  %v1318 = vpack.c.b16 %v1308, %v1307
  %v1319 = vpack.c.b16 %v1310, %v1309
  %v1320 = vpack.c.b16 %v1312, %v1311
  %v1325 = vunpack.c.l.b16 %v1250
  %v1326 = vunpack.c.l.b16 %v1251
  %v1327 = vunpack.c.l.b16 %v1252
  %v1328 = vunpack.c.l.b16 %v1253
  %v1329 = vpack.c.b16 %v1326, %v1325
  %v1330 = vpack.c.b16 %v1328, %v1327
  %v1334 = vsel %vm328, %v1313, 0
  %v1337 = vsel %vm328, %v1314, 0
  %v1340 = vsel %vm328, %v1315, 0
  %v1343 = vsel %vm328, %v1316, 0
  %v1346 = vsel %vm328, %v1317, 0
  %v1349 = vsel %vm328, %v1318, 0
  %v1352 = vsel %vm328, %v1319, 0
  %v1355 = vsel %vm328, %v1320, 0
  %1357 = vmatprep.subr.bf16.mxu0 0
  %1358 = vmatpush1.bf16.msra.mxu0 0
  %1359 = vmatprep.subr.bf16.mxu0 0
  %1360 = vmatpush1.bf16.msra.mxu0 0
  %1361 = vmatprep.subr.bf16.mxu0 0
  %1362 = vmatpush1.bf16.msra.mxu0 0
  %1363 = vmatprep.subr.bf16.mxu0 0
  %1364 = vmatpush1.bf16.msra.mxu0 0
  %1365 = vmatprep.subr.bf16.mxu0 0
  %1366 = vmatpush1.bf16.msra.mxu0 0
  %1367 = vmatprep.subr.bf16.mxu0 0
  %1368 = vmatpush1.bf16.msra.mxu0 0
  %1369 = vmatprep.subr.bf16.mxu0 0
  %1370 = vmatpush1.bf16.msra.mxu0 %v1330
  %1371 = vmatprep.subr.bf16.mxu0 0
  %1372 = vmatpush1.bf16.msra.mxu0 %v1329
  %1373 = vmatprep.subr.bf16.mxu0 0
  %1374 = vmatpush2.bf16.msra.mxu0 0
  %1375 = vmatprep.subr.bf16.mxu0 0
  %1376 = vmatpush2.bf16.msra.mxu0 0
  %1377 = vmatprep.subr.bf16.mxu0 0
  %1378 = vmatpush2.bf16.msra.mxu0 0
  %1379 = vmatprep.subr.bf16.mxu0 0
  %1380 = vmatpush2.bf16.msra.mxu0 0
  %1381 = vmatprep.subr.bf16.mxu0 0
  %1382 = vmatpush2.bf16.msra.mxu0 0
  %1383 = vmatprep.subr.bf16.mxu0 0
  %1384 = vmatpush2.bf16.msra.mxu0 0
  %1385 = vmatprep.subr.bf16.mxu0 0
  %1386 = vmatpush2.bf16.msra.mxu0 0
  %1387 = vmatprep.subr.bf16.mxu0 0
  %1388 = vmatpush2.bf16.msra.mxu0 0
  %1389 = vmatprep.mubr.bf16.mxu0 0
  %1390 = vmatmul.mubr.bf16.gmra.mxu0 %v1334
  %v1391 = vpop.f32.mrf.mxu0
  %v1392 = vadd.f32 %v1279, %v1391
  %v1393 = vpop.f32.mrf.mxu0
  %v1394 = vpop.f32.mrf.mxu0
  %v1395 = vadd.f32 %v1279, %v1394
  %v1396 = vpop.f32.mrf.mxu0
  %1397 = vmatprep.mubr.bf16.mxu0 0
  %1398 = vmatmul.mubr.bf16.gmra.mxu0 %v1337
  %v1399 = vpop.f32.mrf.mxu0
  %v1400 = vadd.f32 %v1279, %v1399
  %v1401 = vpop.f32.mrf.mxu0
  %v1402 = vpop.f32.mrf.mxu0
  %v1403 = vadd.f32 %v1279, %v1402
  %v1404 = vpop.f32.mrf.mxu0
  %1405 = vmatprep.mubr.bf16.mxu0 0
  %1406 = vmatmul.mubr.bf16.gmra.mxu0 %v1340
  %v1407 = vpop.f32.mrf.mxu0
  %v1408 = vadd.f32 %v1279, %v1407
  %v1409 = vpop.f32.mrf.mxu0
  %v1410 = vpop.f32.mrf.mxu0
  %v1411 = vadd.f32 %v1279, %v1410
  %v1412 = vpop.f32.mrf.mxu0
  %1413 = vmatprep.mubr.bf16.mxu0 0
  %1414 = vmatmul.mubr.bf16.gmra.mxu0 %v1343
  %v1415 = vpop.f32.mrf.mxu0
  %v1416 = vadd.f32 %v1279, %v1415
  %v1417 = vpop.f32.mrf.mxu0
  %v1418 = vpop.f32.mrf.mxu0
  %v1419 = vadd.f32 %v1279, %v1418
  %v1420 = vpop.f32.mrf.mxu0
  %1421 = vmatprep.mubr.bf16.mxu0 0
  %1422 = vmatmul.mubr.bf16.gmra.mxu0 %v1346
  %v1423 = vpop.f32.mrf.mxu0
  %v1424 = vadd.f32 %v1279, %v1423
  %v1425 = vpop.f32.mrf.mxu0
  %v1426 = vpop.f32.mrf.mxu0
  %v1427 = vadd.f32 %v1279, %v1426
  %v1428 = vpop.f32.mrf.mxu0
  %1429 = vmatprep.mubr.bf16.mxu0 0
  %1430 = vmatmul.mubr.bf16.gmra.mxu0 %v1349
  %v1431 = vpop.f32.mrf.mxu0
  %v1432 = vadd.f32 %v1279, %v1431
  %v1433 = vpop.f32.mrf.mxu0
  %v1434 = vpop.f32.mrf.mxu0
  %v1435 = vadd.f32 %v1279, %v1434
  %v1436 = vpop.f32.mrf.mxu0
  %1437 = vmatprep.mubr.bf16.mxu0 0
  %1438 = vmatmul.mubr.bf16.gmra.mxu0 %v1352
  %v1439 = vpop.f32.mrf.mxu0
  %v1440 = vadd.f32 %v1279, %v1439
  %v1441 = vpop.f32.mrf.mxu0
  %v1442 = vpop.f32.mrf.mxu0
  %v1443 = vadd.f32 %v1279, %v1442
  %v1444 = vpop.f32.mrf.mxu0
  %1445 = vmatprep.mubr.bf16.mxu0 0
  %1446 = vmatmul.mubr.bf16.gmra.mxu0 %v1355
  %v1447 = vpop.f32.mrf.mxu0
  %v1448 = vadd.f32 %v1279, %v1447
  %v1449 = vpop.f32.mrf.mxu0
  %v1450 = vpop.f32.mrf.mxu0
  %v1451 = vadd.f32 %v1279, %v1450
  %v1452 = vpop.f32.mrf.mxu0
  %1453 = vdwg.mxu0
  %v1454 = vpack.c.bf16 %v1395, %v1392
  %v1455 = vpack.c.bf16 %v1403, %v1400
  %v1456 = vpack.c.bf16 %v1411, %v1408
  %v1457 = vpack.c.bf16 %v1419, %v1416
  %v1458 = vpack.c.bf16 %v1427, %v1424
  %v1459 = vpack.c.bf16 %v1435, %v1432
  %v1460 = vpack.c.bf16 %v1443, %v1440
  %v1461 = vpack.c.bf16 %v1451, %v1448
  %v1470 = vunpack.c.l.b16 %v1454
  %v1471 = vunpack.c.h.b16 %v1454
  %v1472 = vunpack.c.l.b16 %v1455
  %v1473 = vunpack.c.h.b16 %v1455
  %v1474 = vunpack.c.l.b16 %v1456
  %v1475 = vunpack.c.h.b16 %v1456
  %v1476 = vunpack.c.l.b16 %v1457
  %v1477 = vunpack.c.h.b16 %v1457
  %v1478 = vunpack.c.l.b16 %v1458
  %v1479 = vunpack.c.h.b16 %v1458
  %v1480 = vunpack.c.l.b16 %v1459
  %v1481 = vunpack.c.h.b16 %v1459
  %v1482 = vunpack.c.l.b16 %v1460
  %v1483 = vunpack.c.h.b16 %v1460
  %v1484 = vunpack.c.l.b16 %v1461
  %v1485 = vunpack.c.h.b16 %v1461
  %v1486 = vpack.c.b16 %v1470, %v1470
  %v1487 = vpack.c.b16 %v1471, %v1471
  %v1488 = vpack.c.b16 %v1472, %v1472
  %v1489 = vpack.c.b16 %v1473, %v1473
  %v1490 = vpack.c.b16 %v1474, %v1474
  %v1491 = vpack.c.b16 %v1475, %v1475
  %v1492 = vpack.c.b16 %v1476, %v1476
  %v1493 = vpack.c.b16 %v1477, %v1477
  %v1494 = vpack.c.b16 %v1478, %v1478
  %v1495 = vpack.c.b16 %v1479, %v1479
  %v1496 = vpack.c.b16 %v1480, %v1480
  %v1497 = vpack.c.b16 %v1481, %v1481
  %v1498 = vpack.c.b16 %v1482, %v1482
  %v1499 = vpack.c.b16 %v1483, %v1483
  %v1500 = vpack.c.b16 %v1484, %v1484
  %v1501 = vpack.c.b16 %v1485, %v1485
  %1518 = vst [vmem:[#allocation3] sm:$0xf] %v1486
  %1519 = vst [vmem:[#allocation3 + $0x4] sm:$0xf] %v1487
  %1520 = vst [vmem:[#allocation3 + $0x8] sm:$0xf] %v1488
  %1521 = vst [vmem:[#allocation3 + $0xc] sm:$0xf] %v1489
  %1522 = vst [vmem:[#allocation3 + $0x10] sm:$0xf] %v1490
  %1523 = vst [vmem:[#allocation3 + $0x14] sm:$0xf] %v1491
  %1524 = vst [vmem:[#allocation3 + $0x18] sm:$0xf] %v1492
  %1525 = vst [vmem:[#allocation3 + $0x1c] sm:$0xf] %v1493
  %1526 = vst [vmem:[#allocation3 + $0x20] sm:$0xf] %v1494
  %1527 = vst [vmem:[#allocation3 + $0x24] sm:$0xf] %v1495
  %1528 = vst [vmem:[#allocation3 + $0x28] sm:$0xf] %v1496
  %1529 = vst [vmem:[#allocation3 + $0x2c] sm:$0xf] %v1497
  %1530 = vst [vmem:[#allocation3 + $0x30] sm:$0xf] %v1498
  %1531 = vst [vmem:[#allocation3 + $0x34] sm:$0xf] %v1499
  %1532 = vst [vmem:[#allocation3 + $0x38] sm:$0xf] %v1500
  %1533 = vst [vmem:[#allocation3 + $0x3c] sm:$0xf] %v1501
  %v1534 = vld [vmem:[#allocation3] sm:$0xf]
  %v1535 = vld [vmem:[#allocation3 + $0x4] sm:$0xf]
  %v1536 = vunpack.c.l.bf16 %v1534
  %v1537 = vunpack.c.l.bf16 %v1535
  %v1542 = vunpack.c.l.b16 %v1254
  %v1543 = vunpack.c.l.b16 %v1255
  %v1544 = vunpack.c.l.b16 %v1256
  %v1545 = vunpack.c.l.b16 %v1257
  %v1546 = vpack.c.b16 %v1543, %v1542
  %v1547 = vpack.c.b16 %v1545, %v1544
  %1550 = vmatprep.subr.bf16.mxu0 0
  %1551 = vmatpush1.bf16.msra.mxu0 0
  %1552 = vmatprep.subr.bf16.mxu0 0
  %1553 = vmatpush1.bf16.msra.mxu0 0
  %1554 = vmatprep.subr.bf16.mxu0 0
  %1555 = vmatpush1.bf16.msra.mxu0 0
  %1556 = vmatprep.subr.bf16.mxu0 0
  %1557 = vmatpush1.bf16.msra.mxu0 0
  %1558 = vmatprep.subr.bf16.mxu0 0
  %1559 = vmatpush1.bf16.msra.mxu0 0
  %1560 = vmatprep.subr.bf16.mxu0 0
  %1561 = vmatpush1.bf16.msra.mxu0 0
  %1562 = vmatprep.subr.bf16.mxu0 0
  %1563 = vmatpush1.bf16.msra.mxu0 %v1547
  %1564 = vmatprep.subr.bf16.mxu0 0
  %1565 = vmatpush1.bf16.msra.mxu0 %v1546
  %1566 = vmatprep.subr.bf16.mxu0 0
  %1567 = vmatpush2.bf16.msra.mxu0 0
  %1568 = vmatprep.subr.bf16.mxu0 0
  %1569 = vmatpush2.bf16.msra.mxu0 0
  %1570 = vmatprep.subr.bf16.mxu0 0
  %1571 = vmatpush2.bf16.msra.mxu0 0
  %1572 = vmatprep.subr.bf16.mxu0 0
  %1573 = vmatpush2.bf16.msra.mxu0 0
  %1574 = vmatprep.subr.bf16.mxu0 0
  %1575 = vmatpush2.bf16.msra.mxu0 0
  %1576 = vmatprep.subr.bf16.mxu0 0
  %1577 = vmatpush2.bf16.msra.mxu0 0
  %1578 = vmatprep.subr.bf16.mxu0 0
  %1579 = vmatpush2.bf16.msra.mxu0 0
  %1580 = vmatprep.subr.bf16.mxu0 0
  %1581 = vmatpush2.bf16.msra.mxu0 0
  %1582 = vmatprep.mubr.bf16.mxu0 0
  %1583 = vmatmul.mubr.bf16.gmra.mxu0 %v330
  %v1584 = vpop.f32.mrf.mxu0
  %v1585 = vadd.f32 0.0, %v1584
  %v1586 = vpop.f32.mrf.mxu0
  %v1587 = vpop.f32.mrf.mxu0
  %v1588 = vadd.f32 0.0, %v1587
  %v1589 = vpop.f32.mrf.mxu0
  %1590 = vdwg.mxu0
  %v1591 = vadd.f32 %v1536, %v1585
  %v1592 = vadd.f32 %v1537, %v1588
  %v1593 = vxor.u32 %v1591, 2147483648
  %v1594 = vxor.u32 %v1592, 2147483648
  %v1595 = vmul.f32 %v1593, 1.442695
  %v1596 = vpow.pop %v1595
  %v1597 = vmul.f32 %v1594, 1.442695
  %v1598 = vpow.pop %v1597
  %v1599 = vadd.f32 %v1596, 1.0
  %v1600 = vadd.f32 %v1598, 1.0
  %v1601 = vrcp.pop %v1599
  %v1602 = vmul.f32 1.0, %v1601
  %v1603 = vrcp.pop %v1600
  %v1604 = vmul.f32 1.0, %v1603
  %v1605 = vtanh.pop %v1591
  %v1606 = vtanh.pop %v1592
  %v1607 = vmul.f32 %v1602, 0.0
  %v1608 = vmul.f32 %v1604, 0.0
  %1611 = vrot.lane.b32.xlu0 %v1605, 64
  %v1612 = vpop.permute.xlu0 %1611
  %1613 = vrot.lane.b32.xlu0 %v1606, 64
  %v1614 = vpop.permute.xlu0 %1613
  %v1617 = vmul.f32 %v1602, %v1612
  %v1618 = vmul.f32 %v1604, %v1614
  %1621 = vrot.lane.b32.xlu0 %v1617, 32
  %v1622 = vpop.permute.xlu0 %1621
  %1623 = vrot.lane.b32.xlu0 %v1618, 32
  %v1624 = vpop.permute.xlu0 %1623
  %v1627 = vadd.f32 %v1607, %v1622
  %v1628 = vadd.f32 %v1608, %v1624
  %v1629 = vtanh.pop %v1627
  %v1630 = vtanh.pop %v1628
  %1633 = vrot.lane.b32.xlu0 %v1629, 64
  %v1634 = vpop.permute.xlu0 %1633
  %1635 = vrot.lane.b32.xlu0 %v1630, 64
  %v1636 = vpop.permute.xlu0 %1635
  %v1639 = vmul.f32 %v1602, %v1634
  %v1640 = vmul.f32 %v1604, %v1636
  %v1641 = vpack.c.bf16 %v1640, %v1639
  %v1643 = vunpack.c.l.b16 %v1641
  %v1644 = vunpack.c.h.b16 %v1641
  %v1645 = vpack.c.b16 %v1643, %v1643
  %v1646 = vpack.c.b16 %v1644, %v1644
  %1647 = vrot.lane.b32.xlu0 %v1645, 32
  %v1648 = vpop.permute.xlu0 %1647
  %1649 = vrot.lane.b32.xlu0 %v1646, 32
  %v1650 = vpop.permute.xlu0 %1649
  %1653 = vst.msk [vmem:[#allocation2] sm:$0xf] %vm435, %v1648
  %1654 = vst.msk [vmem:[#allocation2 + $0x4] sm:$0xf] %vm435, %v1650
  %v1655 = vld [vmem:[%s438] sm:$0xf]
  %v1656 = vld [vmem:[%s438 + $0x4] sm:$0xf]
  %v1657 = vunpack.c.l.bf16 %v1655
  %v1658 = vunpack.c.l.bf16 %v1656
  %1659 = vrot.lane.b32.xlu0 %v1641, 32
  %v1660 = vpop.permute.xlu0 %1659
  %v1662 = vsel %vm328, %v1660, 0
  %1664 = vmatprep.subr.bf16.mxu0 0
  %1665 = vmatpush1.bf16.msra.mxu0 0
  %1666 = vmatprep.subr.bf16.mxu0 0
  %1667 = vmatpush1.bf16.msra.mxu0 0
  %1668 = vmatprep.subr.bf16.mxu0 0
  %1669 = vmatpush1.bf16.msra.mxu0 0
  %1670 = vmatprep.subr.bf16.mxu0 0
  %1671 = vmatpush1.bf16.msra.mxu0 0
  %1672 = vmatprep.subr.bf16.mxu0 0
  %1673 = vmatpush1.bf16.msra.mxu0 0
  %1674 = vmatprep.subr.bf16.mxu0 0
  %1675 = vmatpush1.bf16.msra.mxu0 0
  %1676 = vmatprep.subr.bf16.mxu0 0
  %1677 = vmatpush1.bf16.msra.mxu0 %v1547
  %1678 = vmatprep.subr.bf16.mxu0 0
  %1679 = vmatpush1.bf16.msra.mxu0 %v1546
  %1680 = vmatprep.subr.bf16.mxu0 0
  %1681 = vmatpush2.bf16.msra.mxu0 0
  %1682 = vmatprep.subr.bf16.mxu0 0
  %1683 = vmatpush2.bf16.msra.mxu0 0
  %1684 = vmatprep.subr.bf16.mxu0 0
  %1685 = vmatpush2.bf16.msra.mxu0 0
  %1686 = vmatprep.subr.bf16.mxu0 0
  %1687 = vmatpush2.bf16.msra.mxu0 0
  %1688 = vmatprep.subr.bf16.mxu0 0
  %1689 = vmatpush2.bf16.msra.mxu0 0
  %1690 = vmatprep.subr.bf16.mxu0 0
  %1691 = vmatpush2.bf16.msra.mxu0 0
  %1692 = vmatprep.subr.bf16.mxu0 0
  %1693 = vmatpush2.bf16.msra.mxu0 0
  %1694 = vmatprep.subr.bf16.mxu0 0
  %1695 = vmatpush2.bf16.msra.mxu0 0
  %1696 = vmatprep.mubr.bf16.mxu0 0
  %1697 = vmatmul.mubr.bf16.gmra.mxu0 %v1662
  %v1698 = vpop.f32.mrf.mxu0
  %v1699 = vadd.f32 0.0, %v1698
  %v1700 = vpop.f32.mrf.mxu0
  %v1701 = vpop.f32.mrf.mxu0
  %v1702 = vadd.f32 0.0, %v1701
  %v1703 = vpop.f32.mrf.mxu0
  %1704 = vdwg.mxu0
  %v1705 = vadd.f32 %v1657, %v1699
  %v1706 = vadd.f32 %v1658, %v1702
  %v1707 = vxor.u32 %v1705, 2147483648
  %v1708 = vxor.u32 %v1706, 2147483648
  %v1709 = vmul.f32 %v1707, 1.442695
  %v1710 = vpow.pop %v1709
  %v1711 = vmul.f32 %v1708, 1.442695
  %v1712 = vpow.pop %v1711
  %v1713 = vadd.f32 %v1710, 1.0
  %v1714 = vadd.f32 %v1712, 1.0
  %v1715 = vrcp.pop %v1713
  %v1716 = vmul.f32 1.0, %v1715
  %v1717 = vrcp.pop %v1714
  %v1718 = vmul.f32 1.0, %v1717
  %v1719 = vtanh.pop %v1705
  %v1720 = vtanh.pop %v1706
  %v1721 = vmul.f32 %v1716, %v1627
  %v1722 = vmul.f32 %v1718, %v1628
  %1725 = vrot.lane.b32.xlu0 %v1719, 64
  %v1726 = vpop.permute.xlu0 %1725
  %1727 = vrot.lane.b32.xlu0 %v1720, 64
  %v1728 = vpop.permute.xlu0 %1727
  %v1731 = vmul.f32 %v1716, %v1726
  %v1732 = vmul.f32 %v1718, %v1728
  %1735 = vrot.lane.b32.xlu0 %v1731, 32
  %v1736 = vpop.permute.xlu0 %1735
  %1737 = vrot.lane.b32.xlu0 %v1732, 32
  %v1738 = vpop.permute.xlu0 %1737
  %v1741 = vadd.f32 %v1721, %v1736
  %v1742 = vadd.f32 %v1722, %v1738
  %v1743 = vtanh.pop %v1741
  %v1744 = vtanh.pop %v1742
  %1747 = vrot.lane.b32.xlu0 %v1743, 64
  %v1748 = vpop.permute.xlu0 %1747
  %1749 = vrot.lane.b32.xlu0 %v1744, 64
  %v1750 = vpop.permute.xlu0 %1749
  %v1753 = vmul.f32 %v1716, %v1748
  %v1754 = vmul.f32 %v1718, %v1750
  %v1755 = vpack.c.bf16 %v1754, %v1753
  %v1757 = vunpack.c.l.b16 %v1755
  %v1758 = vunpack.c.h.b16 %v1755
  %v1759 = vpack.c.b16 %v1757, %v1757
  %v1760 = vpack.c.b16 %v1758, %v1758
  %1761 = vrot.lane.b32.xlu0 %v1759, 32
  %v1762 = vpop.permute.xlu0 %1761
  %1763 = vrot.lane.b32.xlu0 %v1760, 32
  %v1764 = vpop.permute.xlu0 %1763
  %1767 = vst.msk [vmem:[%s551] sm:$0xf] %vm435, %v1762
  %1768 = vst.msk [vmem:[%s551 + $0x4] sm:$0xf] %vm435, %v1764
  %v1769 = vld [vmem:[%s554] sm:$0xf]
  %v1770 = vld [vmem:[%s554 + $0x4] sm:$0xf]
  %v1771 = vunpack.c.l.bf16 %v1769
  %v1772 = vunpack.c.l.bf16 %v1770
  %1773 = vrot.lane.b32.xlu0 %v1755, 32
  %v1774 = vpop.permute.xlu0 %1773
  %v1776 = vsel %vm328, %v1774, 0
  %1778 = vmatprep.subr.bf16.mxu0 0
  %1779 = vmatpush1.bf16.msra.mxu0 0
  %1780 = vmatprep.subr.bf16.mxu0 0
  %1781 = vmatpush1.bf16.msra.mxu0 0
  %1782 = vmatprep.subr.bf16.mxu0 0
  %1783 = vmatpush1.bf16.msra.mxu0 0
  %1784 = vmatprep.subr.bf16.mxu0 0
  %1785 = vmatpush1.bf16.msra.mxu0 0
  %1786 = vmatprep.subr.bf16.mxu0 0
  %1787 = vmatpush1.bf16.msra.mxu0 0
  %1788 = vmatprep.subr.bf16.mxu0 0
  %1789 = vmatpush1.bf16.msra.mxu0 0
  %1790 = vmatprep.subr.bf16.mxu0 0
  %1791 = vmatpush1.bf16.msra.mxu0 %v1547
  %1792 = vmatprep.subr.bf16.mxu0 0
  %1793 = vmatpush1.bf16.msra.mxu0 %v1546
  %1794 = vmatprep.subr.bf16.mxu0 0
  %1795 = vmatpush2.bf16.msra.mxu0 0
  %1796 = vmatprep.subr.bf16.mxu0 0
  %1797 = vmatpush2.bf16.msra.mxu0 0
  %1798 = vmatprep.subr.bf16.mxu0 0
  %1799 = vmatpush2.bf16.msra.mxu0 0
  %1800 = vmatprep.subr.bf16.mxu0 0
  %1801 = vmatpush2.bf16.msra.mxu0 0
  %1802 = vmatprep.subr.bf16.mxu0 0
  %1803 = vmatpush2.bf16.msra.mxu0 0
  %1804 = vmatprep.subr.bf16.mxu0 0
  %1805 = vmatpush2.bf16.msra.mxu0 0
  %1806 = vmatprep.subr.bf16.mxu0 0
  %1807 = vmatpush2.bf16.msra.mxu0 0
  %1808 = vmatprep.subr.bf16.mxu0 0
  %1809 = vmatpush2.bf16.msra.mxu0 0
  %1810 = vmatprep.mubr.bf16.mxu0 0
  %1811 = vmatmul.mubr.bf16.gmra.mxu0 %v1776
  %v1812 = vpop.f32.mrf.mxu0
  %v1813 = vadd.f32 0.0, %v1812
  %v1814 = vpop.f32.mrf.mxu0
  %v1815 = vpop.f32.mrf.mxu0
  %v1816 = vadd.f32 0.0, %v1815
  %v1817 = vpop.f32.mrf.mxu0
  %1818 = vdwg.mxu0
  %v1819 = vadd.f32 %v1771, %v1813
  %v1820 = vadd.f32 %v1772, %v1816
  %v1821 = vxor.u32 %v1819, 2147483648
  %v1822 = vxor.u32 %v1820, 2147483648
  %v1823 = vmul.f32 %v1821, 1.442695
  %v1824 = vpow.pop %v1823
  %v1825 = vmul.f32 %v1822, 1.442695
  %v1826 = vpow.pop %v1825
  %v1827 = vadd.f32 %v1824, 1.0
  %v1828 = vadd.f32 %v1826, 1.0
  %v1829 = vrcp.pop %v1827
  %v1830 = vmul.f32 1.0, %v1829
  %v1831 = vrcp.pop %v1828
  %v1832 = vmul.f32 1.0, %v1831
  %v1833 = vtanh.pop %v1819
  %v1834 = vtanh.pop %v1820
  %v1835 = vmul.f32 %v1830, %v1741
  %v1836 = vmul.f32 %v1832, %v1742
  %1839 = vrot.lane.b32.xlu0 %v1833, 64
  %v1840 = vpop.permute.xlu0 %1839
  %1841 = vrot.lane.b32.xlu0 %v1834, 64
  %v1842 = vpop.permute.xlu0 %1841
  %v1845 = vmul.f32 %v1830, %v1840
  %v1846 = vmul.f32 %v1832, %v1842
  %1849 = vrot.lane.b32.xlu0 %v1845, 32
  %v1850 = vpop.permute.xlu0 %1849
  %1851 = vrot.lane.b32.xlu0 %v1846, 32
  %v1852 = vpop.permute.xlu0 %1851
  %v1855 = vadd.f32 %v1835, %v1850
  %v1856 = vadd.f32 %v1836, %v1852
  %v1857 = vtanh.pop %v1855
  %v1858 = vtanh.pop %v1856
  %1861 = vrot.lane.b32.xlu0 %v1857, 64
  %v1862 = vpop.permute.xlu0 %1861
  %1863 = vrot.lane.b32.xlu0 %v1858, 64
  %v1864 = vpop.permute.xlu0 %1863
  %v1867 = vmul.f32 %v1830, %v1862
  %v1868 = vmul.f32 %v1832, %v1864
  %v1869 = vpack.c.bf16 %v1868, %v1867
  %v1871 = vunpack.c.l.b16 %v1869
  %v1872 = vunpack.c.h.b16 %v1869
  %v1873 = vpack.c.b16 %v1871, %v1871
  %v1874 = vpack.c.b16 %v1872, %v1872
  %1875 = vrot.lane.b32.xlu0 %v1873, 32
  %v1876 = vpop.permute.xlu0 %1875
  %1877 = vrot.lane.b32.xlu0 %v1874, 32
  %v1878 = vpop.permute.xlu0 %1877
  %1881 = vst.msk [vmem:[%s667] sm:$0xf] %vm435, %v1876
  %1882 = vst.msk [vmem:[%s667 + $0x4] sm:$0xf] %vm435, %v1878
  %v1883 = vld [vmem:[%s670] sm:$0xf]
  %v1884 = vld [vmem:[%s670 + $0x4] sm:$0xf]
  %v1885 = vunpack.c.l.bf16 %v1883
  %v1886 = vunpack.c.l.bf16 %v1884
  %1887 = vrot.lane.b32.xlu0 %v1869, 32
  %v1888 = vpop.permute.xlu0 %1887
  %v1890 = vsel %vm328, %v1888, 0
  %1892 = vmatprep.subr.bf16.mxu0 0
  %1893 = vmatpush1.bf16.msra.mxu0 0
  %1894 = vmatprep.subr.bf16.mxu0 0
  %1895 = vmatpush1.bf16.msra.mxu0 0
  %1896 = vmatprep.subr.bf16.mxu0 0
  %1897 = vmatpush1.bf16.msra.mxu0 0
  %1898 = vmatprep.subr.bf16.mxu0 0
  %1899 = vmatpush1.bf16.msra.mxu0 0
  %1900 = vmatprep.subr.bf16.mxu0 0
  %1901 = vmatpush1.bf16.msra.mxu0 0
  %1902 = vmatprep.subr.bf16.mxu0 0
  %1903 = vmatpush1.bf16.msra.mxu0 0
  %1904 = vmatprep.subr.bf16.mxu0 0
  %1905 = vmatpush1.bf16.msra.mxu0 %v1547
  %1906 = vmatprep.subr.bf16.mxu0 0
  %1907 = vmatpush1.bf16.msra.mxu0 %v1546
  %1908 = vmatprep.subr.bf16.mxu0 0
  %1909 = vmatpush2.bf16.msra.mxu0 0
  %1910 = vmatprep.subr.bf16.mxu0 0
  %1911 = vmatpush2.bf16.msra.mxu0 0
  %1912 = vmatprep.subr.bf16.mxu0 0
  %1913 = vmatpush2.bf16.msra.mxu0 0
  %1914 = vmatprep.subr.bf16.mxu0 0
  %1915 = vmatpush2.bf16.msra.mxu0 0
  %1916 = vmatprep.subr.bf16.mxu0 0
  %1917 = vmatpush2.bf16.msra.mxu0 0
  %1918 = vmatprep.subr.bf16.mxu0 0
  %1919 = vmatpush2.bf16.msra.mxu0 0
  %1920 = vmatprep.subr.bf16.mxu0 0
  %1921 = vmatpush2.bf16.msra.mxu0 0
  %1922 = vmatprep.subr.bf16.mxu0 0
  %1923 = vmatpush2.bf16.msra.mxu0 0
  %1924 = vmatprep.mubr.bf16.mxu0 0
  %1925 = vmatmul.mubr.bf16.gmra.mxu0 %v1890
  %v1926 = vpop.f32.mrf.mxu0
  %v1927 = vadd.f32 0.0, %v1926
  %v1928 = vpop.f32.mrf.mxu0
  %v1929 = vpop.f32.mrf.mxu0
  %v1930 = vadd.f32 0.0, %v1929
  %v1931 = vpop.f32.mrf.mxu0
  %1932 = vdwg.mxu0
  %v1933 = vadd.f32 %v1885, %v1927
  %v1934 = vadd.f32 %v1886, %v1930
  %v1935 = vxor.u32 %v1933, 2147483648
  %v1936 = vxor.u32 %v1934, 2147483648
  %v1937 = vmul.f32 %v1935, 1.442695
  %v1938 = vpow.pop %v1937
  %v1939 = vmul.f32 %v1936, 1.442695
  %v1940 = vpow.pop %v1939
  %v1941 = vadd.f32 %v1938, 1.0
  %v1942 = vadd.f32 %v1940, 1.0
  %v1943 = vrcp.pop %v1941
  %v1944 = vmul.f32 1.0, %v1943
  %v1945 = vrcp.pop %v1942
  %v1946 = vmul.f32 1.0, %v1945
  %v1947 = vtanh.pop %v1933
  %v1948 = vtanh.pop %v1934
  %v1949 = vmul.f32 %v1944, %v1855
  %v1950 = vmul.f32 %v1946, %v1856
  %1953 = vrot.lane.b32.xlu0 %v1947, 64
  %v1954 = vpop.permute.xlu0 %1953
  %1955 = vrot.lane.b32.xlu0 %v1948, 64
  %v1956 = vpop.permute.xlu0 %1955
  %v1959 = vmul.f32 %v1944, %v1954
  %v1960 = vmul.f32 %v1946, %v1956
  %1963 = vrot.lane.b32.xlu0 %v1959, 32
  %v1964 = vpop.permute.xlu0 %1963
  %1965 = vrot.lane.b32.xlu0 %v1960, 32
  %v1966 = vpop.permute.xlu0 %1965
  %v1969 = vadd.f32 %v1949, %v1964
  %v1970 = vadd.f32 %v1950, %v1966
  %v1971 = vtanh.pop %v1969
  %v1972 = vtanh.pop %v1970
  %1975 = vrot.lane.b32.xlu0 %v1971, 64
  %v1976 = vpop.permute.xlu0 %1975
  %1977 = vrot.lane.b32.xlu0 %v1972, 64
  %v1978 = vpop.permute.xlu0 %1977
  %v1981 = vmul.f32 %v1944, %v1976
  %v1982 = vmul.f32 %v1946, %v1978
  %v1983 = vpack.c.bf16 %v1982, %v1981
  %v1985 = vunpack.c.l.b16 %v1983
  %v1986 = vunpack.c.h.b16 %v1983
  %v1987 = vpack.c.b16 %v1985, %v1985
  %v1988 = vpack.c.b16 %v1986, %v1986
  %1989 = vrot.lane.b32.xlu0 %v1987, 32
  %v1990 = vpop.permute.xlu0 %1989
  %1991 = vrot.lane.b32.xlu0 %v1988, 32
  %v1992 = vpop.permute.xlu0 %1991
  %1995 = vst.msk [vmem:[%s783] sm:$0xf] %vm435, %v1990
  %1996 = vst.msk [vmem:[%s783 + $0x4] sm:$0xf] %vm435, %v1992
  %v1997 = vld [vmem:[%s786] sm:$0xf]
  %v1998 = vld [vmem:[%s786 + $0x4] sm:$0xf]
  %v1999 = vunpack.c.l.bf16 %v1997
  %v2000 = vunpack.c.l.bf16 %v1998
  %2001 = vrot.lane.b32.xlu0 %v1983, 32
  %v2002 = vpop.permute.xlu0 %2001
  %v2004 = vsel %vm328, %v2002, 0
  %2006 = vmatprep.subr.bf16.mxu0 0
  %2007 = vmatpush1.bf16.msra.mxu0 0
  %2008 = vmatprep.subr.bf16.mxu0 0
  %2009 = vmatpush1.bf16.msra.mxu0 0
  %2010 = vmatprep.subr.bf16.mxu0 0
  %2011 = vmatpush1.bf16.msra.mxu0 0
  %2012 = vmatprep.subr.bf16.mxu0 0
  %2013 = vmatpush1.bf16.msra.mxu0 0
  %2014 = vmatprep.subr.bf16.mxu0 0
  %2015 = vmatpush1.bf16.msra.mxu0 0
  %2016 = vmatprep.subr.bf16.mxu0 0
  %2017 = vmatpush1.bf16.msra.mxu0 0
  %2018 = vmatprep.subr.bf16.mxu0 0
  %2019 = vmatpush1.bf16.msra.mxu0 %v1547
  %2020 = vmatprep.subr.bf16.mxu0 0
  %2021 = vmatpush1.bf16.msra.mxu0 %v1546
  %2022 = vmatprep.subr.bf16.mxu0 0
  %2023 = vmatpush2.bf16.msra.mxu0 0
  %2024 = vmatprep.subr.bf16.mxu0 0
  %2025 = vmatpush2.bf16.msra.mxu0 0
  %2026 = vmatprep.subr.bf16.mxu0 0
  %2027 = vmatpush2.bf16.msra.mxu0 0
  %2028 = vmatprep.subr.bf16.mxu0 0
  %2029 = vmatpush2.bf16.msra.mxu0 0
  %2030 = vmatprep.subr.bf16.mxu0 0
  %2031 = vmatpush2.bf16.msra.mxu0 0
  %2032 = vmatprep.subr.bf16.mxu0 0
  %2033 = vmatpush2.bf16.msra.mxu0 0
  %2034 = vmatprep.subr.bf16.mxu0 0
  %2035 = vmatpush2.bf16.msra.mxu0 0
  %2036 = vmatprep.subr.bf16.mxu0 0
  %2037 = vmatpush2.bf16.msra.mxu0 0
  %2038 = vmatprep.mubr.bf16.mxu0 0
  %2039 = vmatmul.mubr.bf16.gmra.mxu0 %v2004
  %v2040 = vpop.f32.mrf.mxu0
  %v2041 = vadd.f32 0.0, %v2040
  %v2042 = vpop.f32.mrf.mxu0
  %v2043 = vpop.f32.mrf.mxu0
  %v2044 = vadd.f32 0.0, %v2043
  %v2045 = vpop.f32.mrf.mxu0
  %2046 = vdwg.mxu0
  %v2047 = vadd.f32 %v1999, %v2041
  %v2048 = vadd.f32 %v2000, %v2044
  %v2049 = vxor.u32 %v2047, 2147483648
  %v2050 = vxor.u32 %v2048, 2147483648
  %v2051 = vmul.f32 %v2049, 1.442695
  %v2052 = vpow.pop %v2051
  %v2053 = vmul.f32 %v2050, 1.442695
  %v2054 = vpow.pop %v2053
  %v2055 = vadd.f32 %v2052, 1.0
  %v2056 = vadd.f32 %v2054, 1.0
  %v2057 = vrcp.pop %v2055
  %v2058 = vmul.f32 1.0, %v2057
  %v2059 = vrcp.pop %v2056
  %v2060 = vmul.f32 1.0, %v2059
  %v2061 = vtanh.pop %v2047
  %v2062 = vtanh.pop %v2048
  %v2063 = vmul.f32 %v2058, %v1969
  %v2064 = vmul.f32 %v2060, %v1970
  %2067 = vrot.lane.b32.xlu0 %v2061, 64
  %v2068 = vpop.permute.xlu0 %2067
  %2069 = vrot.lane.b32.xlu0 %v2062, 64
  %v2070 = vpop.permute.xlu0 %2069
  %v2073 = vmul.f32 %v2058, %v2068
  %v2074 = vmul.f32 %v2060, %v2070
  %2077 = vrot.lane.b32.xlu0 %v2073, 32
  %v2078 = vpop.permute.xlu0 %2077
  %2079 = vrot.lane.b32.xlu0 %v2074, 32
  %v2080 = vpop.permute.xlu0 %2079
  %v2083 = vadd.f32 %v2063, %v2078
  %v2084 = vadd.f32 %v2064, %v2080
  %v2085 = vtanh.pop %v2083
  %v2086 = vtanh.pop %v2084
  %2089 = vrot.lane.b32.xlu0 %v2085, 64
  %v2090 = vpop.permute.xlu0 %2089
  %2091 = vrot.lane.b32.xlu0 %v2086, 64
  %v2092 = vpop.permute.xlu0 %2091
  %v2095 = vmul.f32 %v2058, %v2090
  %v2096 = vmul.f32 %v2060, %v2092
  %v2097 = vpack.c.bf16 %v2096, %v2095
  %v2099 = vunpack.c.l.b16 %v2097
  %v2100 = vunpack.c.h.b16 %v2097
  %v2101 = vpack.c.b16 %v2099, %v2099
  %v2102 = vpack.c.b16 %v2100, %v2100
  %2103 = vrot.lane.b32.xlu0 %v2101, 32
  %v2104 = vpop.permute.xlu0 %2103
  %2105 = vrot.lane.b32.xlu0 %v2102, 32
  %v2106 = vpop.permute.xlu0 %2105
  %2109 = vst.msk [vmem:[%s899] sm:$0xf] %vm435, %v2104
  %2110 = vst.msk [vmem:[%s899 + $0x4] sm:$0xf] %vm435, %v2106
  %v2111 = vld [vmem:[%s902] sm:$0xf]
  %v2112 = vld [vmem:[%s902 + $0x4] sm:$0xf]
  %v2113 = vunpack.c.l.bf16 %v2111
  %v2114 = vunpack.c.l.bf16 %v2112
  %2115 = vrot.lane.b32.xlu0 %v2097, 32
  %v2116 = vpop.permute.xlu0 %2115
  %v2118 = vsel %vm328, %v2116, 0
  %2120 = vmatprep.subr.bf16.mxu0 0
  %2121 = vmatpush1.bf16.msra.mxu0 0
  %2122 = vmatprep.subr.bf16.mxu0 0
  %2123 = vmatpush1.bf16.msra.mxu0 0
  %2124 = vmatprep.subr.bf16.mxu0 0
  %2125 = vmatpush1.bf16.msra.mxu0 0
  %2126 = vmatprep.subr.bf16.mxu0 0
  %2127 = vmatpush1.bf16.msra.mxu0 0
  %2128 = vmatprep.subr.bf16.mxu0 0
  %2129 = vmatpush1.bf16.msra.mxu0 0
  %2130 = vmatprep.subr.bf16.mxu0 0
  %2131 = vmatpush1.bf16.msra.mxu0 0
  %2132 = vmatprep.subr.bf16.mxu0 0
  %2133 = vmatpush1.bf16.msra.mxu0 %v1547
  %2134 = vmatprep.subr.bf16.mxu0 0
  %2135 = vmatpush1.bf16.msra.mxu0 %v1546
  %2136 = vmatprep.subr.bf16.mxu0 0
  %2137 = vmatpush2.bf16.msra.mxu0 0
  %2138 = vmatprep.subr.bf16.mxu0 0
  %2139 = vmatpush2.bf16.msra.mxu0 0
  %2140 = vmatprep.subr.bf16.mxu0 0
  %2141 = vmatpush2.bf16.msra.mxu0 0
  %2142 = vmatprep.subr.bf16.mxu0 0
  %2143 = vmatpush2.bf16.msra.mxu0 0
  %2144 = vmatprep.subr.bf16.mxu0 0
  %2145 = vmatpush2.bf16.msra.mxu0 0
  %2146 = vmatprep.subr.bf16.mxu0 0
  %2147 = vmatpush2.bf16.msra.mxu0 0
  %2148 = vmatprep.subr.bf16.mxu0 0
  %2149 = vmatpush2.bf16.msra.mxu0 0
  %2150 = vmatprep.subr.bf16.mxu0 0
  %2151 = vmatpush2.bf16.msra.mxu0 0
  %2152 = vmatprep.mubr.bf16.mxu0 0
  %2153 = vmatmul.mubr.bf16.gmra.mxu0 %v2118
  %v2154 = vpop.f32.mrf.mxu0
  %v2155 = vadd.f32 0.0, %v2154
  %v2156 = vpop.f32.mrf.mxu0
  %v2157 = vpop.f32.mrf.mxu0
  %v2158 = vadd.f32 0.0, %v2157
  %v2159 = vpop.f32.mrf.mxu0
  %2160 = vdwg.mxu0
  %v2161 = vadd.f32 %v2113, %v2155
  %v2162 = vadd.f32 %v2114, %v2158
  %v2163 = vxor.u32 %v2161, 2147483648
  %v2164 = vxor.u32 %v2162, 2147483648
  %v2165 = vmul.f32 %v2163, 1.442695
  %v2166 = vpow.pop %v2165
  %v2167 = vmul.f32 %v2164, 1.442695
  %v2168 = vpow.pop %v2167
  %v2169 = vadd.f32 %v2166, 1.0
  %v2170 = vadd.f32 %v2168, 1.0
  %v2171 = vrcp.pop %v2169
  %v2172 = vmul.f32 1.0, %v2171
  %v2173 = vrcp.pop %v2170
  %v2174 = vmul.f32 1.0, %v2173
  %v2175 = vtanh.pop %v2161
  %v2176 = vtanh.pop %v2162
  %v2177 = vmul.f32 %v2172, %v2083
  %v2178 = vmul.f32 %v2174, %v2084
  %2181 = vrot.lane.b32.xlu0 %v2175, 64
  %v2182 = vpop.permute.xlu0 %2181
  %2183 = vrot.lane.b32.xlu0 %v2176, 64
  %v2184 = vpop.permute.xlu0 %2183
  %v2187 = vmul.f32 %v2172, %v2182
  %v2188 = vmul.f32 %v2174, %v2184
  %2191 = vrot.lane.b32.xlu0 %v2187, 32
  %v2192 = vpop.permute.xlu0 %2191
  %2193 = vrot.lane.b32.xlu0 %v2188, 32
  %v2194 = vpop.permute.xlu0 %2193
  %v2197 = vadd.f32 %v2177, %v2192
  %v2198 = vadd.f32 %v2178, %v2194
  %v2199 = vtanh.pop %v2197
  %v2200 = vtanh.pop %v2198
  %2203 = vrot.lane.b32.xlu0 %v2199, 64
  %v2204 = vpop.permute.xlu0 %2203
  %2205 = vrot.lane.b32.xlu0 %v2200, 64
  %v2206 = vpop.permute.xlu0 %2205
  %v2209 = vmul.f32 %v2172, %v2204
  %v2210 = vmul.f32 %v2174, %v2206
  %v2211 = vpack.c.bf16 %v2210, %v2209
  %v2213 = vunpack.c.l.b16 %v2211
  %v2214 = vunpack.c.h.b16 %v2211
  %v2215 = vpack.c.b16 %v2213, %v2213
  %v2216 = vpack.c.b16 %v2214, %v2214
  %2217 = vrot.lane.b32.xlu0 %v2215, 32
  %v2218 = vpop.permute.xlu0 %2217
  %2219 = vrot.lane.b32.xlu0 %v2216, 32
  %v2220 = vpop.permute.xlu0 %2219
  %2223 = vst.msk [vmem:[%s1015] sm:$0xf] %vm435, %v2218
  %2224 = vst.msk [vmem:[%s1015 + $0x4] sm:$0xf] %vm435, %v2220
  %v2225 = vld [vmem:[%s1018] sm:$0xf]
  %v2226 = vld [vmem:[%s1018 + $0x4] sm:$0xf]
  %v2227 = vunpack.c.l.bf16 %v2225
  %v2228 = vunpack.c.l.bf16 %v2226
  %2229 = vrot.lane.b32.xlu0 %v2211, 32
  %v2230 = vpop.permute.xlu0 %2229
  %v2232 = vsel %vm328, %v2230, 0
  %2234 = vmatprep.subr.bf16.mxu0 0
  %2235 = vmatpush1.bf16.msra.mxu0 0
  %2236 = vmatprep.subr.bf16.mxu0 0
  %2237 = vmatpush1.bf16.msra.mxu0 0
  %2238 = vmatprep.subr.bf16.mxu0 0
  %2239 = vmatpush1.bf16.msra.mxu0 0
  %2240 = vmatprep.subr.bf16.mxu0 0
  %2241 = vmatpush1.bf16.msra.mxu0 0
  %2242 = vmatprep.subr.bf16.mxu0 0
  %2243 = vmatpush1.bf16.msra.mxu0 0
  %2244 = vmatprep.subr.bf16.mxu0 0
  %2245 = vmatpush1.bf16.msra.mxu0 0
  %2246 = vmatprep.subr.bf16.mxu0 0
  %2247 = vmatpush1.bf16.msra.mxu0 %v1547
  %2248 = vmatprep.subr.bf16.mxu0 0
  %2249 = vmatpush1.bf16.msra.mxu0 %v1546
  %2250 = vmatprep.subr.bf16.mxu0 0
  %2251 = vmatpush2.bf16.msra.mxu0 0
  %2252 = vmatprep.subr.bf16.mxu0 0
  %2253 = vmatpush2.bf16.msra.mxu0 0
  %2254 = vmatprep.subr.bf16.mxu0 0
  %2255 = vmatpush2.bf16.msra.mxu0 0
  %2256 = vmatprep.subr.bf16.mxu0 0
  %2257 = vmatpush2.bf16.msra.mxu0 0
  %2258 = vmatprep.subr.bf16.mxu0 0
  %2259 = vmatpush2.bf16.msra.mxu0 0
  %2260 = vmatprep.subr.bf16.mxu0 0
  %2261 = vmatpush2.bf16.msra.mxu0 0
  %2262 = vmatprep.subr.bf16.mxu0 0
  %2263 = vmatpush2.bf16.msra.mxu0 0
  %2264 = vmatprep.subr.bf16.mxu0 0
  %2265 = vmatpush2.bf16.msra.mxu0 0
  %2266 = vmatprep.mubr.bf16.mxu0 0
  %2267 = vmatmul.mubr.bf16.gmra.mxu0 %v2232
  %v2268 = vpop.f32.mrf.mxu0
  %v2269 = vadd.f32 0.0, %v2268
  %v2270 = vpop.f32.mrf.mxu0
  %v2271 = vpop.f32.mrf.mxu0
  %v2272 = vadd.f32 0.0, %v2271
  %v2273 = vpop.f32.mrf.mxu0
  %2274 = vdwg.mxu0
  %v2275 = vadd.f32 %v2227, %v2269
  %v2276 = vadd.f32 %v2228, %v2272
  %v2277 = vxor.u32 %v2275, 2147483648
  %v2278 = vxor.u32 %v2276, 2147483648
  %v2279 = vmul.f32 %v2277, 1.442695
  %v2280 = vpow.pop %v2279
  %v2281 = vmul.f32 %v2278, 1.442695
  %v2282 = vpow.pop %v2281
  %v2283 = vadd.f32 %v2280, 1.0
  %v2284 = vadd.f32 %v2282, 1.0
  %v2285 = vrcp.pop %v2283
  %v2286 = vmul.f32 1.0, %v2285
  %v2287 = vrcp.pop %v2284
  %v2288 = vmul.f32 1.0, %v2287
  %v2289 = vtanh.pop %v2275
  %v2290 = vtanh.pop %v2276
  %v2291 = vmul.f32 %v2286, %v2197
  %v2292 = vmul.f32 %v2288, %v2198
  %2295 = vrot.lane.b32.xlu0 %v2289, 64
  %v2296 = vpop.permute.xlu0 %2295
  %2297 = vrot.lane.b32.xlu0 %v2290, 64
  %v2298 = vpop.permute.xlu0 %2297
  %v2301 = vmul.f32 %v2286, %v2296
  %v2302 = vmul.f32 %v2288, %v2298
  %2305 = vrot.lane.b32.xlu0 %v2301, 32
  %v2306 = vpop.permute.xlu0 %2305
  %2307 = vrot.lane.b32.xlu0 %v2302, 32
  %v2308 = vpop.permute.xlu0 %2307
  %v2311 = vadd.f32 %v2291, %v2306
  %v2312 = vadd.f32 %v2292, %v2308
  %v2313 = vtanh.pop %v2311
  %v2314 = vtanh.pop %v2312
  %2317 = vrot.lane.b32.xlu0 %v2313, 64
  %v2318 = vpop.permute.xlu0 %2317
  %2319 = vrot.lane.b32.xlu0 %v2314, 64
  %v2320 = vpop.permute.xlu0 %2319
  %v2323 = vmul.f32 %v2286, %v2318
  %v2324 = vmul.f32 %v2288, %v2320
  %v2325 = vpack.c.bf16 %v2324, %v2323
  %v2327 = vunpack.c.l.b16 %v2325
  %v2328 = vunpack.c.h.b16 %v2325
  %v2329 = vpack.c.b16 %v2327, %v2327
  %v2330 = vpack.c.b16 %v2328, %v2328
  %2331 = vrot.lane.b32.xlu0 %v2329, 32
  %v2332 = vpop.permute.xlu0 %2331
  %2333 = vrot.lane.b32.xlu0 %v2330, 32
  %v2334 = vpop.permute.xlu0 %2333
  %2337 = vst.msk [vmem:[%s1131] sm:$0xf] %vm435, %v2332
  %2338 = vst.msk [vmem:[%s1131 + $0x4] sm:$0xf] %vm435, %v2334
  %v2339 = vld [vmem:[%s1134] sm:$0xf]
  %v2340 = vld [vmem:[%s1134 + $0x4] sm:$0xf]
  %v2341 = vunpack.c.l.bf16 %v2339
  %v2342 = vunpack.c.l.bf16 %v2340
  %2343 = vrot.lane.b32.xlu0 %v2325, 32
  %v2344 = vpop.permute.xlu0 %2343
  %v2346 = vsel %vm328, %v2344, 0
  %2348 = vmatprep.subr.bf16.mxu0 0
  %2349 = vmatpush1.bf16.msra.mxu0 0
  %2350 = vmatprep.subr.bf16.mxu0 0
  %2351 = vmatpush1.bf16.msra.mxu0 0
  %2352 = vmatprep.subr.bf16.mxu0 0
  %2353 = vmatpush1.bf16.msra.mxu0 0
  %2354 = vmatprep.subr.bf16.mxu0 0
  %2355 = vmatpush1.bf16.msra.mxu0 0
  %2356 = vmatprep.subr.bf16.mxu0 0
  %2357 = vmatpush1.bf16.msra.mxu0 0
  %2358 = vmatprep.subr.bf16.mxu0 0
  %2359 = vmatpush1.bf16.msra.mxu0 0
  %2360 = vmatprep.subr.bf16.mxu0 0
  %2361 = vmatpush1.bf16.msra.mxu0 %v1547
  %2362 = vmatprep.subr.bf16.mxu0 0
  %2363 = vmatpush1.bf16.msra.mxu0 %v1546
  %2364 = vmatprep.subr.bf16.mxu0 0
  %2365 = vmatpush2.bf16.msra.mxu0 0
  %2366 = vmatprep.subr.bf16.mxu0 0
  %2367 = vmatpush2.bf16.msra.mxu0 0
  %2368 = vmatprep.subr.bf16.mxu0 0
  %2369 = vmatpush2.bf16.msra.mxu0 0
  %2370 = vmatprep.subr.bf16.mxu0 0
  %2371 = vmatpush2.bf16.msra.mxu0 0
  %2372 = vmatprep.subr.bf16.mxu0 0
  %2373 = vmatpush2.bf16.msra.mxu0 0
  %2374 = vmatprep.subr.bf16.mxu0 0
  %2375 = vmatpush2.bf16.msra.mxu0 0
  %2376 = vmatprep.subr.bf16.mxu0 0
  %2377 = vmatpush2.bf16.msra.mxu0 0
  %2378 = vmatprep.subr.bf16.mxu0 0
  %2379 = vmatpush2.bf16.msra.mxu0 0
  %2380 = vmatprep.mubr.bf16.mxu0 0
  %2381 = vmatmul.mubr.bf16.gmra.mxu0 %v2346
  %v2382 = vpop.f32.mrf.mxu0
  %v2383 = vadd.f32 0.0, %v2382
  %v2384 = vpop.f32.mrf.mxu0
  %v2385 = vpop.f32.mrf.mxu0
  %v2386 = vadd.f32 0.0, %v2385
  %v2387 = vpop.f32.mrf.mxu0
  %2388 = vdwg.mxu0
  %v2389 = vadd.f32 %v2341, %v2383
  %v2390 = vadd.f32 %v2342, %v2386
  %v2391 = vxor.u32 %v2389, 2147483648
  %v2392 = vxor.u32 %v2390, 2147483648
  %v2393 = vmul.f32 %v2391, 1.442695
  %v2394 = vpow.pop %v2393
  %v2395 = vmul.f32 %v2392, 1.442695
  %v2396 = vpow.pop %v2395
  %v2397 = vadd.f32 %v2394, 1.0
  %v2398 = vadd.f32 %v2396, 1.0
  %v2399 = vrcp.pop %v2397
  %v2400 = vmul.f32 1.0, %v2399
  %v2401 = vrcp.pop %v2398
  %v2402 = vmul.f32 1.0, %v2401
  %v2403 = vtanh.pop %v2389
  %v2404 = vtanh.pop %v2390
  %v2405 = vmul.f32 %v2400, %v2311
  %v2406 = vmul.f32 %v2402, %v2312
  %2409 = vrot.lane.b32.xlu0 %v2403, 64
  %v2410 = vpop.permute.xlu0 %2409
  %2411 = vrot.lane.b32.xlu0 %v2404, 64
  %v2412 = vpop.permute.xlu0 %2411
  %v2415 = vmul.f32 %v2400, %v2410
  %v2416 = vmul.f32 %v2402, %v2412
  %2419 = vrot.lane.b32.xlu0 %v2415, 32
  %v2420 = vpop.permute.xlu0 %2419
  %2421 = vrot.lane.b32.xlu0 %v2416, 32
  %v2422 = vpop.permute.xlu0 %2421
  %v2425 = vadd.f32 %v2405, %v2420
  %v2426 = vadd.f32 %v2406, %v2422
  %v2427 = vtanh.pop %v2425
  %v2428 = vtanh.pop %v2426
  %2431 = vrot.lane.b32.xlu0 %v2427, 64
  %v2432 = vpop.permute.xlu0 %2431
  %2433 = vrot.lane.b32.xlu0 %v2428, 64
  %v2434 = vpop.permute.xlu0 %2433
  %v2437 = vmul.f32 %v2400, %v2432
  %v2438 = vmul.f32 %v2402, %v2434
  %v2439 = vpack.c.bf16 %v2438, %v2437
  %v2441 = vunpack.c.l.b16 %v2439
  %v2442 = vunpack.c.h.b16 %v2439
  %v2443 = vpack.c.b16 %v2441, %v2441
  %v2444 = vpack.c.b16 %v2442, %v2442
  %2445 = vrot.lane.b32.xlu0 %v2443, 32
  %v2446 = vpop.permute.xlu0 %2445
  %2447 = vrot.lane.b32.xlu0 %v2444, 32
  %v2448 = vpop.permute.xlu0 %2447
  %2451 = vst.msk [vmem:[%s1247] sm:$0xf] %vm435, %v2446
  %2452 = vst.msk [vmem:[%s1247 + $0x4] sm:$0xf] %vm435, %v2448
  %v2453 = vld [vmem:[%s7] sm:$0xf]
  %v2454 = vld [vmem:[%s7 + $0x4] sm:$0xf]
  %v2455 = vld [vmem:[%s7 + $0x8] sm:$0xf]
  %v2456 = vld [vmem:[%s7 + $0xc] sm:$0xf]
  %v2457 = vld [vmem:[#allocation4] sm:$0x1]
  %v2459 = vlaneseq
  %v2460 = vshrl.u32 %v2459, 7
  %v2461 = vsub.s32 0, %v2460
  %v2462 = vrot.slane %v2457, %v2461
  %2464 = vrot.lane.b32.xlu0 %v2439, 32
  %v2465 = vpop.permute.xlu0 %2464
  %v2470 = vunpack.c.l.b16 %v2453
  %v2471 = vunpack.c.l.b16 %v2454
  %v2472 = vunpack.c.l.b16 %v2455
  %v2473 = vunpack.c.l.b16 %v2456
  %v2474 = vpack.c.b16 %v2471, %v2470
  %v2475 = vpack.c.b16 %v2473, %v2472
  %v2479 = vsel %vm328, %v2465, 0
  %2481 = vmatprep.subr.bf16.mxu0 0
  %2482 = vmatpush1.bf16.msra.mxu0 0
  %2483 = vmatprep.subr.bf16.mxu0 0
  %2484 = vmatpush1.bf16.msra.mxu0 0
  %2485 = vmatprep.subr.bf16.mxu0 0
  %2486 = vmatpush1.bf16.msra.mxu0 0
  %2487 = vmatprep.subr.bf16.mxu0 0
  %2488 = vmatpush1.bf16.msra.mxu0 0
  %2489 = vmatprep.subr.bf16.mxu0 0
  %2490 = vmatpush1.bf16.msra.mxu0 0
  %2491 = vmatprep.subr.bf16.mxu0 0
  %2492 = vmatpush1.bf16.msra.mxu0 0
  %2493 = vmatprep.subr.bf16.mxu0 0
  %2494 = vmatpush1.bf16.msra.mxu0 %v2475
  %2495 = vmatprep.subr.bf16.mxu0 0
  %2496 = vmatpush1.bf16.msra.mxu0 %v2474
  %2497 = vmatprep.subr.bf16.mxu0 0
  %2498 = vmatpush2.bf16.msra.mxu0 0
  %2499 = vmatprep.subr.bf16.mxu0 0
  %2500 = vmatpush2.bf16.msra.mxu0 0
  %2501 = vmatprep.subr.bf16.mxu0 0
  %2502 = vmatpush2.bf16.msra.mxu0 0
  %2503 = vmatprep.subr.bf16.mxu0 0
  %2504 = vmatpush2.bf16.msra.mxu0 0
  %2505 = vmatprep.subr.bf16.mxu0 0
  %2506 = vmatpush2.bf16.msra.mxu0 0
  %2507 = vmatprep.subr.bf16.mxu0 0
  %2508 = vmatpush2.bf16.msra.mxu0 0
  %2509 = vmatprep.subr.bf16.mxu0 0
  %2510 = vmatpush2.bf16.msra.mxu0 0
  %2511 = vmatprep.subr.bf16.mxu0 0
  %2512 = vmatpush2.bf16.msra.mxu0 0
  %2513 = vmatprep.mubr.bf16.mxu0 0
  %2514 = vmatmul.mubr.bf16.gmra.mxu0 %v2479
  %v2515 = vpop.f32.mrf.mxu0
  %v2516 = vadd.f32 %v2462, %v2515
  %v2517 = vpop.f32.mrf.mxu0
  %v2518 = vpop.f32.mrf.mxu0
  %v2519 = vadd.f32 %v2462, %v2518
  %v2520 = vpop.f32.mrf.mxu0
  %2521 = vdwg.mxu0
  %vm2522 = vcmask 7168
  %2523 = vst.msk [vmem:[%s9] sm:$0xff] %vm2522, %v2516
  %2524 = vst.msk [vmem:[%s9 + $0x8] sm:$0xff] %vm2522, %v2519
  // Predicated region
  $region38: #{lstm_model_forward.1} parent=0 // pred_check
    _
  $region39: #{lstm_model_forward.1} parent=0 // pred_check_branch
    %2526 = sbr.rel (0) target = $region41
  $region40: #{lstm_model_forward.1} parent=0 // pred_region
    _
  $region41: #{lstm_model_forward.1} parent=0 // pred_fallthru
    _
  // Predicated region
  $region42: #{lstm_model_forward.1} parent=0 // pred_check
    _
  $region43: #{lstm_model_forward.1} parent=0 // pred_check_branch
    %2528 = sbr.rel (0) target = $region45
  $region44: #{lstm_model_forward.1} parent=0 // pred_region
    _
  $region45: #{lstm_model_forward.1} parent=0 // pred_fallthru
    _

</llo_original>
